<compile_context>
chip_gen: v7x
topology: tpu7x:2x2x1
jax: 0.10.0
libtpu: 0.0.40
codegen_flags: <defaults>
</compile_context>

<pallas_src>
import functools
import math

import jax
import jax.numpy as jnp
from jax.experimental import pallas as pl
from jax.experimental.pallas import tpu as pltpu


def _window_attn_kernel(x_ref, wqkv_ref, bqkv_ref, wo_ref, bo_ref, ent_ref,
                        o_ref, *, num_heads, head_dim, beta, use_entropy,
                        fast_math):
    bt, n, c = x_ref.shape
    hd = head_dim
    cdt = jnp.bfloat16 if fast_math else jnp.float32

    # ---- fused Q/K/V projection: one (Bt*N, C) x (C, 3C) MXU matmul ---------
    x2 = x_ref[...].reshape(bt * n, c).astype(cdt)
    qkv = jnp.dot(x2, wqkv_ref[...],
                  preferred_element_type=jnp.float32) + bqkv_ref[...]  # (Bt*N, 3C) f32

    if use_entropy:
        # (Bt, 1, N): broadcasts over heads and query rows, gates the key axis.
        gating = jnp.exp(-beta * ent_ref[...].astype(jnp.float32))

    acc = jnp.zeros((bt * n, c), jnp.float32)

    # ---- per-head attention, batched over the Bt windows --------------------
    for h in range(num_heads):  # small static head count -> unrolled
        qh = qkv[:, h * hd:(h + 1) * hd].reshape(bt, n, hd).astype(cdt)
        kh = qkv[:, c + h * hd:c + (h + 1) * hd].reshape(bt, n, hd).astype(cdt)
        vh = qkv[:, 2 * c + h * hd:2 * c + (h + 1) * hd].reshape(bt, n, hd).astype(cdt)

        # scale was folded into the Q weight/bias in the wrapper.
        scores = jnp.einsum('bqd,bkd->bqk', qh, kh,
                            preferred_element_type=jnp.float32)       # (Bt, N, N)
        scores = scores - jnp.max(scores, axis=-1, keepdims=True)
        e = jnp.exp(scores)
        denom = jnp.sum(e, axis=-1, keepdims=True)
        if fast_math:
            attn = e * pl.reciprocal(denom, approx=True)
        else:
            attn = e / denom

        if use_entropy:
            attn = attn * gating
            denom2 = jnp.sum(attn, axis=-1, keepdims=True) + 1e-9
            if fast_math:
                attn = attn * pl.reciprocal(denom2, approx=True)
            else:
                attn = attn / denom2

        pv = jnp.einsum('bqk,bkd->bqd', attn.astype(cdt), vh,
                        preferred_element_type=jnp.float32)           # (Bt, N, hd)

        # head h's row-block of the output projection; summing replaces the
        # lane-wise concatenate of head outputs (mathematically identical).
        acc = acc + jnp.dot(pv.reshape(bt * n, hd).astype(cdt), wo_ref[h],
                            preferred_element_type=jnp.float32)

    y = acc + bo_ref[...]
    o_ref[...] = y.reshape(bt, n, c).astype(o_ref.dtype)


def window_attention(x, params, entropy_map=None, beta=1.0, num_heads=4,
                     block_windows=8, fast_math=True,
                     single_buffer_weights=False, vmem_limit_bytes=None):
    B, N, C = x.shape
    hd = C // num_heads
    use_entropy = entropy_map is not None
    compute_dtype = jnp.bfloat16 if fast_math else jnp.float32

    # Fuse Q/K/V weights -> (C, 3C); fold the 1/sqrt(hd) scale into Q.
    scale = 1.0 / math.sqrt(hd)
    wqkv = jnp.concatenate(
        [params["wq"] * scale, params["wk"], params["wv"]], axis=1)
    bqkv = jnp.concatenate(
        [params["bq"] * scale, params["bk"], params["bv"]], axis=1)
    wo_h = params["wo"].reshape(num_heads, hd, C)   # per-head row blocks of Wo
    bo = params["bo"].astype(jnp.float32)
    wqkv = wqkv.astype(compute_dtype)               # halves weight VMEM in bf16
    wo_h = wo_h.astype(compute_dtype)
    bqkv = bqkv.astype(jnp.float32)                 # biases stay f32

    if entropy_map is None:
        entropy_map = jnp.zeros((B, 1, N), dtype=jnp.float32)

    # Window batching: Bt windows per grid step (pad B, slice result).
    bt = max(1, min(block_windows, B))
    n_blocks = (B + bt - 1) // bt
    B_pad = n_blocks * bt
    if B_pad != B:
        x = jnp.pad(x, ((0, B_pad - B), (0, 0), (0, 0)))
        entropy_map = jnp.pad(entropy_map, ((0, B_pad - B), (0, 0), (0, 0)))

    kernel = functools.partial(
        _window_attn_kernel,
        num_heads=num_heads, head_dim=hd, beta=float(beta),
        use_entropy=use_entropy, fast_math=fast_math)

    # Grid-invariant weights/biases: optionally single-buffer them (v7x,
    # 64 MiB VMEM). Off by default; double-buffering a constant block only
    # costs VMEM, never correctness.
    wkw = dict(pipeline_mode=pl.Buffered(buffer_count=1)) if single_buffer_weights else {}

    out = pl.pallas_call(
        kernel,
        out_shape=jax.ShapeDtypeStruct((B_pad, N, C), x.dtype),
        grid=(n_blocks,),
        in_specs=[
            pl.BlockSpec((bt, N, C), lambda b: (b, 0, 0)),             # x
            pl.BlockSpec((C, 3 * C), lambda b: (0, 0), **wkw),         # fused Wqkv
            pl.BlockSpec((1, 3 * C), lambda b: (0, 0), **wkw),         # fused bqkv
            pl.BlockSpec((num_heads, hd, C), lambda b: (0, 0, 0), **wkw),  # Wo (per head)
            pl.BlockSpec((1, C), lambda b: (0, 0), **wkw),             # bo
            pl.BlockSpec((bt, 1, N), lambda b: (b, 0, 0)),             # entropy_map
        ],
        out_specs=pl.BlockSpec((bt, N, C), lambda b: (b, 0, 0)),
        compiler_params=pltpu.CompilerParams(
            dimension_semantics=("parallel",),        # v7x: split windows across both TCs
            vmem_limit_bytes=vmem_limit_bytes),
    )(x, wqkv, bqkv, wo_h, bo, entropy_map)
    return out[:B]


def window_attention_ref(x, params, entropy_map=None, beta=1.0, num_heads=4):
    """Pure-JAX reference mirroring the PyTorch forward."""
    B, N, C = x.shape
    hd = C // num_heads
    q = (x @ params["wq"] + params["bq"]).reshape(B, N, num_heads, hd)
    k = (x @ params["wk"] + params["bk"]).reshape(B, N, num_heads, hd)
    v = (x @ params["wv"] + params["bv"]).reshape(B, N, num_heads, hd)
    q = q.transpose(0, 2, 1, 3)
    k = k.transpose(0, 2, 1, 3)
    v = v.transpose(0, 2, 1, 3)
    scores = (q @ k.transpose(0, 1, 3, 2)) / math.sqrt(hd)
    attn = jax.nn.softmax(scores, axis=-1)
    if entropy_map is not None:
        gating = jnp.exp(-beta * entropy_map)[:, None]  # (B,1,1,N)
        attn = attn * gating
        attn = attn / (attn.sum(axis=-1, keepdims=True) + 1e-9)
    out = (attn @ v).transpose(0, 2, 1, 3).reshape(B, N, C)
    return out @ params["wo"] + params["bo"]


def make_params(key, dim):
    ks = jax.random.split(key, 8)
    s = 1.0 / math.sqrt(dim)

    def w(k):
        return jax.random.uniform(k, (dim, dim), jnp.float32, -s, s)

    def b(k):
        return jax.random.uniform(k, (1, dim), jnp.float32, -s, s)

    return {
        "wq": w(ks[0]), "bq": b(ks[1]),
        "wk": w(ks[2]), "bk": b(ks[3]),
        "wv": w(ks[4]), "bv": b(ks[5]),
        "wo": w(ks[6]), "bo": b(ks[7]),
    }


if __name__ == "__main__":
    B, N, C = 6, 8, 32      # B chosen non-multiple of block_windows to exercise padding
    num_heads = 4
    beta = 1.0

    key = jax.random.PRNGKey(0)
    kx, kent, kp = jax.random.split(key, 3)
    x = jax.random.normal(kx, (B, N, C), jnp.float32)
    entropy_map = jnp.abs(jax.random.normal(kent, (B, 1, N), jnp.float32))
    params = make_params(kp, C)

    ref_gated = window_attention_ref(x, params, entropy_map, beta, num_heads)
    ref_plain = window_attention_ref(x, params, None, beta, num_heads)

    # precise path (f32 MXU inputs, exact divides) -> tight tolerance
    out_gated = window_attention(x, params, entropy_map, beta, num_heads,
                                 block_windows=4, fast_math=False)
    out_gated = jax.block_until_ready(out_gated)
    assert out_gated.shape == (B, N, C)
    assert jnp.allclose(out_gated, ref_gated, atol=1e-4, rtol=1e-4)

    out_plain = window_attention(x, params, None, beta, num_heads,
                                 block_windows=4, fast_math=False)
    out_plain = jax.block_until_ready(out_plain)
    assert jnp.allclose(out_plain, ref_plain, atol=1e-4, rtol=1e-4)

    # fast path (bf16 MXU inputs + approx reciprocal) -> relaxed tolerance
    out_fast = window_attention(x, params, entropy_map, beta, num_heads,
                                block_windows=4, fast_math=True)
    out_fast = jax.block_until_ready(out_fast)
    assert jnp.allclose(out_fast, ref_gated, atol=5e-2, rtol=5e-2)

    print("KERNEL_OK")
</pallas_src>

<mosaic_0001>
module attributes {stable_mosaic.version = 11 : i64} {
  func.func @_window_attn_kernel(%arg0: i32, %arg1: memref<4x8x32xf32, #tpu.memory_space<vmem>>, %arg2: memref<32x96xf32, #tpu.memory_space<vmem>>, %arg3: memref<1x96xf32, #tpu.memory_space<vmem>>, %arg4: memref<4x8x32xf32, #tpu.memory_space<vmem>>, %arg5: memref<1x32xf32, #tpu.memory_space<vmem>>, %arg6: memref<4x1x8xf32, #tpu.memory_space<vmem>>, %arg7: memref<4x8x32xf32, #tpu.memory_space<vmem>>) attributes {dimension_semantics = [#tpu.dimension_semantics<parallel>], iteration_bounds = array<i64: 2>, scalar_prefetch = 0 : i64, scratch_operands = 0 : i64, tpu.core_type = #tpu.core_type<tc>, window_params = [{transform_indices = @transform_0, window_bounds = array<i64: 4, 8, 32>}, {pipeline_mode = #tpu.pipeline_mode<synchronous>, transform_indices = @transform_1, window_bounds = array<i64: 32, 96>}, {pipeline_mode = #tpu.pipeline_mode<synchronous>, transform_indices = @transform_2, window_bounds = array<i64: 1, 96>}, {pipeline_mode = #tpu.pipeline_mode<synchronous>, transform_indices = @transform_3, window_bounds = array<i64: 4, 8, 32>}, {pipeline_mode = #tpu.pipeline_mode<synchronous>, transform_indices = @transform_4, window_bounds = array<i64: 1, 32>}, {transform_indices = @transform_5, window_bounds = array<i64: 4, 1, 8>}, {transform_indices = @transform_6, window_bounds = array<i64: 4, 8, 32>}]} {
    %c0 = arith.constant 0 : index
    %c0_0 = arith.constant 0 : index
    %c0_1 = arith.constant 0 : index
    %0 = vector.load %arg1[%c0, %c0_0, %c0_1] : memref<4x8x32xf32, #tpu.memory_space<vmem>>, vector<4x8x32xf32>
    %1 = vector.shape_cast %0 : vector<4x8x32xf32> to vector<32x32xf32>
    %c0_2 = arith.constant 0 : index
    %c0_3 = arith.constant 0 : index
    %2 = vector.load %arg2[%c0_2, %c0_3] : memref<32x96xf32, #tpu.memory_space<vmem>>, vector<32x96xf32>
    %cst = arith.constant dense<0.000000e+00> : vector<32x96xf32>
    %3 = tpu.matmul %1, %2, %cst {dimension_numbers = #tpu.dot_dimension_numbers<[1], [0], [0], [1], [0, 0, 1, 1], [], []>} : vector<32x32xf32>, vector<32x96xf32>, vector<32x96xf32> -> vector<32x96xf32>
    %c0_4 = arith.constant 0 : index
    %c0_5 = arith.constant 0 : index
    %4 = vector.load %arg3[%c0_4, %c0_5] : memref<1x96xf32, #tpu.memory_space<vmem>>, vector<1x96xf32>
    %5 = vector.broadcast %4 : vector<1x96xf32> to vector<32x96xf32>
    %6 = arith.addf %3, %5 : vector<32x96xf32>
    %c0_6 = arith.constant 0 : index
    %c0_7 = arith.constant 0 : index
    %c0_8 = arith.constant 0 : index
    %7 = vector.load %arg6[%c0_6, %c0_7, %c0_8] : memref<4x1x8xf32, #tpu.memory_space<vmem>>, vector<4x1x8xf32>
    %cst_9 = arith.constant -1.000000e+00 : f32
    %8 = vector.broadcast %cst_9 : f32 to vector<4x1x8xf32>
    %9 = arith.mulf %8, %7 : vector<4x1x8xf32>
    %10 = math.exp %9 : vector<4x1x8xf32>
    %cst_10 = arith.constant 0.000000e+00 : f32
    %11 = vector.broadcast %cst_10 : f32 to vector<32x32xf32>
    %12 = vector.extract_strided_slice %6 {offsets = [0, 0], sizes = [32, 8], strides = [1, 1]} : vector<32x96xf32> to vector<32x8xf32>
    %13 = vector.shape_cast %12 : vector<32x8xf32> to vector<4x8x8xf32>
    %14 = vector.extract_strided_slice %6 {offsets = [0, 32], sizes = [32, 8], strides = [1, 1]} : vector<32x96xf32> to vector<32x8xf32>
    %15 = vector.shape_cast %14 : vector<32x8xf32> to vector<4x8x8xf32>
    %16 = vector.extract_strided_slice %6 {offsets = [0, 64], sizes = [32, 8], strides = [1, 1]} : vector<32x96xf32> to vector<32x8xf32>
    %17 = vector.shape_cast %16 : vector<32x8xf32> to vector<4x8x8xf32>
    "tpu.trace_start"() <{level = 10 : i32, message = "bqd,bkd->bqk"}> : () -> ()
    %cst_11 = arith.constant dense<0.000000e+00> : vector<4x8x8xf32>
    %18 = tpu.matmul %13, %15, %cst_11 {dimension_numbers = #tpu.dot_dimension_numbers<[2], [2], [1], [1], [0, 0, 0, 1, 1, 1], [0], [0]>} : vector<4x8x8xf32>, vector<4x8x8xf32>, vector<4x8x8xf32> -> vector<4x8x8xf32>
    "tpu.trace_stop"() : () -> ()
    %cst_12 = arith.constant dense<0xFF800000> : vector<4x8xf32>
    %19 = vector.multi_reduction <maximumf>, %18, %cst_12 [2] : vector<4x8x8xf32> to vector<4x8xf32>
    %20 = vector.shape_cast %19 : vector<4x8xf32> to vector<4x8x1xf32>
    %21 = vector.broadcast %20 : vector<4x8x1xf32> to vector<4x8x8xf32>
    %22 = arith.subf %18, %21 : vector<4x8x8xf32>
    %23 = math.exp %22 : vector<4x8x8xf32>
    %cst_13 = arith.constant dense<0.000000e+00> : vector<4x8xf32>
    %24 = vector.multi_reduction <add>, %23, %cst_13 [2] : vector<4x8x8xf32> to vector<4x8xf32>
    %25 = vector.shape_cast %24 : vector<4x8xf32> to vector<4x8x1xf32>
    %26 = vector.broadcast %25 : vector<4x8x1xf32> to vector<4x8x8xf32>
    %27 = arith.divf %23, %26 : vector<4x8x8xf32>
    %28 = vector.broadcast %10 : vector<4x1x8xf32> to vector<4x8x8xf32>
    %29 = arith.mulf %27, %28 : vector<4x8x8xf32>
    %cst_14 = arith.constant dense<0.000000e+00> : vector<4x8xf32>
    %30 = vector.multi_reduction <add>, %29, %cst_14 [2] : vector<4x8x8xf32> to vector<4x8xf32>
    %31 = vector.shape_cast %30 : vector<4x8xf32> to vector<4x8x1xf32>
    %cst_15 = arith.constant 9.99999971E-10 : f32
    %32 = vector.broadcast %cst_15 : f32 to vector<4x8x1xf32>
    %33 = arith.addf %31, %32 : vector<4x8x1xf32>
    %34 = vector.broadcast %33 : vector<4x8x1xf32> to vector<4x8x8xf32>
    %35 = arith.divf %29, %34 : vector<4x8x8xf32>
    "tpu.trace_start"() <{level = 10 : i32, message = "bqk,bkd->bqd"}> : () -> ()
    %cst_16 = arith.constant dense<0.000000e+00> : vector<4x8x8xf32>
    %36 = tpu.matmul %35, %17, %cst_16 {dimension_numbers = #tpu.dot_dimension_numbers<[2], [1], [1], [2], [0, 0, 0, 1, 1, 2], [0], [0]>} : vector<4x8x8xf32>, vector<4x8x8xf32>, vector<4x8x8xf32> -> vector<4x8x8xf32>
    "tpu.trace_stop"() : () -> ()
    %37 = vector.shape_cast %36 : vector<4x8x8xf32> to vector<32x8xf32>
    %c0_17 = arith.constant 0 : index
    %c0_18 = arith.constant 0 : index
    %c0_19 = arith.constant 0 : index
    %38 = vector.load %arg4[%c0_17, %c0_18, %c0_19] : memref<4x8x32xf32, #tpu.memory_space<vmem>>, vector<1x8x32xf32>
    %39 = vector.shape_cast %38 : vector<1x8x32xf32> to vector<8x32xf32>
    %cst_20 = arith.constant dense<0.000000e+00> : vector<32x32xf32>
    %40 = tpu.matmul %37, %39, %cst_20 {dimension_numbers = #tpu.dot_dimension_numbers<[1], [0], [0], [1], [0, 0, 1, 1], [], []>} : vector<32x8xf32>, vector<8x32xf32>, vector<32x32xf32> -> vector<32x32xf32>
    %41 = arith.addf %11, %40 : vector<32x32xf32>
    %42 = vector.extract_strided_slice %6 {offsets = [0, 8], sizes = [32, 8], strides = [1, 1]} : vector<32x96xf32> to vector<32x8xf32>
    %43 = vector.shape_cast %42 : vector<32x8xf32> to vector<4x8x8xf32>
    %44 = vector.extract_strided_slice %6 {offsets = [0, 40], sizes = [32, 8], strides = [1, 1]} : vector<32x96xf32> to vector<32x8xf32>
    %45 = vector.shape_cast %44 : vector<32x8xf32> to vector<4x8x8xf32>
    %46 = vector.extract_strided_slice %6 {offsets = [0, 72], sizes = [32, 8], strides = [1, 1]} : vector<32x96xf32> to vector<32x8xf32>
    %47 = vector.shape_cast %46 : vector<32x8xf32> to vector<4x8x8xf32>
    "tpu.trace_start"() <{level = 10 : i32, message = "bqd,bkd->bqk"}> : () -> ()
    %cst_21 = arith.constant dense<0.000000e+00> : vector<4x8x8xf32>
    %48 = tpu.matmul %43, %45, %cst_21 {dimension_numbers = #tpu.dot_dimension_numbers<[2], [2], [1], [1], [0, 0, 0, 1, 1, 1], [0], [0]>} : vector<4x8x8xf32>, vector<4x8x8xf32>, vector<4x8x8xf32> -> vector<4x8x8xf32>
    "tpu.trace_stop"() : () -> ()
    %cst_22 = arith.constant dense<0xFF800000> : vector<4x8xf32>
    %49 = vector.multi_reduction <maximumf>, %48, %cst_22 [2] : vector<4x8x8xf32> to vector<4x8xf32>
    %50 = vector.shape_cast %49 : vector<4x8xf32> to vector<4x8x1xf32>
    %51 = vector.broadcast %50 : vector<4x8x1xf32> to vector<4x8x8xf32>
    %52 = arith.subf %48, %51 : vector<4x8x8xf32>
    %53 = math.exp %52 : vector<4x8x8xf32>
    %cst_23 = arith.constant dense<0.000000e+00> : vector<4x8xf32>
    %54 = vector.multi_reduction <add>, %53, %cst_23 [2] : vector<4x8x8xf32> to vector<4x8xf32>
    %55 = vector.shape_cast %54 : vector<4x8xf32> to vector<4x8x1xf32>
    %56 = vector.broadcast %55 : vector<4x8x1xf32> to vector<4x8x8xf32>
    %57 = arith.divf %53, %56 : vector<4x8x8xf32>
    %58 = vector.broadcast %10 : vector<4x1x8xf32> to vector<4x8x8xf32>
    %59 = arith.mulf %57, %58 : vector<4x8x8xf32>
    %cst_24 = arith.constant dense<0.000000e+00> : vector<4x8xf32>
    %60 = vector.multi_reduction <add>, %59, %cst_24 [2] : vector<4x8x8xf32> to vector<4x8xf32>
    %61 = vector.shape_cast %60 : vector<4x8xf32> to vector<4x8x1xf32>
    %cst_25 = arith.constant 9.99999971E-10 : f32
    %62 = vector.broadcast %cst_25 : f32 to vector<4x8x1xf32>
    %63 = arith.addf %61, %62 : vector<4x8x1xf32>
    %64 = vector.broadcast %63 : vector<4x8x1xf32> to vector<4x8x8xf32>
    %65 = arith.divf %59, %64 : vector<4x8x8xf32>
    "tpu.trace_start"() <{level = 10 : i32, message = "bqk,bkd->bqd"}> : () -> ()
    %cst_26 = arith.constant dense<0.000000e+00> : vector<4x8x8xf32>
    %66 = tpu.matmul %65, %47, %cst_26 {dimension_numbers = #tpu.dot_dimension_numbers<[2], [1], [1], [2], [0, 0, 0, 1, 1, 2], [0], [0]>} : vector<4x8x8xf32>, vector<4x8x8xf32>, vector<4x8x8xf32> -> vector<4x8x8xf32>
    "tpu.trace_stop"() : () -> ()
    %67 = vector.shape_cast %66 : vector<4x8x8xf32> to vector<32x8xf32>
    %c1 = arith.constant 1 : index
    %c0_27 = arith.constant 0 : index
    %c0_28 = arith.constant 0 : index
    %68 = vector.load %arg4[%c1, %c0_27, %c0_28] : memref<4x8x32xf32, #tpu.memory_space<vmem>>, vector<1x8x32xf32>
    %69 = vector.shape_cast %68 : vector<1x8x32xf32> to vector<8x32xf32>
    %cst_29 = arith.constant dense<0.000000e+00> : vector<32x32xf32>
    %70 = tpu.matmul %67, %69, %cst_29 {dimension_numbers = #tpu.dot_dimension_numbers<[1], [0], [0], [1], [0, 0, 1, 1], [], []>} : vector<32x8xf32>, vector<8x32xf32>, vector<32x32xf32> -> vector<32x32xf32>
    %71 = arith.addf %41, %70 : vector<32x32xf32>
    %72 = vector.extract_strided_slice %6 {offsets = [0, 16], sizes = [32, 8], strides = [1, 1]} : vector<32x96xf32> to vector<32x8xf32>
    %73 = vector.shape_cast %72 : vector<32x8xf32> to vector<4x8x8xf32>
    %74 = vector.extract_strided_slice %6 {offsets = [0, 48], sizes = [32, 8], strides = [1, 1]} : vector<32x96xf32> to vector<32x8xf32>
    %75 = vector.shape_cast %74 : vector<32x8xf32> to vector<4x8x8xf32>
    %76 = vector.extract_strided_slice %6 {offsets = [0, 80], sizes = [32, 8], strides = [1, 1]} : vector<32x96xf32> to vector<32x8xf32>
    %77 = vector.shape_cast %76 : vector<32x8xf32> to vector<4x8x8xf32>
    "tpu.trace_start"() <{level = 10 : i32, message = "bqd,bkd->bqk"}> : () -> ()
    %cst_30 = arith.constant dense<0.000000e+00> : vector<4x8x8xf32>
    %78 = tpu.matmul %73, %75, %cst_30 {dimension_numbers = #tpu.dot_dimension_numbers<[2], [2], [1], [1], [0, 0, 0, 1, 1, 1], [0], [0]>} : vector<4x8x8xf32>, vector<4x8x8xf32>, vector<4x8x8xf32> -> vector<4x8x8xf32>
    "tpu.trace_stop"() : () -> ()
    %cst_31 = arith.constant dense<0xFF800000> : vector<4x8xf32>
    %79 = vector.multi_reduction <maximumf>, %78, %cst_31 [2] : vector<4x8x8xf32> to vector<4x8xf32>
    %80 = vector.shape_cast %79 : vector<4x8xf32> to vector<4x8x1xf32>
    %81 = vector.broadcast %80 : vector<4x8x1xf32> to vector<4x8x8xf32>
    %82 = arith.subf %78, %81 : vector<4x8x8xf32>
    %83 = math.exp %82 : vector<4x8x8xf32>
    %cst_32 = arith.constant dense<0.000000e+00> : vector<4x8xf32>
    %84 = vector.multi_reduction <add>, %83, %cst_32 [2] : vector<4x8x8xf32> to vector<4x8xf32>
    %85 = vector.shape_cast %84 : vector<4x8xf32> to vector<4x8x1xf32>
    %86 = vector.broadcast %85 : vector<4x8x1xf32> to vector<4x8x8xf32>
    %87 = arith.divf %83, %86 : vector<4x8x8xf32>
    %88 = vector.broadcast %10 : vector<4x1x8xf32> to vector<4x8x8xf32>
    %89 = arith.mulf %87, %88 : vector<4x8x8xf32>
    %cst_33 = arith.constant dense<0.000000e+00> : vector<4x8xf32>
    %90 = vector.multi_reduction <add>, %89, %cst_33 [2] : vector<4x8x8xf32> to vector<4x8xf32>
    %91 = vector.shape_cast %90 : vector<4x8xf32> to vector<4x8x1xf32>
    %cst_34 = arith.constant 9.99999971E-10 : f32
    %92 = vector.broadcast %cst_34 : f32 to vector<4x8x1xf32>
    %93 = arith.addf %91, %92 : vector<4x8x1xf32>
    %94 = vector.broadcast %93 : vector<4x8x1xf32> to vector<4x8x8xf32>
    %95 = arith.divf %89, %94 : vector<4x8x8xf32>
    "tpu.trace_start"() <{level = 10 : i32, message = "bqk,bkd->bqd"}> : () -> ()
    %cst_35 = arith.constant dense<0.000000e+00> : vector<4x8x8xf32>
    %96 = tpu.matmul %95, %77, %cst_35 {dimension_numbers = #tpu.dot_dimension_numbers<[2], [1], [1], [2], [0, 0, 0, 1, 1, 2], [0], [0]>} : vector<4x8x8xf32>, vector<4x8x8xf32>, vector<4x8x8xf32> -> vector<4x8x8xf32>
    "tpu.trace_stop"() : () -> ()
    %97 = vector.shape_cast %96 : vector<4x8x8xf32> to vector<32x8xf32>
    %c2 = arith.constant 2 : index
    %c0_36 = arith.constant 0 : index
    %c0_37 = arith.constant 0 : index
    %98 = vector.load %arg4[%c2, %c0_36, %c0_37] : memref<4x8x32xf32, #tpu.memory_space<vmem>>, vector<1x8x32xf32>
    %99 = vector.shape_cast %98 : vector<1x8x32xf32> to vector<8x32xf32>
    %cst_38 = arith.constant dense<0.000000e+00> : vector<32x32xf32>
    %100 = tpu.matmul %97, %99, %cst_38 {dimension_numbers = #tpu.dot_dimension_numbers<[1], [0], [0], [1], [0, 0, 1, 1], [], []>} : vector<32x8xf32>, vector<8x32xf32>, vector<32x32xf32> -> vector<32x32xf32>
    %101 = arith.addf %71, %100 : vector<32x32xf32>
    %102 = vector.extract_strided_slice %6 {offsets = [0, 24], sizes = [32, 8], strides = [1, 1]} : vector<32x96xf32> to vector<32x8xf32>
    %103 = vector.shape_cast %102 : vector<32x8xf32> to vector<4x8x8xf32>
    %104 = vector.extract_strided_slice %6 {offsets = [0, 56], sizes = [32, 8], strides = [1, 1]} : vector<32x96xf32> to vector<32x8xf32>
    %105 = vector.shape_cast %104 : vector<32x8xf32> to vector<4x8x8xf32>
    %106 = vector.extract_strided_slice %6 {offsets = [0, 88], sizes = [32, 8], strides = [1, 1]} : vector<32x96xf32> to vector<32x8xf32>
    %107 = vector.shape_cast %106 : vector<32x8xf32> to vector<4x8x8xf32>
    "tpu.trace_start"() <{level = 10 : i32, message = "bqd,bkd->bqk"}> : () -> ()
    %cst_39 = arith.constant dense<0.000000e+00> : vector<4x8x8xf32>
    %108 = tpu.matmul %103, %105, %cst_39 {dimension_numbers = #tpu.dot_dimension_numbers<[2], [2], [1], [1], [0, 0, 0, 1, 1, 1], [0], [0]>} : vector<4x8x8xf32>, vector<4x8x8xf32>, vector<4x8x8xf32> -> vector<4x8x8xf32>
    "tpu.trace_stop"() : () -> ()
    %cst_40 = arith.constant dense<0xFF800000> : vector<4x8xf32>
    %109 = vector.multi_reduction <maximumf>, %108, %cst_40 [2] : vector<4x8x8xf32> to vector<4x8xf32>
    %110 = vector.shape_cast %109 : vector<4x8xf32> to vector<4x8x1xf32>
    %111 = vector.broadcast %110 : vector<4x8x1xf32> to vector<4x8x8xf32>
    %112 = arith.subf %108, %111 : vector<4x8x8xf32>
    %113 = math.exp %112 : vector<4x8x8xf32>
    %cst_41 = arith.constant dense<0.000000e+00> : vector<4x8xf32>
    %114 = vector.multi_reduction <add>, %113, %cst_41 [2] : vector<4x8x8xf32> to vector<4x8xf32>
    %115 = vector.shape_cast %114 : vector<4x8xf32> to vector<4x8x1xf32>
    %116 = vector.broadcast %115 : vector<4x8x1xf32> to vector<4x8x8xf32>
    %117 = arith.divf %113, %116 : vector<4x8x8xf32>
    %118 = vector.broadcast %10 : vector<4x1x8xf32> to vector<4x8x8xf32>
    %119 = arith.mulf %117, %118 : vector<4x8x8xf32>
    %cst_42 = arith.constant dense<0.000000e+00> : vector<4x8xf32>
    %120 = vector.multi_reduction <add>, %119, %cst_42 [2] : vector<4x8x8xf32> to vector<4x8xf32>
    %121 = vector.shape_cast %120 : vector<4x8xf32> to vector<4x8x1xf32>
    %cst_43 = arith.constant 9.99999971E-10 : f32
    %122 = vector.broadcast %cst_43 : f32 to vector<4x8x1xf32>
    %123 = arith.addf %121, %122 : vector<4x8x1xf32>
    %124 = vector.broadcast %123 : vector<4x8x1xf32> to vector<4x8x8xf32>
    %125 = arith.divf %119, %124 : vector<4x8x8xf32>
    "tpu.trace_start"() <{level = 10 : i32, message = "bqk,bkd->bqd"}> : () -> ()
    %cst_44 = arith.constant dense<0.000000e+00> : vector<4x8x8xf32>
    %126 = tpu.matmul %125, %107, %cst_44 {dimension_numbers = #tpu.dot_dimension_numbers<[2], [1], [1], [2], [0, 0, 0, 1, 1, 2], [0], [0]>} : vector<4x8x8xf32>, vector<4x8x8xf32>, vector<4x8x8xf32> -> vector<4x8x8xf32>
    "tpu.trace_stop"() : () -> ()
    %127 = vector.shape_cast %126 : vector<4x8x8xf32> to vector<32x8xf32>
    %c3 = arith.constant 3 : index
    %c0_45 = arith.constant 0 : index
    %c0_46 = arith.constant 0 : index
    %128 = vector.load %arg4[%c3, %c0_45, %c0_46] : memref<4x8x32xf32, #tpu.memory_space<vmem>>, vector<1x8x32xf32>
    %129 = vector.shape_cast %128 : vector<1x8x32xf32> to vector<8x32xf32>
    %cst_47 = arith.constant dense<0.000000e+00> : vector<32x32xf32>
    %130 = tpu.matmul %127, %129, %cst_47 {dimension_numbers = #tpu.dot_dimension_numbers<[1], [0], [0], [1], [0, 0, 1, 1], [], []>} : vector<32x8xf32>, vector<8x32xf32>, vector<32x32xf32> -> vector<32x32xf32>
    %131 = arith.addf %101, %130 : vector<32x32xf32>
    %c0_48 = arith.constant 0 : index
    %c0_49 = arith.constant 0 : index
    %132 = vector.load %arg5[%c0_48, %c0_49] : memref<1x32xf32, #tpu.memory_space<vmem>>, vector<1x32xf32>
    %133 = vector.broadcast %132 : vector<1x32xf32> to vector<32x32xf32>
    %134 = arith.addf %131, %133 : vector<32x32xf32>
    %135 = vector.shape_cast %134 : vector<32x32xf32> to vector<4x8x32xf32>
    %c0_50 = arith.constant 0 : index
    %c0_51 = arith.constant 0 : index
    %c0_52 = arith.constant 0 : index
    %136 = vector.load %arg7[%c0_50, %c0_51, %c0_52] : memref<4x8x32xf32, #tpu.memory_space<vmem>>, vector<4x8x32xf32>
    tpu.vector_store %arg7[%c0_50, %c0_51, %c0_52], %135 {strides = array<i32>} : memref<4x8x32xf32, #tpu.memory_space<vmem>>, vector<4x8x32xf32>,
    return
  }
  func.func @transform_0(%arg0: i32) -> (i32, i32, i32) {
    %c0_i32 = arith.constant 0 : i32
    %c0_i32_0 = arith.constant 0 : i32
    %c0_i32_1 = arith.constant 0 : i32
    return %arg0, %c0_i32, %c0_i32_0 : i32, i32, i32
  }
  func.func @transform_1(%arg0: i32) -> (i32, i32) {
    %c0_i32 = arith.constant 0 : i32
    %c0_i32_0 = arith.constant 0 : i32
    %c0_i32_1 = arith.constant 0 : i32
    return %c0_i32, %c0_i32_0 : i32, i32
  }
  func.func @transform_2(%arg0: i32) -> (i32, i32) {
    %c0_i32 = arith.constant 0 : i32
    %c0_i32_0 = arith.constant 0 : i32
    %c0_i32_1 = arith.constant 0 : i32
    return %c0_i32, %c0_i32_0 : i32, i32
  }
  func.func @transform_3(%arg0: i32) -> (i32, i32, i32) {
    %c0_i32 = arith.constant 0 : i32
    %c0_i32_0 = arith.constant 0 : i32
    %c0_i32_1 = arith.constant 0 : i32
    %c0_i32_2 = arith.constant 0 : i32
    return %c0_i32, %c0_i32_0, %c0_i32_1 : i32, i32, i32
  }
  func.func @transform_4(%arg0: i32) -> (i32, i32) {
    %c0_i32 = arith.constant 0 : i32
    %c0_i32_0 = arith.constant 0 : i32
    %c0_i32_1 = arith.constant 0 : i32
    return %c0_i32, %c0_i32_0 : i32, i32
  }
  func.func @transform_5(%arg0: i32) -> (i32, i32, i32) {
    %c0_i32 = arith.constant 0 : i32
    %c0_i32_0 = arith.constant 0 : i32
    %c0_i32_1 = arith.constant 0 : i32
    return %arg0, %c0_i32, %c0_i32_0 : i32, i32, i32
  }
  func.func @transform_6(%arg0: i32) -> (i32, i32, i32) {
    %c0_i32 = arith.constant 0 : i32
    %c0_i32_0 = arith.constant 0 : i32
    %c0_i32_1 = arith.constant 0 : i32
    return %arg0, %c0_i32, %c0_i32_0 : i32, i32, i32
  }
}

</mosaic_0001>

<llo_original>
// kernel: tpu_custom_call.1
$region0: #{tpu_custom_call.1}
  #allocation0 [shape = 'u32[]', space=smem, size = 0x4, offset = 0x4, fixed_abs, tag = 'smem constant byte address 0x4 - core index']
  #allocation1 [shape = 'u32[144,128]{1,0:T(1,128)}', space=vmem, size = 0x12000, scoped, tag = 'internal scratch']
  %s0 = inlined_call_operand.hbm [shape: f32[8,8,32], index: 0, kind: input, shape index: {}]
  %s1 = inlined_call_operand.hbm [shape: f32[32,96], index: 1, kind: input, shape index: {}]
  %s2 = inlined_call_operand.vmem [shape: f32[1,96], index: 2, kind: input, shape index: {}]
  %s3 = inlined_call_operand.hbm [shape: f32[4,8,32], index: 3, kind: input, shape index: {}]
  %s4 = inlined_call_operand.vmem [shape: f32[1,32], index: 4, kind: input, shape index: {}]
  %s5 = inlined_call_operand.vmem [shape: f32[8,1,8], index: 5, kind: input, shape index: {}]
  %s6 = inlined_call_operand.hbm [shape: f32[8,8,32], index: 6, kind: output, shape index: {}]
  %s7 = sld [smem:[#allocation0]]
  $region69: #{tpu_custom_call.1} parent=0
    _
  %s9 = ssub.s32 1, %s7
  %s10 = scalar_select 0, %s9, %s7
  $region1: #{tpu_custom_call.1} parent=0
    #allocation2 [shape = 'u8[32768]{0}', space=vmem, size = 0x8000, scoped, tag = 'input window, operand 0']
    #allocation3 [shape = 's32[2]{0}', space=sflag, size = 0x8, scoped, tag = 'scoped memory for tpu_custom_call.1']
    #allocation4 [shape = 's32[2]{0}', space=sflag, size = 0x8, scoped, tag = 'scoped memory for tpu_custom_call.1']
    #allocation5 [shape = 'u8[16384]{0}', space=vmem, size = 0x4000, scoped, tag = 'input window, operand 1, single buffered']
    #allocation6 [shape = 's32[1]{0}', space=sflag, size = 0x4, scoped, tag = 'scoped memory for tpu_custom_call.1']
    #allocation7 [shape = 'u8[16384]{0}', space=vmem, size = 0x4000, scoped, tag = 'input window, operand 3, single buffered']
    #allocation8 [shape = 'u8[32768]{0}', space=vmem, size = 0x8000, scoped, tag = 'output window, operand 0']
    %11 = vsyncpa [#allocation3], 0
    %s12 = scalar_lea.sflag [#allocation3], 1
    %13 = vsyncpa %s12, 0
    %14 = vsyncpa [#allocation6], 0
    %15 = vsyncpa [#allocation4], 0
    %s16 = scalar_lea.sflag [#allocation4], 1
    %17 = vsyncpa %s16, 0
    loop: start=0, step=1, limit=4
    $region2: #{tpu_custom_call.1} parent=1 // loop_pre_header
      _
    $region3: #{tpu_custom_call.1} parent=1 // loop_header
      %s19 = sphi 0, %s23
      %p20 = scmp.ge.s32.totalorder %s19, 4
      %s29 = sphi 0, %s31
      %s32 = sphi 0, %s29
      %s33 = sphi 0, %s32
      %s49 = sphi 0, %s33
      %s53 = sphi 0, %s53
      %s55 = sphi 0, %s53
      %s56 = sphi 0, %s55
      %s70 = sphi 0, %s56
      %s74 = sphi 0, %s74
      %s76 = sphi 0, %s74
      %s77 = sphi 0, %s76
      %s91 = sphi 0, %s77
      %s95 = sphi 0, %s95
      %s97 = sphi 0, %s95
      %s98 = sphi 0, %s97
      %s112 = sphi 0, %s98
      %s116 = sphi 0, %s116
      %s118 = sphi 0, %s116
      %s119 = sphi 0, %s118
      %s133 = sphi 0, %s119
      %s139 = sphi 0, %s141
      %s142 = sphi 0, %s139
      %s143 = sphi 0, %s142
      %s159 = sphi 0, %s143
      %s165 = sphi 0, %s167
      %s168 = sphi 0, %s165
      %s169 = sphi 0, %s168
      %s185 = sphi 0, %s169
    $region4: #{tpu_custom_call.1} parent=1 // loop_header_branch
      %22 = sbr.rel (%p20) target = $region8
    $region5: #{tpu_custom_call.1} parent=1 // loop_body
      %s24 = ssub.s32 %s19, 1
      %s25 = ssub.s32 %s19, 2
      %s26 = sadd.s32 %s19, 1
      %s27 = ssub.s32 %s19, %s26
      %p28 = scmp.eq.s32.totalorder %s27, 0
      %s30 = sadd.s32 %s29, 1
      %s31 = scalar_select %p28, %s29, %s30
      %p34 = pneg %p28
      %p35 = scmp.eq.s32.totalorder %s19, 1
      %p36 = por %p34, %p35
      %p37 = scmp.ne.s32.totalorder %s29, %s32
      %p38 = scmp.eq.s32.totalorder %s19, 0
      %p39 = por %p37, %p38
      %p40 = scmp.ne.s32.totalorder %s29, %s32
      %p41 = scmp.eq.s32.totalorder %s24, 1
      %p42 = por %p40, %p41
      %p43 = scmp.ne.s32.totalorder %s32, %s33
      %p44 = scmp.eq.s32.totalorder %s24, 0
      %p45 = por %p43, %p44
      %p46 = scmp.ne.s32.totalorder %s32, %s33
      %p47 = scmp.eq.s32.totalorder %s25, 1
      %p48 = por %p46, %p47
      %p50 = scmp.ne.s32.totalorder %s33, %s49
      %p51 = scmp.eq.s32.totalorder %s25, 0
      %p52 = por %p50, %p51
      %s54 = sadd.s32 %s53, 1
      %p57 = scmp.eq.s32.totalorder %s19, 1
      %p58 = scmp.ne.s32.totalorder %s53, %s55
      %p59 = scmp.eq.s32.totalorder %s19, 0
      %p60 = por %p58, %p59
      %p61 = scmp.ne.s32.totalorder %s53, %s55
      %p62 = scmp.eq.s32.totalorder %s24, 1
      %p63 = por %p61, %p62
      %p64 = scmp.ne.s32.totalorder %s55, %s56
      %p65 = scmp.eq.s32.totalorder %s24, 0
      %p66 = por %p64, %p65
      %p67 = scmp.ne.s32.totalorder %s55, %s56
      %p68 = scmp.eq.s32.totalorder %s25, 1
      %p69 = por %p67, %p68
      %p71 = scmp.ne.s32.totalorder %s56, %s70
      %p72 = scmp.eq.s32.totalorder %s25, 0
      %p73 = por %p71, %p72
      %s75 = sadd.s32 %s74, 1
      %p78 = scmp.eq.s32.totalorder %s19, 1
      %p79 = scmp.ne.s32.totalorder %s74, %s76
      %p80 = scmp.eq.s32.totalorder %s19, 0
      %p81 = por %p79, %p80
      %p82 = scmp.ne.s32.totalorder %s74, %s76
      %p83 = scmp.eq.s32.totalorder %s24, 1
      %p84 = por %p82, %p83
      %p85 = scmp.ne.s32.totalorder %s76, %s77
      %p86 = scmp.eq.s32.totalorder %s24, 0
      %p87 = por %p85, %p86
      %p88 = scmp.ne.s32.totalorder %s76, %s77
      %p89 = scmp.eq.s32.totalorder %s25, 1
      %p90 = por %p88, %p89
      %p92 = scmp.ne.s32.totalorder %s77, %s91
      %p93 = scmp.eq.s32.totalorder %s25, 0
      %p94 = por %p92, %p93
      %s96 = sadd.s32 %s95, 1
      %p99 = scmp.eq.s32.totalorder %s19, 1
      %p100 = scmp.ne.s32.totalorder %s95, %s97
      %p101 = scmp.eq.s32.totalorder %s19, 0
      %p102 = por %p100, %p101
      %p103 = scmp.ne.s32.totalorder %s95, %s97
      %p104 = scmp.eq.s32.totalorder %s24, 1
      %p105 = por %p103, %p104
      %p106 = scmp.ne.s32.totalorder %s97, %s98
      %p107 = scmp.eq.s32.totalorder %s24, 0
      %p108 = por %p106, %p107
      %p109 = scmp.ne.s32.totalorder %s97, %s98
      %p110 = scmp.eq.s32.totalorder %s25, 1
      %p111 = por %p109, %p110
      %p113 = scmp.ne.s32.totalorder %s98, %s112
      %p114 = scmp.eq.s32.totalorder %s25, 0
      %p115 = por %p113, %p114
      %s117 = sadd.s32 %s116, 1
      %p120 = scmp.eq.s32.totalorder %s19, 1
      %p121 = scmp.ne.s32.totalorder %s116, %s118
      %p122 = scmp.eq.s32.totalorder %s19, 0
      %p123 = por %p121, %p122
      %p124 = scmp.ne.s32.totalorder %s116, %s118
      %p125 = scmp.eq.s32.totalorder %s24, 1
      %p126 = por %p124, %p125
      %p127 = scmp.ne.s32.totalorder %s118, %s119
      %p128 = scmp.eq.s32.totalorder %s24, 0
      %p129 = por %p127, %p128
      %p130 = scmp.ne.s32.totalorder %s118, %s119
      %p131 = scmp.eq.s32.totalorder %s25, 1
      %p132 = por %p130, %p131
      %p134 = scmp.ne.s32.totalorder %s119, %s133
      %p135 = scmp.eq.s32.totalorder %s25, 0
      %p136 = por %p134, %p135
      %s137 = ssub.s32 %s19, %s26
      %p138 = scmp.eq.s32.totalorder %s137, 0
      %s140 = sadd.s32 %s139, 1
      %s141 = scalar_select %p138, %s139, %s140
      %p144 = pneg %p138
      %p145 = scmp.eq.s32.totalorder %s19, 1
      %p146 = por %p144, %p145
      %p147 = scmp.ne.s32.totalorder %s139, %s142
      %p148 = scmp.eq.s32.totalorder %s19, 0
      %p149 = por %p147, %p148
      %p150 = scmp.ne.s32.totalorder %s139, %s142
      %p151 = scmp.eq.s32.totalorder %s24, 1
      %p152 = por %p150, %p151
      %p153 = scmp.ne.s32.totalorder %s142, %s143
      %p154 = scmp.eq.s32.totalorder %s24, 0
      %p155 = por %p153, %p154
      %p156 = scmp.ne.s32.totalorder %s142, %s143
      %p157 = scmp.eq.s32.totalorder %s25, 1
      %p158 = por %p156, %p157
      %p160 = scmp.ne.s32.totalorder %s143, %s159
      %p161 = scmp.eq.s32.totalorder %s25, 0
      %p162 = por %p160, %p161
      %s163 = ssub.s32 %s19, %s26
      %p164 = scmp.eq.s32.totalorder %s163, 0
      %s166 = sadd.s32 %s165, 1
      %s167 = scalar_select %p164, %s165, %s166
      %p170 = pneg %p164
      %p171 = scmp.eq.s32.totalorder %s19, 1
      %p172 = por %p170, %p171
      %p173 = scmp.ne.s32.totalorder %s165, %s168
      %p174 = scmp.eq.s32.totalorder %s19, 0
      %p175 = por %p173, %p174
      %p176 = scmp.ne.s32.totalorder %s165, %s168
      %p177 = scmp.eq.s32.totalorder %s24, 1
      %p178 = por %p176, %p177
      %p179 = scmp.ne.s32.totalorder %s168, %s169
      %p180 = scmp.eq.s32.totalorder %s24, 0
      %p181 = por %p179, %p180
      %p182 = scmp.ne.s32.totalorder %s168, %s169
      %p183 = scmp.eq.s32.totalorder %s25, 1
      %p184 = por %p182, %p183
      %p186 = scmp.ne.s32.totalorder %s169, %s185
      %p187 = scmp.eq.s32.totalorder %s25, 0
      %p188 = por %p186, %p187
      %p189 = scmp.le.s32.totalorder 1, %s19
      %p190 = scmp.lt.s32.totalorder %s19, 3
      %p191 = pnand %p189, %p190
      %p192 = pneg %p191
      // Predicated region
      $region9: #{tpu_custom_call.1} parent=5 // pred_check
        _
      $region10: #{tpu_custom_call.1} parent=5 // pred_check_branch
        %194 = sbr.rel (%p191) target = $region12
      $region11: #{tpu_custom_call.1} parent=5 // pred_region
        %s195 = ssub.s32 %s19, 1
        // Predicated region
        $region13: #{tpu_custom_call.1} parent=11 // pred_check
          %p196 = pneg %p66
        $region14: #{tpu_custom_call.1} parent=11 // pred_check_branch
          %198 = sbr.rel (%p196) target = $region16
        $region15: #{tpu_custom_call.1} parent=11 // pred_region
          %s200 = ssub.s32 512, 512
          %201 = vsyncadd [#allocation6], %s200
          %s202 = sshll.u32 [#allocation5], 4
          %s203 = int_to_ptr.vmem [resolvable:$true] %s202
          %208 = dma.hbm_to_vmem [thread:$0]  %s1, 512, %s203, [#allocation6], 128, 128, 8
        $region16: #{tpu_custom_call.1} parent=11 // pred_fallthru
          _
        // Predicated region
        $region17: #{tpu_custom_call.1} parent=11 // pred_check
          %p209 = pneg %p87
        $region18: #{tpu_custom_call.1} parent=11 // pred_check_branch
          %211 = sbr.rel (%p209) target = $region20
        $region19: #{tpu_custom_call.1} parent=11 // pred_region
          _
        $region20: #{tpu_custom_call.1} parent=11 // pred_fallthru
          _
        // Predicated region
        $region21: #{tpu_custom_call.1} parent=11 // pred_check
          %p212 = pneg %p108
        $region22: #{tpu_custom_call.1} parent=11 // pred_check_branch
          %214 = sbr.rel (%p212) target = $region24
        $region23: #{tpu_custom_call.1} parent=11 // pred_region
          %s216 = ssub.s32 512, 512
          %217 = vsyncadd [#allocation6], %s216
          %s218 = sshll.u32 [#allocation7], 4
          %s219 = int_to_ptr.vmem [resolvable:$true] %s218
          %224 = dma.hbm_to_vmem [thread:$0]  %s3, 512, %s219, [#allocation6], 128, 128, 8
        $region24: #{tpu_custom_call.1} parent=11 // pred_fallthru
          _
        // Predicated region
        $region25: #{tpu_custom_call.1} parent=11 // pred_check
          %p225 = pneg %p129
        $region26: #{tpu_custom_call.1} parent=11 // pred_check_branch
          %227 = sbr.rel (%p225) target = $region28
        $region27: #{tpu_custom_call.1} parent=11 // pred_region
          _
        $region28: #{tpu_custom_call.1} parent=11 // pred_fallthru
          _
      $region12: #{tpu_custom_call.1} parent=5 // pred_fallthru
        _
      %p228 = scmp.lt.s32.totalorder %s19, 2
      // Predicated region
      $region29: #{tpu_custom_call.1} parent=5 // pred_check
        %p229 = pneg %p228
      $region30: #{tpu_custom_call.1} parent=5 // pred_check_branch
        %231 = sbr.rel (%p229) target = $region32
      $region31: #{tpu_custom_call.1} parent=5 // pred_region
        // Predicated region
        $region33: #{tpu_custom_call.1} parent=31 // pred_check
          %p232 = pneg %p39
        $region34: #{tpu_custom_call.1} parent=31 // pred_check_branch
          %234 = sbr.rel (%p232) target = $region36
        $region35: #{tpu_custom_call.1} parent=31 // pred_region
          %s235 = sand.u32 %s29, 1
          %s236 = scalar_lea.sflag [#allocation3], %s235
          %s237 = sand.u32 %s29, 1
          %s238 = smul.addr %s237, 32
          %s239 = scalar_lea.vmem [#allocation2], %s238
          %s240 = smul.u32 4, %s19
          %s242 = ssub.s32 512, 512
          %243 = vsyncadd %s236, %s242
          %s244 = smul.addr %s240, 128
          %s245 = scalar_lea.hbm %s0, %s244
          %s246 = sshll.u32 %s239, 4
          %s247 = int_to_ptr.vmem [resolvable:$true] %s246
          %252 = dma.hbm_to_vmem [thread:$0]  %s245, 512, %s247, %s236, 128, 128, 8
        $region36: #{tpu_custom_call.1} parent=31 // pred_fallthru
          _
        // Predicated region
        $region37: #{tpu_custom_call.1} parent=31 // pred_check
          %p253 = pneg %p149
        $region38: #{tpu_custom_call.1} parent=31 // pred_check_branch
          %255 = sbr.rel (%p253) target = $region40
        $region39: #{tpu_custom_call.1} parent=31 // pred_region
          %s256 = smul.u32 4, %s19
          %p257 = scmp.lt.s32.totalorder %s256, 7
          %s258 = scalar_select %p257, %s256, 7
          %s259 = scalar_lea.vmem %s5, %s258
          %s260 = smul.u32 4, %s19
        $region40: #{tpu_custom_call.1} parent=31 // pred_fallthru
          _
      $region32: #{tpu_custom_call.1} parent=5 // pred_fallthru
        _
      %p261 = scmp.le.s32.totalorder 1, %s19
      %p262 = scmp.lt.s32.totalorder %s19, 3
      %p263 = pnand %p261, %p262
      %p264 = pneg %p263
      // Predicated region
      $region41: #{tpu_custom_call.1} parent=5 // pred_check
        _
      $region42: #{tpu_custom_call.1} parent=5 // pred_check_branch
        %266 = sbr.rel (%p263) target = $region44
      $region43: #{tpu_custom_call.1} parent=5 // pred_region
        %s267 = ssub.s32 %s19, 1
        %s268 = sand.u32 %s32, 1
        %s269 = scalar_lea.sflag [#allocation3], %s268
        %s270 = sand.u32 %s32, 1
        %s271 = smul.addr %s270, 32
        %s272 = scalar_lea.vmem [#allocation2], %s271
        // Predicated region
        $region45: #{tpu_custom_call.1} parent=43 // pred_check
          %p273 = pneg %p45
        $region46: #{tpu_custom_call.1} parent=43 // pred_check_branch
          %275 = sbr.rel (%p273) target = $region48
        $region47: #{tpu_custom_call.1} parent=43 // pred_region
          %276 = dma.done %s269, 512
        $region48: #{tpu_custom_call.1} parent=43 // pred_fallthru
          _
        // Predicated region
        $region49: #{tpu_custom_call.1} parent=43 // pred_check
          %p277 = pneg %p66
        $region50: #{tpu_custom_call.1} parent=43 // pred_check_branch
          %279 = sbr.rel (%p277) target = $region52
        $region51: #{tpu_custom_call.1} parent=43 // pred_region
          %280 = dma.done [#allocation6], 512
        $region52: #{tpu_custom_call.1} parent=43 // pred_fallthru
          _
        // Predicated region
        $region53: #{tpu_custom_call.1} parent=43 // pred_check
          %p281 = pneg %p108
        $region54: #{tpu_custom_call.1} parent=43 // pred_check_branch
          %283 = sbr.rel (%p281) target = $region56
        $region55: #{tpu_custom_call.1} parent=43 // pred_region
          %284 = dma.done [#allocation6], 512
        $region56: #{tpu_custom_call.1} parent=43 // pred_fallthru
          _
        %s285 = sand.u32 %s32, 1
        %s286 = scalar_lea.sflag [#allocation3], %s285
        %s287 = sand.u32 %s32, 1
        %s288 = smul.addr %s287, 32
        %s289 = scalar_lea.vmem [#allocation2], %s288
        %p290 = pneg %p45
        %p291 = pneg %p42
        %p292 = pneg %p66
        %p293 = pneg %p63
        %p294 = pneg %p87
        %p295 = pneg %p84
        %p296 = pneg %p108
        %p297 = pneg %p105
        %p298 = pneg %p129
        %p299 = pneg %p126
        %s300 = smul.u32 4, %s24
        %p301 = scmp.lt.s32.totalorder %s300, 7
        %s302 = scalar_select %p301, %s300, 7
        %s303 = scalar_lea.vmem %s5, %s302
        %p304 = pneg %p155
        %p305 = pneg %p152
        %p306 = pneg %p181
        %p307 = pneg %p178
        %s308 = sand.u32 %s168, 1
        %s309 = scalar_lea.sflag [#allocation4], %s308
        %s310 = sand.u32 %s168, 1
        %s311 = smul.addr %s310, 32
        %s312 = scalar_lea.vmem [#allocation8], %s311
        %s313 = smul.u32 4, %s24
        %s314 = smul.u32 4, %s24
        %p315 = scmp.lt.s32.totalorder %s314, 7
        %s316 = scalar_select %p315, %s314, 7
        %s317 = scalar_lea.vmem %s5, %s316
        %s318 = smul.u32 4, %s24
        %s319 = smul.u32 4, %s24
        %v320 = vld [vmem:[%s272] sm:$0xff]
        %v321 = vld [vmem:[%s272 + $0x8] sm:$0xff]
        %v322 = vld [vmem:[%s272 + $0x10] sm:$0xff]
        %v323 = vld [vmem:[%s272 + $0x18] sm:$0xff]
        %v324 = vld [vmem:[#allocation5] sm:$0xff]
        %v325 = vld [vmem:[#allocation5 + $0x8] sm:$0xff]
        %v326 = vld [vmem:[#allocation5 + $0x10] sm:$0xff]
        %v327 = vld [vmem:[#allocation5 + $0x18] sm:$0xff]
        %v328 = vld [vmem:[%s2] sm:$0x1]
        %v330 = vlaneseq
        %v331 = vshrl.u32 %v330, 7
        %v332 = vsub.s32 0, %v331
        %v333 = vrot.slane %v328, %v332
        %vm335 = vcmask 261120
        %v337 = vsel %vm335, %v320, 0
        %v340 = vsel %vm335, %v321, 0
        %v343 = vsel %vm335, %v322, 0
        %v346 = vsel %vm335, %v323, 0
        %348 = vmatprep.subr.mxu0 0.0
        %349 = vmatpush1.msra.mxu0 %v324
        %350 = vmatprep.subr.mxu0 0.0
        %351 = vmatpush1.msra.mxu0 %v325
        %352 = vmatprep.subr.mxu0 0.0
        %353 = vmatpush1.msra.mxu0 %v326
        %354 = vmatprep.subr.mxu0 0.0
        %355 = vmatpush1.msra.mxu0 %v327
        %356 = vmatprep.subr.mxu0 0.0
        %357 = vmatpush1.msra.mxu0 0.0
        %358 = vmatprep.subr.mxu0 0.0
        %359 = vmatpush1.msra.mxu0 0.0
        %360 = vmatprep.subr.mxu0 0.0
        %361 = vmatpush1.msra.mxu0 0.0
        %362 = vmatprep.subr.mxu0 0.0
        %363 = vmatpush1.msra.mxu0 0.0
        %364 = vmatprep.subr.mxu0 0.0
        %365 = vmatpush1.msra.mxu0 0.0
        %366 = vmatprep.subr.mxu0 0.0
        %367 = vmatpush1.msra.mxu0 0.0
        %368 = vmatprep.subr.mxu0 0.0
        %369 = vmatpush1.msra.mxu0 0.0
        %370 = vmatprep.subr.mxu0 0.0
        %371 = vmatpush1.msra.mxu0 0.0
        %372 = vmatprep.subr.mxu0 0.0
        %373 = vmatpush1.msra.mxu0 0.0
        %374 = vmatprep.subr.mxu0 0.0
        %375 = vmatpush1.msra.mxu0 0.0
        %376 = vmatprep.subr.mxu0 0.0
        %377 = vmatpush1.msra.mxu0 0.0
        %378 = vmatprep.subr.mxu0 0.0
        %379 = vmatpush1.msra.mxu0 0.0
        %380 = vmatprep.subr.mxu0 0.0
        %381 = vmatpush1.msra.mxu0 0.0
        %382 = vmatprep.subr.mxu0 0.0
        %383 = vmatpush1.msra.mxu0 0.0
        %384 = vmatprep.subr.mxu0 0.0
        %385 = vmatpush1.msra.mxu0 0.0
        %386 = vmatprep.subr.mxu0 0.0
        %387 = vmatpush1.msra.mxu0 0.0
        %388 = vmatprep.subr.mxu0 0.0
        %389 = vmatpush1.msra.mxu0 0.0
        %390 = vmatprep.subr.mxu0 0.0
        %391 = vmatpush1.msra.mxu0 0.0
        %392 = vmatprep.subr.mxu0 0.0
        %393 = vmatpush1.msra.mxu0 0.0
        %394 = vmatprep.subr.mxu0 0.0
        %395 = vmatpush1.msra.mxu0 0.0
        %396 = vmatprep.subr.mxu0 0.0
        %397 = vmatpush1.msra.mxu0 0.0
        %398 = vmatprep.subr.mxu0 0.0
        %399 = vmatpush1.msra.mxu0 0.0
        %400 = vmatprep.subr.mxu0 0.0
        %401 = vmatpush1.msra.mxu0 0.0
        %402 = vmatprep.subr.mxu0 0.0
        %403 = vmatpush1.msra.mxu0 0.0
        %404 = vmatprep.subr.mxu0 0.0
        %405 = vmatpush1.msra.mxu0 0.0
        %406 = vmatprep.subr.mxu0 0.0
        %407 = vmatpush1.msra.mxu0 0.0
        %408 = vmatprep.subr.mxu0 0.0
        %409 = vmatpush1.msra.mxu0 0.0
        %410 = vmatprep.subr.mxu0 0.0
        %411 = vmatpush1.msra.mxu0 0.0
        %412 = vmatprep.mubr.f32.mxu0 0.0
        %413 = vmatmul.mubr.f32.gmra.mrb[0].mxu0 %v337
        %v414 = vpop.f32.mrb[0].mxu0
        %v415 = vadd.f32 %v333, %v414
        %v416 = vpop.f32.mrb[0].mxu0
        %417 = vmatprep.mubr.f32.mxu0 0.0
        %418 = vmatmul.mubr.f32.gmra.mrb[0].mxu0 %v340
        %v419 = vpop.f32.mrb[0].mxu0
        %v420 = vadd.f32 %v333, %v419
        %v421 = vpop.f32.mrb[0].mxu0
        %422 = vmatprep.mubr.f32.mxu0 0.0
        %423 = vmatmul.mubr.f32.gmra.mrb[0].mxu0 %v343
        %v424 = vpop.f32.mrb[0].mxu0
        %v425 = vadd.f32 %v333, %v424
        %v426 = vpop.f32.mrb[0].mxu0
        %427 = vmatprep.mubr.f32.mxu0 0.0
        %428 = vmatmul.mubr.f32.gmra.mrb[0].mxu0 %v346
        %v429 = vpop.f32.mrb[0].mxu0
        %v430 = vadd.f32 %v333, %v429
        %v431 = vpop.f32.mrb[0].mxu0
        %432 = vdwg.mxu0
        %v433 = vld [vmem:[%s317] sm:$0x1]
        %v434 = vld [vmem:[%s317 + $0x1] sm:$0x1]
        %v435 = vld [vmem:[%s317 + $0x2] sm:$0x1]
        %v436 = vld [vmem:[%s317 + $0x3] sm:$0x1]
        %v437 = vmul.f32 %v433, -1.0
        %v438 = vmul.f32 %v434, -1.0
        %v439 = vmul.f32 %v435, -1.0
        %v440 = vmul.f32 %v436, -1.0
        %v441 = vmul.f32 %v437, 1.442695
        %v442 = vpow.pop %v441
        %v443 = vmul.f32 %v438, 1.442695
        %v444 = vpow.pop %v443
        %v445 = vmul.f32 %v439, 1.442695
        %v446 = vpow.pop %v445
        %v447 = vmul.f32 %v440, 1.442695
        %v448 = vpow.pop %v447
        %450 = vrot.lane.b32.xlu0 %v415, 96
        %v451 = vpop.permute.xlu0 %450
        %vm452 = vcmask 64512
        %v453 = vsel %vm452, %v415, 0
        %v455 = vsel %vm452, %v451, 0
        %457 = vmatprep.subr.mxu0 0.0
        %458 = vmatpush1.xpose.msra.mxu0 %v455
        %459 = vmatprep.subr.mxu0 0.0
        %460 = vmatpush1.xpose.msra.mxu0 0.0
        %461 = vmatprep.subr.mxu0 0.0
        %462 = vmatpush1.xpose.msra.mxu0 0.0
        %463 = vmatprep.subr.mxu0 0.0
        %464 = vmatpush1.xpose.msra.mxu0 0.0
        %465 = vmatprep.subr.mxu0 0.0
        %466 = vmatpush1.xpose.msra.mxu0 0.0
        %467 = vmatprep.subr.mxu0 0.0
        %468 = vmatpush1.xpose.msra.mxu0 0.0
        %469 = vmatprep.subr.mxu0 0.0
        %470 = vmatpush1.xpose.msra.mxu0 0.0
        %471 = vmatprep.subr.mxu0 0.0
        %472 = vmatpush1.xpose.msra.mxu0 0.0
        %473 = vmatprep.subr.mxu0 0.0
        %474 = vmatpush1.xpose.msra.mxu0 0.0
        %475 = vmatprep.subr.mxu0 0.0
        %476 = vmatpush1.xpose.msra.mxu0 0.0
        %477 = vmatprep.subr.mxu0 0.0
        %478 = vmatpush1.xpose.msra.mxu0 0.0
        %479 = vmatprep.subr.mxu0 0.0
        %480 = vmatpush1.xpose.msra.mxu0 0.0
        %481 = vmatprep.subr.mxu0 0.0
        %482 = vmatpush1.xpose.msra.mxu0 0.0
        %483 = vmatprep.subr.mxu0 0.0
        %484 = vmatpush1.xpose.msra.mxu0 0.0
        %485 = vmatprep.subr.mxu0 0.0
        %486 = vmatpush1.xpose.msra.mxu0 0.0
        %487 = vmatprep.subr.mxu0 0.0
        %488 = vmatpush1.xpose.msra.mxu0 0.0
        %489 = vmatprep.subr.mxu0 0.0
        %490 = vmatpush1.xpose.msra.mxu0 0.0
        %491 = vmatprep.subr.mxu0 0.0
        %492 = vmatpush1.xpose.msra.mxu0 0.0
        %493 = vmatprep.subr.mxu0 0.0
        %494 = vmatpush1.xpose.msra.mxu0 0.0
        %495 = vmatprep.subr.mxu0 0.0
        %496 = vmatpush1.xpose.msra.mxu0 0.0
        %497 = vmatprep.subr.mxu0 0.0
        %498 = vmatpush1.xpose.msra.mxu0 0.0
        %499 = vmatprep.subr.mxu0 0.0
        %500 = vmatpush1.xpose.msra.mxu0 0.0
        %501 = vmatprep.subr.mxu0 0.0
        %502 = vmatpush1.xpose.msra.mxu0 0.0
        %503 = vmatprep.subr.mxu0 0.0
        %504 = vmatpush1.xpose.msra.mxu0 0.0
        %505 = vmatprep.subr.mxu0 0.0
        %506 = vmatpush1.xpose.msra.mxu0 0.0
        %507 = vmatprep.subr.mxu0 0.0
        %508 = vmatpush1.xpose.msra.mxu0 0.0
        %509 = vmatprep.subr.mxu0 0.0
        %510 = vmatpush1.xpose.msra.mxu0 0.0
        %511 = vmatprep.subr.mxu0 0.0
        %512 = vmatpush1.xpose.msra.mxu0 0.0
        %513 = vmatprep.subr.mxu0 0.0
        %514 = vmatpush1.xpose.msra.mxu0 0.0
        %515 = vmatprep.subr.mxu0 0.0
        %516 = vmatpush1.xpose.msra.mxu0 0.0
        %517 = vmatprep.subr.mxu0 0.0
        %518 = vmatpush1.xpose.msra.mxu0 0.0
        %519 = vmatprep.subr.mxu0 0.0
        %520 = vmatpush1.xpose.msra.mxu0 0.0
        %521 = vmatprep.mubr.f32.mxu0 0.0
        %522 = vmatmul.mubr.f32.gmra.mrb[0].mxu0 %v453
        %v523 = vpop.f32.mrb[0].mxu0
        %v524 = vadd.f32 0.0, %v523
        %v525 = vpop.f32.mrb[0].mxu0
        %526 = vdwg.mxu0
        %528 = vrot.lane.b32.xlu0 %v420, 96
        %v529 = vpop.permute.xlu0 %528
        %v530 = vsel %vm452, %v420, 0
        %v532 = vsel %vm452, %v529, 0
        %534 = vmatprep.subr.mxu0 0.0
        %535 = vmatpush1.xpose.msra.mxu0 %v532
        %536 = vmatprep.subr.mxu0 0.0
        %537 = vmatpush1.xpose.msra.mxu0 0.0
        %538 = vmatprep.subr.mxu0 0.0
        %539 = vmatpush1.xpose.msra.mxu0 0.0
        %540 = vmatprep.subr.mxu0 0.0
        %541 = vmatpush1.xpose.msra.mxu0 0.0
        %542 = vmatprep.subr.mxu0 0.0
        %543 = vmatpush1.xpose.msra.mxu0 0.0
        %544 = vmatprep.subr.mxu0 0.0
        %545 = vmatpush1.xpose.msra.mxu0 0.0
        %546 = vmatprep.subr.mxu0 0.0
        %547 = vmatpush1.xpose.msra.mxu0 0.0
        %548 = vmatprep.subr.mxu0 0.0
        %549 = vmatpush1.xpose.msra.mxu0 0.0
        %550 = vmatprep.subr.mxu0 0.0
        %551 = vmatpush1.xpose.msra.mxu0 0.0
        %552 = vmatprep.subr.mxu0 0.0
        %553 = vmatpush1.xpose.msra.mxu0 0.0
        %554 = vmatprep.subr.mxu0 0.0
        %555 = vmatpush1.xpose.msra.mxu0 0.0
        %556 = vmatprep.subr.mxu0 0.0
        %557 = vmatpush1.xpose.msra.mxu0 0.0
        %558 = vmatprep.subr.mxu0 0.0
        %559 = vmatpush1.xpose.msra.mxu0 0.0
        %560 = vmatprep.subr.mxu0 0.0
        %561 = vmatpush1.xpose.msra.mxu0 0.0
        %562 = vmatprep.subr.mxu0 0.0
        %563 = vmatpush1.xpose.msra.mxu0 0.0
        %564 = vmatprep.subr.mxu0 0.0
        %565 = vmatpush1.xpose.msra.mxu0 0.0
        %566 = vmatprep.subr.mxu0 0.0
        %567 = vmatpush1.xpose.msra.mxu0 0.0
        %568 = vmatprep.subr.mxu0 0.0
        %569 = vmatpush1.xpose.msra.mxu0 0.0
        %570 = vmatprep.subr.mxu0 0.0
        %571 = vmatpush1.xpose.msra.mxu0 0.0
        %572 = vmatprep.subr.mxu0 0.0
        %573 = vmatpush1.xpose.msra.mxu0 0.0
        %574 = vmatprep.subr.mxu0 0.0
        %575 = vmatpush1.xpose.msra.mxu0 0.0
        %576 = vmatprep.subr.mxu0 0.0
        %577 = vmatpush1.xpose.msra.mxu0 0.0
        %578 = vmatprep.subr.mxu0 0.0
        %579 = vmatpush1.xpose.msra.mxu0 0.0
        %580 = vmatprep.subr.mxu0 0.0
        %581 = vmatpush1.xpose.msra.mxu0 0.0
        %582 = vmatprep.subr.mxu0 0.0
        %583 = vmatpush1.xpose.msra.mxu0 0.0
        %584 = vmatprep.subr.mxu0 0.0
        %585 = vmatpush1.xpose.msra.mxu0 0.0
        %586 = vmatprep.subr.mxu0 0.0
        %587 = vmatpush1.xpose.msra.mxu0 0.0
        %588 = vmatprep.subr.mxu0 0.0
        %589 = vmatpush1.xpose.msra.mxu0 0.0
        %590 = vmatprep.subr.mxu0 0.0
        %591 = vmatpush1.xpose.msra.mxu0 0.0
        %592 = vmatprep.subr.mxu0 0.0
        %593 = vmatpush1.xpose.msra.mxu0 0.0
        %594 = vmatprep.subr.mxu0 0.0
        %595 = vmatpush1.xpose.msra.mxu0 0.0
        %596 = vmatprep.subr.mxu0 0.0
        %597 = vmatpush1.xpose.msra.mxu0 0.0
        %598 = vmatprep.mubr.f32.mxu0 0.0
        %599 = vmatmul.mubr.f32.gmra.mrb[0].mxu0 %v530
        %v600 = vpop.f32.mrb[0].mxu0
        %v601 = vadd.f32 0.0, %v600
        %v602 = vpop.f32.mrb[0].mxu0
        %603 = vdwg.mxu0
        %605 = vrot.lane.b32.xlu0 %v425, 96
        %v606 = vpop.permute.xlu0 %605
        %v607 = vsel %vm452, %v425, 0
        %v609 = vsel %vm452, %v606, 0
        %611 = vmatprep.subr.mxu0 0.0
        %612 = vmatpush1.xpose.msra.mxu0 %v609
        %613 = vmatprep.subr.mxu0 0.0
        %614 = vmatpush1.xpose.msra.mxu0 0.0
        %615 = vmatprep.subr.mxu0 0.0
        %616 = vmatpush1.xpose.msra.mxu0 0.0
        %617 = vmatprep.subr.mxu0 0.0
        %618 = vmatpush1.xpose.msra.mxu0 0.0
        %619 = vmatprep.subr.mxu0 0.0
        %620 = vmatpush1.xpose.msra.mxu0 0.0
        %621 = vmatprep.subr.mxu0 0.0
        %622 = vmatpush1.xpose.msra.mxu0 0.0
        %623 = vmatprep.subr.mxu0 0.0
        %624 = vmatpush1.xpose.msra.mxu0 0.0
        %625 = vmatprep.subr.mxu0 0.0
        %626 = vmatpush1.xpose.msra.mxu0 0.0
        %627 = vmatprep.subr.mxu0 0.0
        %628 = vmatpush1.xpose.msra.mxu0 0.0
        %629 = vmatprep.subr.mxu0 0.0
        %630 = vmatpush1.xpose.msra.mxu0 0.0
        %631 = vmatprep.subr.mxu0 0.0
        %632 = vmatpush1.xpose.msra.mxu0 0.0
        %633 = vmatprep.subr.mxu0 0.0
        %634 = vmatpush1.xpose.msra.mxu0 0.0
        %635 = vmatprep.subr.mxu0 0.0
        %636 = vmatpush1.xpose.msra.mxu0 0.0
        %637 = vmatprep.subr.mxu0 0.0
        %638 = vmatpush1.xpose.msra.mxu0 0.0
        %639 = vmatprep.subr.mxu0 0.0
        %640 = vmatpush1.xpose.msra.mxu0 0.0
        %641 = vmatprep.subr.mxu0 0.0
        %642 = vmatpush1.xpose.msra.mxu0 0.0
        %643 = vmatprep.subr.mxu0 0.0
        %644 = vmatpush1.xpose.msra.mxu0 0.0
        %645 = vmatprep.subr.mxu0 0.0
        %646 = vmatpush1.xpose.msra.mxu0 0.0
        %647 = vmatprep.subr.mxu0 0.0
        %648 = vmatpush1.xpose.msra.mxu0 0.0
        %649 = vmatprep.subr.mxu0 0.0
        %650 = vmatpush1.xpose.msra.mxu0 0.0
        %651 = vmatprep.subr.mxu0 0.0
        %652 = vmatpush1.xpose.msra.mxu0 0.0
        %653 = vmatprep.subr.mxu0 0.0
        %654 = vmatpush1.xpose.msra.mxu0 0.0
        %655 = vmatprep.subr.mxu0 0.0
        %656 = vmatpush1.xpose.msra.mxu0 0.0
        %657 = vmatprep.subr.mxu0 0.0
        %658 = vmatpush1.xpose.msra.mxu0 0.0
        %659 = vmatprep.subr.mxu0 0.0
        %660 = vmatpush1.xpose.msra.mxu0 0.0
        %661 = vmatprep.subr.mxu0 0.0
        %662 = vmatpush1.xpose.msra.mxu0 0.0
        %663 = vmatprep.subr.mxu0 0.0
        %664 = vmatpush1.xpose.msra.mxu0 0.0
        %665 = vmatprep.subr.mxu0 0.0
        %666 = vmatpush1.xpose.msra.mxu0 0.0
        %667 = vmatprep.subr.mxu0 0.0
        %668 = vmatpush1.xpose.msra.mxu0 0.0
        %669 = vmatprep.subr.mxu0 0.0
        %670 = vmatpush1.xpose.msra.mxu0 0.0
        %671 = vmatprep.subr.mxu0 0.0
        %672 = vmatpush1.xpose.msra.mxu0 0.0
        %673 = vmatprep.subr.mxu0 0.0
        %674 = vmatpush1.xpose.msra.mxu0 0.0
        %675 = vmatprep.mubr.f32.mxu0 0.0
        %676 = vmatmul.mubr.f32.gmra.mrb[0].mxu0 %v607
        %v677 = vpop.f32.mrb[0].mxu0
        %v678 = vadd.f32 0.0, %v677
        %v679 = vpop.f32.mrb[0].mxu0
        %680 = vdwg.mxu0
        %682 = vrot.lane.b32.xlu0 %v430, 96
        %v683 = vpop.permute.xlu0 %682
        %v684 = vsel %vm452, %v430, 0
        %v686 = vsel %vm452, %v683, 0
        %688 = vmatprep.subr.mxu0 0.0
        %689 = vmatpush1.xpose.msra.mxu0 %v686
        %690 = vmatprep.subr.mxu0 0.0
        %691 = vmatpush1.xpose.msra.mxu0 0.0
        %692 = vmatprep.subr.mxu0 0.0
        %693 = vmatpush1.xpose.msra.mxu0 0.0
        %694 = vmatprep.subr.mxu0 0.0
        %695 = vmatpush1.xpose.msra.mxu0 0.0
        %696 = vmatprep.subr.mxu0 0.0
        %697 = vmatpush1.xpose.msra.mxu0 0.0
        %698 = vmatprep.subr.mxu0 0.0
        %699 = vmatpush1.xpose.msra.mxu0 0.0
        %700 = vmatprep.subr.mxu0 0.0
        %701 = vmatpush1.xpose.msra.mxu0 0.0
        %702 = vmatprep.subr.mxu0 0.0
        %703 = vmatpush1.xpose.msra.mxu0 0.0
        %704 = vmatprep.subr.mxu0 0.0
        %705 = vmatpush1.xpose.msra.mxu0 0.0
        %706 = vmatprep.subr.mxu0 0.0
        %707 = vmatpush1.xpose.msra.mxu0 0.0
        %708 = vmatprep.subr.mxu0 0.0
        %709 = vmatpush1.xpose.msra.mxu0 0.0
        %710 = vmatprep.subr.mxu0 0.0
        %711 = vmatpush1.xpose.msra.mxu0 0.0
        %712 = vmatprep.subr.mxu0 0.0
        %713 = vmatpush1.xpose.msra.mxu0 0.0
        %714 = vmatprep.subr.mxu0 0.0
        %715 = vmatpush1.xpose.msra.mxu0 0.0
        %716 = vmatprep.subr.mxu0 0.0
        %717 = vmatpush1.xpose.msra.mxu0 0.0
        %718 = vmatprep.subr.mxu0 0.0
        %719 = vmatpush1.xpose.msra.mxu0 0.0
        %720 = vmatprep.subr.mxu0 0.0
        %721 = vmatpush1.xpose.msra.mxu0 0.0
        %722 = vmatprep.subr.mxu0 0.0
        %723 = vmatpush1.xpose.msra.mxu0 0.0
        %724 = vmatprep.subr.mxu0 0.0
        %725 = vmatpush1.xpose.msra.mxu0 0.0
        %726 = vmatprep.subr.mxu0 0.0
        %727 = vmatpush1.xpose.msra.mxu0 0.0
        %728 = vmatprep.subr.mxu0 0.0
        %729 = vmatpush1.xpose.msra.mxu0 0.0
        %730 = vmatprep.subr.mxu0 0.0
        %731 = vmatpush1.xpose.msra.mxu0 0.0
        %732 = vmatprep.subr.mxu0 0.0
        %733 = vmatpush1.xpose.msra.mxu0 0.0
        %734 = vmatprep.subr.mxu0 0.0
        %735 = vmatpush1.xpose.msra.mxu0 0.0
        %736 = vmatprep.subr.mxu0 0.0
        %737 = vmatpush1.xpose.msra.mxu0 0.0
        %738 = vmatprep.subr.mxu0 0.0
        %739 = vmatpush1.xpose.msra.mxu0 0.0
        %740 = vmatprep.subr.mxu0 0.0
        %741 = vmatpush1.xpose.msra.mxu0 0.0
        %742 = vmatprep.subr.mxu0 0.0
        %743 = vmatpush1.xpose.msra.mxu0 0.0
        %744 = vmatprep.subr.mxu0 0.0
        %745 = vmatpush1.xpose.msra.mxu0 0.0
        %746 = vmatprep.subr.mxu0 0.0
        %747 = vmatpush1.xpose.msra.mxu0 0.0
        %748 = vmatprep.subr.mxu0 0.0
        %749 = vmatpush1.xpose.msra.mxu0 0.0
        %750 = vmatprep.subr.mxu0 0.0
        %751 = vmatpush1.xpose.msra.mxu0 0.0
        %752 = vmatprep.mubr.f32.mxu0 0.0
        %753 = vmatmul.mubr.f32.gmra.mrb[0].mxu0 %v684
        %v754 = vpop.f32.mrb[0].mxu0
        %v755 = vadd.f32 0.0, %v754
        %v756 = vpop.f32.mrb[0].mxu0
        %757 = vdwg.mxu0
        %v758 = vsel %vm452, %v524, -inf
        %759 = vmax.xlane.f32.xlu0 %v758
        %v760 = vpop.xlane.xlu0 %759
        %v761 = vsel %vm452, %v601, -inf
        %762 = vmax.xlane.f32.xlu0 %v761
        %v763 = vpop.xlane.xlu0 %762
        %v764 = vsel %vm452, %v678, -inf
        %765 = vmax.xlane.f32.xlu0 %v764
        %v766 = vpop.xlane.xlu0 %765
        %v767 = vsel %vm452, %v755, -inf
        %768 = vmax.xlane.f32.xlu0 %v767
        %v769 = vpop.xlane.xlu0 %768
        %v770 = vsub.f32 %v524, %v760
        %v771 = vsub.f32 %v601, %v763
        %v772 = vsub.f32 %v678, %v766
        %v773 = vsub.f32 %v755, %v769
        %v774 = vmul.f32 %v770, 1.442695
        %v775 = vpow.pop %v774
        %v776 = vmul.f32 %v771, 1.442695
        %v777 = vpow.pop %v776
        %v778 = vmul.f32 %v772, 1.442695
        %v779 = vpow.pop %v778
        %v780 = vmul.f32 %v773, 1.442695
        %v781 = vpow.pop %v780
        %v782 = vsel %vm452, %v775, 0.0
        %783 = vadd.xlane.f32.xlu0 %v782
        %v784 = vpop.xlane.xlu0 %783
        %v785 = vsel %vm452, %v777, 0.0
        %786 = vadd.xlane.f32.xlu0 %v785
        %v787 = vpop.xlane.xlu0 %786
        %v788 = vsel %vm452, %v779, 0.0
        %789 = vadd.xlane.f32.xlu0 %v788
        %v790 = vpop.xlane.xlu0 %789
        %v791 = vsel %vm452, %v781, 0.0
        %792 = vadd.xlane.f32.xlu0 %v791
        %v793 = vpop.xlane.xlu0 %792
        %v794 = vrcp.pop %v784
        %v795 = vmul.f32 %v775, %v794
        %v796 = vrcp.pop %v787
        %v797 = vmul.f32 %v777, %v796
        %v798 = vrcp.pop %v790
        %v799 = vmul.f32 %v779, %v798
        %v800 = vrcp.pop %v793
        %v801 = vmul.f32 %v781, %v800
        %v806 = vlaneseq
        %v807 = vshrl.u32 %v806, 7
        %v808 = vsub.s32 0, %v807
        %v809 = vrot.slane %v442, %v808
        %v810 = vlaneseq
        %v811 = vshrl.u32 %v810, 7
        %v812 = vsub.s32 0, %v811
        %v813 = vrot.slane %v444, %v812
        %v814 = vlaneseq
        %v815 = vshrl.u32 %v814, 7
        %v816 = vsub.s32 0, %v815
        %v817 = vrot.slane %v446, %v816
        %v818 = vlaneseq
        %v819 = vshrl.u32 %v818, 7
        %v820 = vsub.s32 0, %v819
        %v821 = vrot.slane %v448, %v820
        %v826 = vmul.f32 %v795, %v809
        %v827 = vmul.f32 %v797, %v813
        %v828 = vmul.f32 %v799, %v817
        %v829 = vmul.f32 %v801, %v821
        %v830 = vsel %vm452, %v826, 0.0
        %831 = vadd.xlane.f32.xlu0 %v830
        %v832 = vpop.xlane.xlu0 %831
        %v833 = vsel %vm452, %v827, 0.0
        %834 = vadd.xlane.f32.xlu0 %v833
        %v835 = vpop.xlane.xlu0 %834
        %v836 = vsel %vm452, %v828, 0.0
        %837 = vadd.xlane.f32.xlu0 %v836
        %v838 = vpop.xlane.xlu0 %837
        %v839 = vsel %vm452, %v829, 0.0
        %840 = vadd.xlane.f32.xlu0 %v839
        %v841 = vpop.xlane.xlu0 %840
        %v842 = vadd.f32 %v832, 1e-09
        %v843 = vadd.f32 %v835, 1e-09
        %v844 = vadd.f32 %v838, 1e-09
        %v845 = vadd.f32 %v841, 1e-09
        %v846 = vrcp.pop %v842
        %v847 = vmul.f32 %v826, %v846
        %v848 = vrcp.pop %v843
        %v849 = vmul.f32 %v827, %v848
        %v850 = vrcp.pop %v844
        %v851 = vmul.f32 %v828, %v850
        %v852 = vrcp.pop %v845
        %v853 = vmul.f32 %v829, %v852
        %854 = vrot.lane.b32.xlu0 %v415, 64
        %v855 = vpop.permute.xlu0 %854
        %v858 = vsel %vm452, %v847, 0
        %860 = vmatprep.subr.mxu0 0.0
        %861 = vmatpush1.msra.mxu0 %v855
        %862 = vmatprep.subr.mxu0 0.0
        %863 = vmatpush1.msra.mxu0 0.0
        %864 = vmatprep.subr.mxu0 0.0
        %865 = vmatpush1.msra.mxu0 0.0
        %866 = vmatprep.subr.mxu0 0.0
        %867 = vmatpush1.msra.mxu0 0.0
        %868 = vmatprep.subr.mxu0 0.0
        %869 = vmatpush1.msra.mxu0 0.0
        %870 = vmatprep.subr.mxu0 0.0
        %871 = vmatpush1.msra.mxu0 0.0
        %872 = vmatprep.subr.mxu0 0.0
        %873 = vmatpush1.msra.mxu0 0.0
        %874 = vmatprep.subr.mxu0 0.0
        %875 = vmatpush1.msra.mxu0 0.0
        %876 = vmatprep.subr.mxu0 0.0
        %877 = vmatpush1.msra.mxu0 0.0
        %878 = vmatprep.subr.mxu0 0.0
        %879 = vmatpush1.msra.mxu0 0.0
        %880 = vmatprep.subr.mxu0 0.0
        %881 = vmatpush1.msra.mxu0 0.0
        %882 = vmatprep.subr.mxu0 0.0
        %883 = vmatpush1.msra.mxu0 0.0
        %884 = vmatprep.subr.mxu0 0.0
        %885 = vmatpush1.msra.mxu0 0.0
        %886 = vmatprep.subr.mxu0 0.0
        %887 = vmatpush1.msra.mxu0 0.0
        %888 = vmatprep.subr.mxu0 0.0
        %889 = vmatpush1.msra.mxu0 0.0
        %890 = vmatprep.subr.mxu0 0.0
        %891 = vmatpush1.msra.mxu0 0.0
        %892 = vmatprep.subr.mxu0 0.0
        %893 = vmatpush1.msra.mxu0 0.0
        %894 = vmatprep.subr.mxu0 0.0
        %895 = vmatpush1.msra.mxu0 0.0
        %896 = vmatprep.subr.mxu0 0.0
        %897 = vmatpush1.msra.mxu0 0.0
        %898 = vmatprep.subr.mxu0 0.0
        %899 = vmatpush1.msra.mxu0 0.0
        %900 = vmatprep.subr.mxu0 0.0
        %901 = vmatpush1.msra.mxu0 0.0
        %902 = vmatprep.subr.mxu0 0.0
        %903 = vmatpush1.msra.mxu0 0.0
        %904 = vmatprep.subr.mxu0 0.0
        %905 = vmatpush1.msra.mxu0 0.0
        %906 = vmatprep.subr.mxu0 0.0
        %907 = vmatpush1.msra.mxu0 0.0
        %908 = vmatprep.subr.mxu0 0.0
        %909 = vmatpush1.msra.mxu0 0.0
        %910 = vmatprep.subr.mxu0 0.0
        %911 = vmatpush1.msra.mxu0 0.0
        %912 = vmatprep.subr.mxu0 0.0
        %913 = vmatpush1.msra.mxu0 0.0
        %914 = vmatprep.subr.mxu0 0.0
        %915 = vmatpush1.msra.mxu0 0.0
        %916 = vmatprep.subr.mxu0 0.0
        %917 = vmatpush1.msra.mxu0 0.0
        %918 = vmatprep.subr.mxu0 0.0
        %919 = vmatpush1.msra.mxu0 0.0
        %920 = vmatprep.subr.mxu0 0.0
        %921 = vmatpush1.msra.mxu0 0.0
        %922 = vmatprep.subr.mxu0 0.0
        %923 = vmatpush1.msra.mxu0 0.0
        %924 = vmatprep.mubr.f32.mxu0 0.0
        %925 = vmatmul.mubr.f32.gmra.mrb[0].mxu0 %v858
        %v926 = vpop.f32.mrb[0].mxu0
        %v927 = vadd.f32 0.0, %v926
        %v928 = vpop.f32.mrb[0].mxu0
        %929 = vdwg.mxu0
        %930 = vrot.lane.b32.xlu0 %v420, 64
        %v931 = vpop.permute.xlu0 %930
        %v934 = vsel %vm452, %v849, 0
        %936 = vmatprep.subr.mxu0 0.0
        %937 = vmatpush1.msra.mxu0 %v931
        %938 = vmatprep.subr.mxu0 0.0
        %939 = vmatpush1.msra.mxu0 0.0
        %940 = vmatprep.subr.mxu0 0.0
        %941 = vmatpush1.msra.mxu0 0.0
        %942 = vmatprep.subr.mxu0 0.0
        %943 = vmatpush1.msra.mxu0 0.0
        %944 = vmatprep.subr.mxu0 0.0
        %945 = vmatpush1.msra.mxu0 0.0
        %946 = vmatprep.subr.mxu0 0.0
        %947 = vmatpush1.msra.mxu0 0.0
        %948 = vmatprep.subr.mxu0 0.0
        %949 = vmatpush1.msra.mxu0 0.0
        %950 = vmatprep.subr.mxu0 0.0
        %951 = vmatpush1.msra.mxu0 0.0
        %952 = vmatprep.subr.mxu0 0.0
        %953 = vmatpush1.msra.mxu0 0.0
        %954 = vmatprep.subr.mxu0 0.0
        %955 = vmatpush1.msra.mxu0 0.0
        %956 = vmatprep.subr.mxu0 0.0
        %957 = vmatpush1.msra.mxu0 0.0
        %958 = vmatprep.subr.mxu0 0.0
        %959 = vmatpush1.msra.mxu0 0.0
        %960 = vmatprep.subr.mxu0 0.0
        %961 = vmatpush1.msra.mxu0 0.0
        %962 = vmatprep.subr.mxu0 0.0
        %963 = vmatpush1.msra.mxu0 0.0
        %964 = vmatprep.subr.mxu0 0.0
        %965 = vmatpush1.msra.mxu0 0.0
        %966 = vmatprep.subr.mxu0 0.0
        %967 = vmatpush1.msra.mxu0 0.0
        %968 = vmatprep.subr.mxu0 0.0
        %969 = vmatpush1.msra.mxu0 0.0
        %970 = vmatprep.subr.mxu0 0.0
        %971 = vmatpush1.msra.mxu0 0.0
        %972 = vmatprep.subr.mxu0 0.0
        %973 = vmatpush1.msra.mxu0 0.0
        %974 = vmatprep.subr.mxu0 0.0
        %975 = vmatpush1.msra.mxu0 0.0
        %976 = vmatprep.subr.mxu0 0.0
        %977 = vmatpush1.msra.mxu0 0.0
        %978 = vmatprep.subr.mxu0 0.0
        %979 = vmatpush1.msra.mxu0 0.0
        %980 = vmatprep.subr.mxu0 0.0
        %981 = vmatpush1.msra.mxu0 0.0
        %982 = vmatprep.subr.mxu0 0.0
        %983 = vmatpush1.msra.mxu0 0.0
        %984 = vmatprep.subr.mxu0 0.0
        %985 = vmatpush1.msra.mxu0 0.0
        %986 = vmatprep.subr.mxu0 0.0
        %987 = vmatpush1.msra.mxu0 0.0
        %988 = vmatprep.subr.mxu0 0.0
        %989 = vmatpush1.msra.mxu0 0.0
        %990 = vmatprep.subr.mxu0 0.0
        %991 = vmatpush1.msra.mxu0 0.0
        %992 = vmatprep.subr.mxu0 0.0
        %993 = vmatpush1.msra.mxu0 0.0
        %994 = vmatprep.subr.mxu0 0.0
        %995 = vmatpush1.msra.mxu0 0.0
        %996 = vmatprep.subr.mxu0 0.0
        %997 = vmatpush1.msra.mxu0 0.0
        %998 = vmatprep.subr.mxu0 0.0
        %999 = vmatpush1.msra.mxu0 0.0
        %1000 = vmatprep.mubr.f32.mxu0 0.0
        %1001 = vmatmul.mubr.f32.gmra.mrb[0].mxu0 %v934
        %v1002 = vpop.f32.mrb[0].mxu0
        %v1003 = vadd.f32 0.0, %v1002
        %v1004 = vpop.f32.mrb[0].mxu0
        %1005 = vdwg.mxu0
        %1006 = vrot.lane.b32.xlu0 %v425, 64
        %v1007 = vpop.permute.xlu0 %1006
        %v1010 = vsel %vm452, %v851, 0
        %1012 = vmatprep.subr.mxu0 0.0
        %1013 = vmatpush1.msra.mxu0 %v1007
        %1014 = vmatprep.subr.mxu0 0.0
        %1015 = vmatpush1.msra.mxu0 0.0
        %1016 = vmatprep.subr.mxu0 0.0
        %1017 = vmatpush1.msra.mxu0 0.0
        %1018 = vmatprep.subr.mxu0 0.0
        %1019 = vmatpush1.msra.mxu0 0.0
        %1020 = vmatprep.subr.mxu0 0.0
        %1021 = vmatpush1.msra.mxu0 0.0
        %1022 = vmatprep.subr.mxu0 0.0
        %1023 = vmatpush1.msra.mxu0 0.0
        %1024 = vmatprep.subr.mxu0 0.0
        %1025 = vmatpush1.msra.mxu0 0.0
        %1026 = vmatprep.subr.mxu0 0.0
        %1027 = vmatpush1.msra.mxu0 0.0
        %1028 = vmatprep.subr.mxu0 0.0
        %1029 = vmatpush1.msra.mxu0 0.0
        %1030 = vmatprep.subr.mxu0 0.0
        %1031 = vmatpush1.msra.mxu0 0.0
        %1032 = vmatprep.subr.mxu0 0.0
        %1033 = vmatpush1.msra.mxu0 0.0
        %1034 = vmatprep.subr.mxu0 0.0
        %1035 = vmatpush1.msra.mxu0 0.0
        %1036 = vmatprep.subr.mxu0 0.0
        %1037 = vmatpush1.msra.mxu0 0.0
        %1038 = vmatprep.subr.mxu0 0.0
        %1039 = vmatpush1.msra.mxu0 0.0
        %1040 = vmatprep.subr.mxu0 0.0
        %1041 = vmatpush1.msra.mxu0 0.0
        %1042 = vmatprep.subr.mxu0 0.0
        %1043 = vmatpush1.msra.mxu0 0.0
        %1044 = vmatprep.subr.mxu0 0.0
        %1045 = vmatpush1.msra.mxu0 0.0
        %1046 = vmatprep.subr.mxu0 0.0
        %1047 = vmatpush1.msra.mxu0 0.0
        %1048 = vmatprep.subr.mxu0 0.0
        %1049 = vmatpush1.msra.mxu0 0.0
        %1050 = vmatprep.subr.mxu0 0.0
        %1051 = vmatpush1.msra.mxu0 0.0
        %1052 = vmatprep.subr.mxu0 0.0
        %1053 = vmatpush1.msra.mxu0 0.0
        %1054 = vmatprep.subr.mxu0 0.0
        %1055 = vmatpush1.msra.mxu0 0.0
        %1056 = vmatprep.subr.mxu0 0.0
        %1057 = vmatpush1.msra.mxu0 0.0
        %1058 = vmatprep.subr.mxu0 0.0
        %1059 = vmatpush1.msra.mxu0 0.0
        %1060 = vmatprep.subr.mxu0 0.0
        %1061 = vmatpush1.msra.mxu0 0.0
        %1062 = vmatprep.subr.mxu0 0.0
        %1063 = vmatpush1.msra.mxu0 0.0
        %1064 = vmatprep.subr.mxu0 0.0
        %1065 = vmatpush1.msra.mxu0 0.0
        %1066 = vmatprep.subr.mxu0 0.0
        %1067 = vmatpush1.msra.mxu0 0.0
        %1068 = vmatprep.subr.mxu0 0.0
        %1069 = vmatpush1.msra.mxu0 0.0
        %1070 = vmatprep.subr.mxu0 0.0
        %1071 = vmatpush1.msra.mxu0 0.0
        %1072 = vmatprep.subr.mxu0 0.0
        %1073 = vmatpush1.msra.mxu0 0.0
        %1074 = vmatprep.subr.mxu0 0.0
        %1075 = vmatpush1.msra.mxu0 0.0
        %1076 = vmatprep.mubr.f32.mxu0 0.0
        %1077 = vmatmul.mubr.f32.gmra.mrb[0].mxu0 %v1010
        %v1078 = vpop.f32.mrb[0].mxu0
        %v1079 = vadd.f32 0.0, %v1078
        %v1080 = vpop.f32.mrb[0].mxu0
        %1081 = vdwg.mxu0
        %1082 = vrot.lane.b32.xlu0 %v430, 64
        %v1083 = vpop.permute.xlu0 %1082
        %v1086 = vsel %vm452, %v853, 0
        %1088 = vmatprep.subr.mxu0 0.0
        %1089 = vmatpush1.msra.mxu0 %v1083
        %1090 = vmatprep.subr.mxu0 0.0
        %1091 = vmatpush1.msra.mxu0 0.0
        %1092 = vmatprep.subr.mxu0 0.0
        %1093 = vmatpush1.msra.mxu0 0.0
        %1094 = vmatprep.subr.mxu0 0.0
        %1095 = vmatpush1.msra.mxu0 0.0
        %1096 = vmatprep.subr.mxu0 0.0
        %1097 = vmatpush1.msra.mxu0 0.0
        %1098 = vmatprep.subr.mxu0 0.0
        %1099 = vmatpush1.msra.mxu0 0.0
        %1100 = vmatprep.subr.mxu0 0.0
        %1101 = vmatpush1.msra.mxu0 0.0
        %1102 = vmatprep.subr.mxu0 0.0
        %1103 = vmatpush1.msra.mxu0 0.0
        %1104 = vmatprep.subr.mxu0 0.0
        %1105 = vmatpush1.msra.mxu0 0.0
        %1106 = vmatprep.subr.mxu0 0.0
        %1107 = vmatpush1.msra.mxu0 0.0
        %1108 = vmatprep.subr.mxu0 0.0
        %1109 = vmatpush1.msra.mxu0 0.0
        %1110 = vmatprep.subr.mxu0 0.0
        %1111 = vmatpush1.msra.mxu0 0.0
        %1112 = vmatprep.subr.mxu0 0.0
        %1113 = vmatpush1.msra.mxu0 0.0
        %1114 = vmatprep.subr.mxu0 0.0
        %1115 = vmatpush1.msra.mxu0 0.0
        %1116 = vmatprep.subr.mxu0 0.0
        %1117 = vmatpush1.msra.mxu0 0.0
        %1118 = vmatprep.subr.mxu0 0.0
        %1119 = vmatpush1.msra.mxu0 0.0
        %1120 = vmatprep.subr.mxu0 0.0
        %1121 = vmatpush1.msra.mxu0 0.0
        %1122 = vmatprep.subr.mxu0 0.0
        %1123 = vmatpush1.msra.mxu0 0.0
        %1124 = vmatprep.subr.mxu0 0.0
        %1125 = vmatpush1.msra.mxu0 0.0
        %1126 = vmatprep.subr.mxu0 0.0
        %1127 = vmatpush1.msra.mxu0 0.0
        %1128 = vmatprep.subr.mxu0 0.0
        %1129 = vmatpush1.msra.mxu0 0.0
        %1130 = vmatprep.subr.mxu0 0.0
        %1131 = vmatpush1.msra.mxu0 0.0
        %1132 = vmatprep.subr.mxu0 0.0
        %1133 = vmatpush1.msra.mxu0 0.0
        %1134 = vmatprep.subr.mxu0 0.0
        %1135 = vmatpush1.msra.mxu0 0.0
        %1136 = vmatprep.subr.mxu0 0.0
        %1137 = vmatpush1.msra.mxu0 0.0
        %1138 = vmatprep.subr.mxu0 0.0
        %1139 = vmatpush1.msra.mxu0 0.0
        %1140 = vmatprep.subr.mxu0 0.0
        %1141 = vmatpush1.msra.mxu0 0.0
        %1142 = vmatprep.subr.mxu0 0.0
        %1143 = vmatpush1.msra.mxu0 0.0
        %1144 = vmatprep.subr.mxu0 0.0
        %1145 = vmatpush1.msra.mxu0 0.0
        %1146 = vmatprep.subr.mxu0 0.0
        %1147 = vmatpush1.msra.mxu0 0.0
        %1148 = vmatprep.subr.mxu0 0.0
        %1149 = vmatpush1.msra.mxu0 0.0
        %1150 = vmatprep.subr.mxu0 0.0
        %1151 = vmatpush1.msra.mxu0 0.0
        %1152 = vmatprep.mubr.f32.mxu0 0.0
        %1153 = vmatmul.mubr.f32.gmra.mrb[0].mxu0 %v1086
        %v1154 = vpop.f32.mrb[0].mxu0
        %v1155 = vadd.f32 0.0, %v1154
        %v1156 = vpop.f32.mrb[0].mxu0
        %1157 = vdwg.mxu0
        %v1158 = vld [vmem:[#allocation7] sm:$0xff]
        %1159 = vrot.lane.b32.xlu0 %v415, 120
        %v1160 = vpop.permute.xlu0 %1159
        %1161 = vrot.lane.b32.xlu0 %v415, 88
        %v1162 = vpop.permute.xlu0 %1161
        %v1163 = vsel %vm452, %v1160, 0
        %v1165 = vsel %vm452, %v1162, 0
        %1167 = vmatprep.subr.mxu0 0.0
        %1168 = vmatpush1.xpose.msra.mxu0 %v1165
        %1169 = vmatprep.subr.mxu0 0.0
        %1170 = vmatpush1.xpose.msra.mxu0 0.0
        %1171 = vmatprep.subr.mxu0 0.0
        %1172 = vmatpush1.xpose.msra.mxu0 0.0
        %1173 = vmatprep.subr.mxu0 0.0
        %1174 = vmatpush1.xpose.msra.mxu0 0.0
        %1175 = vmatprep.subr.mxu0 0.0
        %1176 = vmatpush1.xpose.msra.mxu0 0.0
        %1177 = vmatprep.subr.mxu0 0.0
        %1178 = vmatpush1.xpose.msra.mxu0 0.0
        %1179 = vmatprep.subr.mxu0 0.0
        %1180 = vmatpush1.xpose.msra.mxu0 0.0
        %1181 = vmatprep.subr.mxu0 0.0
        %1182 = vmatpush1.xpose.msra.mxu0 0.0
        %1183 = vmatprep.subr.mxu0 0.0
        %1184 = vmatpush1.xpose.msra.mxu0 0.0
        %1185 = vmatprep.subr.mxu0 0.0
        %1186 = vmatpush1.xpose.msra.mxu0 0.0
        %1187 = vmatprep.subr.mxu0 0.0
        %1188 = vmatpush1.xpose.msra.mxu0 0.0
        %1189 = vmatprep.subr.mxu0 0.0
        %1190 = vmatpush1.xpose.msra.mxu0 0.0
        %1191 = vmatprep.subr.mxu0 0.0
        %1192 = vmatpush1.xpose.msra.mxu0 0.0
        %1193 = vmatprep.subr.mxu0 0.0
        %1194 = vmatpush1.xpose.msra.mxu0 0.0
        %1195 = vmatprep.subr.mxu0 0.0
        %1196 = vmatpush1.xpose.msra.mxu0 0.0
        %1197 = vmatprep.subr.mxu0 0.0
        %1198 = vmatpush1.xpose.msra.mxu0 0.0
        %1199 = vmatprep.subr.mxu0 0.0
        %1200 = vmatpush1.xpose.msra.mxu0 0.0
        %1201 = vmatprep.subr.mxu0 0.0
        %1202 = vmatpush1.xpose.msra.mxu0 0.0
        %1203 = vmatprep.subr.mxu0 0.0
        %1204 = vmatpush1.xpose.msra.mxu0 0.0
        %1205 = vmatprep.subr.mxu0 0.0
        %1206 = vmatpush1.xpose.msra.mxu0 0.0
        %1207 = vmatprep.subr.mxu0 0.0
        %1208 = vmatpush1.xpose.msra.mxu0 0.0
        %1209 = vmatprep.subr.mxu0 0.0
        %1210 = vmatpush1.xpose.msra.mxu0 0.0
        %1211 = vmatprep.subr.mxu0 0.0
        %1212 = vmatpush1.xpose.msra.mxu0 0.0
        %1213 = vmatprep.subr.mxu0 0.0
        %1214 = vmatpush1.xpose.msra.mxu0 0.0
        %1215 = vmatprep.subr.mxu0 0.0
        %1216 = vmatpush1.xpose.msra.mxu0 0.0
        %1217 = vmatprep.subr.mxu0 0.0
        %1218 = vmatpush1.xpose.msra.mxu0 0.0
        %1219 = vmatprep.subr.mxu0 0.0
        %1220 = vmatpush1.xpose.msra.mxu0 0.0
        %1221 = vmatprep.subr.mxu0 0.0
        %1222 = vmatpush1.xpose.msra.mxu0 0.0
        %1223 = vmatprep.subr.mxu0 0.0
        %1224 = vmatpush1.xpose.msra.mxu0 0.0
        %1225 = vmatprep.subr.mxu0 0.0
        %1226 = vmatpush1.xpose.msra.mxu0 0.0
        %1227 = vmatprep.subr.mxu0 0.0
        %1228 = vmatpush1.xpose.msra.mxu0 0.0
        %1229 = vmatprep.subr.mxu0 0.0
        %1230 = vmatpush1.xpose.msra.mxu0 0.0
        %1231 = vmatprep.mubr.f32.mxu0 0.0
        %1232 = vmatmul.mubr.f32.gmra.mrb[0].mxu0 %v1163
        %v1233 = vpop.f32.mrb[0].mxu0
        %v1234 = vadd.f32 0.0, %v1233
        %v1235 = vpop.f32.mrb[0].mxu0
        %1236 = vdwg.mxu0
        %1237 = vrot.lane.b32.xlu0 %v420, 120
        %v1238 = vpop.permute.xlu0 %1237
        %1239 = vrot.lane.b32.xlu0 %v420, 88
        %v1240 = vpop.permute.xlu0 %1239
        %v1241 = vsel %vm452, %v1238, 0
        %v1243 = vsel %vm452, %v1240, 0
        %1245 = vmatprep.subr.mxu0 0.0
        %1246 = vmatpush1.xpose.msra.mxu0 %v1243
        %1247 = vmatprep.subr.mxu0 0.0
        %1248 = vmatpush1.xpose.msra.mxu0 0.0
        %1249 = vmatprep.subr.mxu0 0.0
        %1250 = vmatpush1.xpose.msra.mxu0 0.0
        %1251 = vmatprep.subr.mxu0 0.0
        %1252 = vmatpush1.xpose.msra.mxu0 0.0
        %1253 = vmatprep.subr.mxu0 0.0
        %1254 = vmatpush1.xpose.msra.mxu0 0.0
        %1255 = vmatprep.subr.mxu0 0.0
        %1256 = vmatpush1.xpose.msra.mxu0 0.0
        %1257 = vmatprep.subr.mxu0 0.0
        %1258 = vmatpush1.xpose.msra.mxu0 0.0
        %1259 = vmatprep.subr.mxu0 0.0
        %1260 = vmatpush1.xpose.msra.mxu0 0.0
        %1261 = vmatprep.subr.mxu0 0.0
        %1262 = vmatpush1.xpose.msra.mxu0 0.0
        %1263 = vmatprep.subr.mxu0 0.0
        %1264 = vmatpush1.xpose.msra.mxu0 0.0
        %1265 = vmatprep.subr.mxu0 0.0
        %1266 = vmatpush1.xpose.msra.mxu0 0.0
        %1267 = vmatprep.subr.mxu0 0.0
        %1268 = vmatpush1.xpose.msra.mxu0 0.0
        %1269 = vmatprep.subr.mxu0 0.0
        %1270 = vmatpush1.xpose.msra.mxu0 0.0
        %1271 = vmatprep.subr.mxu0 0.0
        %1272 = vmatpush1.xpose.msra.mxu0 0.0
        %1273 = vmatprep.subr.mxu0 0.0
        %1274 = vmatpush1.xpose.msra.mxu0 0.0
        %1275 = vmatprep.subr.mxu0 0.0
        %1276 = vmatpush1.xpose.msra.mxu0 0.0
        %1277 = vmatprep.subr.mxu0 0.0
        %1278 = vmatpush1.xpose.msra.mxu0 0.0
        %1279 = vmatprep.subr.mxu0 0.0
        %1280 = vmatpush1.xpose.msra.mxu0 0.0
        %1281 = vmatprep.subr.mxu0 0.0
        %1282 = vmatpush1.xpose.msra.mxu0 0.0
        %1283 = vmatprep.subr.mxu0 0.0
        %1284 = vmatpush1.xpose.msra.mxu0 0.0
        %1285 = vmatprep.subr.mxu0 0.0
        %1286 = vmatpush1.xpose.msra.mxu0 0.0
        %1287 = vmatprep.subr.mxu0 0.0
        %1288 = vmatpush1.xpose.msra.mxu0 0.0
        %1289 = vmatprep.subr.mxu0 0.0
        %1290 = vmatpush1.xpose.msra.mxu0 0.0
        %1291 = vmatprep.subr.mxu0 0.0
        %1292 = vmatpush1.xpose.msra.mxu0 0.0
        %1293 = vmatprep.subr.mxu0 0.0
        %1294 = vmatpush1.xpose.msra.mxu0 0.0
        %1295 = vmatprep.subr.mxu0 0.0
        %1296 = vmatpush1.xpose.msra.mxu0 0.0
        %1297 = vmatprep.subr.mxu0 0.0
        %1298 = vmatpush1.xpose.msra.mxu0 0.0
        %1299 = vmatprep.subr.mxu0 0.0
        %1300 = vmatpush1.xpose.msra.mxu0 0.0
        %1301 = vmatprep.subr.mxu0 0.0
        %1302 = vmatpush1.xpose.msra.mxu0 0.0
        %1303 = vmatprep.subr.mxu0 0.0
        %1304 = vmatpush1.xpose.msra.mxu0 0.0
        %1305 = vmatprep.subr.mxu0 0.0
        %1306 = vmatpush1.xpose.msra.mxu0 0.0
        %1307 = vmatprep.subr.mxu0 0.0
        %1308 = vmatpush1.xpose.msra.mxu0 0.0
        %1309 = vmatprep.mubr.f32.mxu0 0.0
        %1310 = vmatmul.mubr.f32.gmra.mrb[0].mxu0 %v1241
        %v1311 = vpop.f32.mrb[0].mxu0
        %v1312 = vadd.f32 0.0, %v1311
        %v1313 = vpop.f32.mrb[0].mxu0
        %1314 = vdwg.mxu0
        %1315 = vrot.lane.b32.xlu0 %v425, 120
        %v1316 = vpop.permute.xlu0 %1315
        %1317 = vrot.lane.b32.xlu0 %v425, 88
        %v1318 = vpop.permute.xlu0 %1317
        %v1319 = vsel %vm452, %v1316, 0
        %v1321 = vsel %vm452, %v1318, 0
        %1323 = vmatprep.subr.mxu0 0.0
        %1324 = vmatpush1.xpose.msra.mxu0 %v1321
        %1325 = vmatprep.subr.mxu0 0.0
        %1326 = vmatpush1.xpose.msra.mxu0 0.0
        %1327 = vmatprep.subr.mxu0 0.0
        %1328 = vmatpush1.xpose.msra.mxu0 0.0
        %1329 = vmatprep.subr.mxu0 0.0
        %1330 = vmatpush1.xpose.msra.mxu0 0.0
        %1331 = vmatprep.subr.mxu0 0.0
        %1332 = vmatpush1.xpose.msra.mxu0 0.0
        %1333 = vmatprep.subr.mxu0 0.0
        %1334 = vmatpush1.xpose.msra.mxu0 0.0
        %1335 = vmatprep.subr.mxu0 0.0
        %1336 = vmatpush1.xpose.msra.mxu0 0.0
        %1337 = vmatprep.subr.mxu0 0.0
        %1338 = vmatpush1.xpose.msra.mxu0 0.0
        %1339 = vmatprep.subr.mxu0 0.0
        %1340 = vmatpush1.xpose.msra.mxu0 0.0
        %1341 = vmatprep.subr.mxu0 0.0
        %1342 = vmatpush1.xpose.msra.mxu0 0.0
        %1343 = vmatprep.subr.mxu0 0.0
        %1344 = vmatpush1.xpose.msra.mxu0 0.0
        %1345 = vmatprep.subr.mxu0 0.0
        %1346 = vmatpush1.xpose.msra.mxu0 0.0
        %1347 = vmatprep.subr.mxu0 0.0
        %1348 = vmatpush1.xpose.msra.mxu0 0.0
        %1349 = vmatprep.subr.mxu0 0.0
        %1350 = vmatpush1.xpose.msra.mxu0 0.0
        %1351 = vmatprep.subr.mxu0 0.0
        %1352 = vmatpush1.xpose.msra.mxu0 0.0
        %1353 = vmatprep.subr.mxu0 0.0
        %1354 = vmatpush1.xpose.msra.mxu0 0.0
        %1355 = vmatprep.subr.mxu0 0.0
        %1356 = vmatpush1.xpose.msra.mxu0 0.0
        %1357 = vmatprep.subr.mxu0 0.0
        %1358 = vmatpush1.xpose.msra.mxu0 0.0
        %1359 = vmatprep.subr.mxu0 0.0
        %1360 = vmatpush1.xpose.msra.mxu0 0.0
        %1361 = vmatprep.subr.mxu0 0.0
        %1362 = vmatpush1.xpose.msra.mxu0 0.0
        %1363 = vmatprep.subr.mxu0 0.0
        %1364 = vmatpush1.xpose.msra.mxu0 0.0
        %1365 = vmatprep.subr.mxu0 0.0
        %1366 = vmatpush1.xpose.msra.mxu0 0.0
        %1367 = vmatprep.subr.mxu0 0.0
        %1368 = vmatpush1.xpose.msra.mxu0 0.0
        %1369 = vmatprep.subr.mxu0 0.0
        %1370 = vmatpush1.xpose.msra.mxu0 0.0
        %1371 = vmatprep.subr.mxu0 0.0
        %1372 = vmatpush1.xpose.msra.mxu0 0.0
        %1373 = vmatprep.subr.mxu0 0.0
        %1374 = vmatpush1.xpose.msra.mxu0 0.0
        %1375 = vmatprep.subr.mxu0 0.0
        %1376 = vmatpush1.xpose.msra.mxu0 0.0
        %1377 = vmatprep.subr.mxu0 0.0
        %1378 = vmatpush1.xpose.msra.mxu0 0.0
        %1379 = vmatprep.subr.mxu0 0.0
        %1380 = vmatpush1.xpose.msra.mxu0 0.0
        %1381 = vmatprep.subr.mxu0 0.0
        %1382 = vmatpush1.xpose.msra.mxu0 0.0
        %1383 = vmatprep.subr.mxu0 0.0
        %1384 = vmatpush1.xpose.msra.mxu0 0.0
        %1385 = vmatprep.subr.mxu0 0.0
        %1386 = vmatpush1.xpose.msra.mxu0 0.0
        %1387 = vmatprep.mubr.f32.mxu0 0.0
        %1388 = vmatmul.mubr.f32.gmra.mrb[0].mxu0 %v1319
        %v1389 = vpop.f32.mrb[0].mxu0
        %v1390 = vadd.f32 0.0, %v1389
        %v1391 = vpop.f32.mrb[0].mxu0
        %1392 = vdwg.mxu0
        %1393 = vrot.lane.b32.xlu0 %v430, 120
        %v1394 = vpop.permute.xlu0 %1393
        %1395 = vrot.lane.b32.xlu0 %v430, 88
        %v1396 = vpop.permute.xlu0 %1395
        %v1397 = vsel %vm452, %v1394, 0
        %v1399 = vsel %vm452, %v1396, 0
        %1401 = vmatprep.subr.mxu0 0.0
        %1402 = vmatpush1.xpose.msra.mxu0 %v1399
        %1403 = vmatprep.subr.mxu0 0.0
        %1404 = vmatpush1.xpose.msra.mxu0 0.0
        %1405 = vmatprep.subr.mxu0 0.0
        %1406 = vmatpush1.xpose.msra.mxu0 0.0
        %1407 = vmatprep.subr.mxu0 0.0
        %1408 = vmatpush1.xpose.msra.mxu0 0.0
        %1409 = vmatprep.subr.mxu0 0.0
        %1410 = vmatpush1.xpose.msra.mxu0 0.0
        %1411 = vmatprep.subr.mxu0 0.0
        %1412 = vmatpush1.xpose.msra.mxu0 0.0
        %1413 = vmatprep.subr.mxu0 0.0
        %1414 = vmatpush1.xpose.msra.mxu0 0.0
        %1415 = vmatprep.subr.mxu0 0.0
        %1416 = vmatpush1.xpose.msra.mxu0 0.0
        %1417 = vmatprep.subr.mxu0 0.0
        %1418 = vmatpush1.xpose.msra.mxu0 0.0
        %1419 = vmatprep.subr.mxu0 0.0
        %1420 = vmatpush1.xpose.msra.mxu0 0.0
        %1421 = vmatprep.subr.mxu0 0.0
        %1422 = vmatpush1.xpose.msra.mxu0 0.0
        %1423 = vmatprep.subr.mxu0 0.0
        %1424 = vmatpush1.xpose.msra.mxu0 0.0
        %1425 = vmatprep.subr.mxu0 0.0
        %1426 = vmatpush1.xpose.msra.mxu0 0.0
        %1427 = vmatprep.subr.mxu0 0.0
        %1428 = vmatpush1.xpose.msra.mxu0 0.0
        %1429 = vmatprep.subr.mxu0 0.0
        %1430 = vmatpush1.xpose.msra.mxu0 0.0
        %1431 = vmatprep.subr.mxu0 0.0
        %1432 = vmatpush1.xpose.msra.mxu0 0.0
        %1433 = vmatprep.subr.mxu0 0.0
        %1434 = vmatpush1.xpose.msra.mxu0 0.0
        %1435 = vmatprep.subr.mxu0 0.0
        %1436 = vmatpush1.xpose.msra.mxu0 0.0
        %1437 = vmatprep.subr.mxu0 0.0
        %1438 = vmatpush1.xpose.msra.mxu0 0.0
        %1439 = vmatprep.subr.mxu0 0.0
        %1440 = vmatpush1.xpose.msra.mxu0 0.0
        %1441 = vmatprep.subr.mxu0 0.0
        %1442 = vmatpush1.xpose.msra.mxu0 0.0
        %1443 = vmatprep.subr.mxu0 0.0
        %1444 = vmatpush1.xpose.msra.mxu0 0.0
        %1445 = vmatprep.subr.mxu0 0.0
        %1446 = vmatpush1.xpose.msra.mxu0 0.0
        %1447 = vmatprep.subr.mxu0 0.0
        %1448 = vmatpush1.xpose.msra.mxu0 0.0
        %1449 = vmatprep.subr.mxu0 0.0
        %1450 = vmatpush1.xpose.msra.mxu0 0.0
        %1451 = vmatprep.subr.mxu0 0.0
        %1452 = vmatpush1.xpose.msra.mxu0 0.0
        %1453 = vmatprep.subr.mxu0 0.0
        %1454 = vmatpush1.xpose.msra.mxu0 0.0
        %1455 = vmatprep.subr.mxu0 0.0
        %1456 = vmatpush1.xpose.msra.mxu0 0.0
        %1457 = vmatprep.subr.mxu0 0.0
        %1458 = vmatpush1.xpose.msra.mxu0 0.0
        %1459 = vmatprep.subr.mxu0 0.0
        %1460 = vmatpush1.xpose.msra.mxu0 0.0
        %1461 = vmatprep.subr.mxu0 0.0
        %1462 = vmatpush1.xpose.msra.mxu0 0.0
        %1463 = vmatprep.subr.mxu0 0.0
        %1464 = vmatpush1.xpose.msra.mxu0 0.0
        %1465 = vmatprep.mubr.f32.mxu0 0.0
        %1466 = vmatmul.mubr.f32.gmra.mrb[0].mxu0 %v1397
        %v1467 = vpop.f32.mrb[0].mxu0
        %v1468 = vadd.f32 0.0, %v1467
        %v1469 = vpop.f32.mrb[0].mxu0
        %1470 = vdwg.mxu0
        %v1471 = vsel %vm452, %v1234, -inf
        %1472 = vmax.xlane.f32.xlu0 %v1471
        %v1473 = vpop.xlane.xlu0 %1472
        %v1474 = vsel %vm452, %v1312, -inf
        %1475 = vmax.xlane.f32.xlu0 %v1474
        %v1476 = vpop.xlane.xlu0 %1475
        %v1477 = vsel %vm452, %v1390, -inf
        %1478 = vmax.xlane.f32.xlu0 %v1477
        %v1479 = vpop.xlane.xlu0 %1478
        %v1480 = vsel %vm452, %v1468, -inf
        %1481 = vmax.xlane.f32.xlu0 %v1480
        %v1482 = vpop.xlane.xlu0 %1481
        %v1483 = vsub.f32 %v1234, %v1473
        %v1484 = vsub.f32 %v1312, %v1476
        %v1485 = vsub.f32 %v1390, %v1479
        %v1486 = vsub.f32 %v1468, %v1482
        %v1487 = vmul.f32 %v1483, 1.442695
        %v1488 = vpow.pop %v1487
        %v1489 = vmul.f32 %v1484, 1.442695
        %v1490 = vpow.pop %v1489
        %v1491 = vmul.f32 %v1485, 1.442695
        %v1492 = vpow.pop %v1491
        %v1493 = vmul.f32 %v1486, 1.442695
        %v1494 = vpow.pop %v1493
        %v1495 = vsel %vm452, %v1488, 0.0
        %1496 = vadd.xlane.f32.xlu0 %v1495
        %v1497 = vpop.xlane.xlu0 %1496
        %v1498 = vsel %vm452, %v1490, 0.0
        %1499 = vadd.xlane.f32.xlu0 %v1498
        %v1500 = vpop.xlane.xlu0 %1499
        %v1501 = vsel %vm452, %v1492, 0.0
        %1502 = vadd.xlane.f32.xlu0 %v1501
        %v1503 = vpop.xlane.xlu0 %1502
        %v1504 = vsel %vm452, %v1494, 0.0
        %1505 = vadd.xlane.f32.xlu0 %v1504
        %v1506 = vpop.xlane.xlu0 %1505
        %v1507 = vrcp.pop %v1497
        %v1508 = vmul.f32 %v1488, %v1507
        %v1509 = vrcp.pop %v1500
        %v1510 = vmul.f32 %v1490, %v1509
        %v1511 = vrcp.pop %v1503
        %v1512 = vmul.f32 %v1492, %v1511
        %v1513 = vrcp.pop %v1506
        %v1514 = vmul.f32 %v1494, %v1513
        %v1515 = vmul.f32 %v1508, %v809
        %v1516 = vmul.f32 %v1510, %v813
        %v1517 = vmul.f32 %v1512, %v817
        %v1518 = vmul.f32 %v1514, %v821
        %v1519 = vsel %vm452, %v1515, 0.0
        %1520 = vadd.xlane.f32.xlu0 %v1519
        %v1521 = vpop.xlane.xlu0 %1520
        %v1522 = vsel %vm452, %v1516, 0.0
        %1523 = vadd.xlane.f32.xlu0 %v1522
        %v1524 = vpop.xlane.xlu0 %1523
        %v1525 = vsel %vm452, %v1517, 0.0
        %1526 = vadd.xlane.f32.xlu0 %v1525
        %v1527 = vpop.xlane.xlu0 %1526
        %v1528 = vsel %vm452, %v1518, 0.0
        %1529 = vadd.xlane.f32.xlu0 %v1528
        %v1530 = vpop.xlane.xlu0 %1529
        %v1531 = vadd.f32 %v1521, 1e-09
        %v1532 = vadd.f32 %v1524, 1e-09
        %v1533 = vadd.f32 %v1527, 1e-09
        %v1534 = vadd.f32 %v1530, 1e-09
        %v1535 = vrcp.pop %v1531
        %v1536 = vmul.f32 %v1515, %v1535
        %v1537 = vrcp.pop %v1532
        %v1538 = vmul.f32 %v1516, %v1537
        %v1539 = vrcp.pop %v1533
        %v1540 = vmul.f32 %v1517, %v1539
        %v1541 = vrcp.pop %v1534
        %v1542 = vmul.f32 %v1518, %v1541
        %1543 = vrot.lane.b32.xlu0 %v415, 56
        %v1544 = vpop.permute.xlu0 %1543
        %v1547 = vsel %vm452, %v1536, 0
        %1549 = vmatprep.subr.mxu0 0.0
        %1550 = vmatpush1.msra.mxu0 %v1544
        %1551 = vmatprep.subr.mxu0 0.0
        %1552 = vmatpush1.msra.mxu0 0.0
        %1553 = vmatprep.subr.mxu0 0.0
        %1554 = vmatpush1.msra.mxu0 0.0
        %1555 = vmatprep.subr.mxu0 0.0
        %1556 = vmatpush1.msra.mxu0 0.0
        %1557 = vmatprep.subr.mxu0 0.0
        %1558 = vmatpush1.msra.mxu0 0.0
        %1559 = vmatprep.subr.mxu0 0.0
        %1560 = vmatpush1.msra.mxu0 0.0
        %1561 = vmatprep.subr.mxu0 0.0
        %1562 = vmatpush1.msra.mxu0 0.0
        %1563 = vmatprep.subr.mxu0 0.0
        %1564 = vmatpush1.msra.mxu0 0.0
        %1565 = vmatprep.subr.mxu0 0.0
        %1566 = vmatpush1.msra.mxu0 0.0
        %1567 = vmatprep.subr.mxu0 0.0
        %1568 = vmatpush1.msra.mxu0 0.0
        %1569 = vmatprep.subr.mxu0 0.0
        %1570 = vmatpush1.msra.mxu0 0.0
        %1571 = vmatprep.subr.mxu0 0.0
        %1572 = vmatpush1.msra.mxu0 0.0
        %1573 = vmatprep.subr.mxu0 0.0
        %1574 = vmatpush1.msra.mxu0 0.0
        %1575 = vmatprep.subr.mxu0 0.0
        %1576 = vmatpush1.msra.mxu0 0.0
        %1577 = vmatprep.subr.mxu0 0.0
        %1578 = vmatpush1.msra.mxu0 0.0
        %1579 = vmatprep.subr.mxu0 0.0
        %1580 = vmatpush1.msra.mxu0 0.0
        %1581 = vmatprep.subr.mxu0 0.0
        %1582 = vmatpush1.msra.mxu0 0.0
        %1583 = vmatprep.subr.mxu0 0.0
        %1584 = vmatpush1.msra.mxu0 0.0
        %1585 = vmatprep.subr.mxu0 0.0
        %1586 = vmatpush1.msra.mxu0 0.0
        %1587 = vmatprep.subr.mxu0 0.0
        %1588 = vmatpush1.msra.mxu0 0.0
        %1589 = vmatprep.subr.mxu0 0.0
        %1590 = vmatpush1.msra.mxu0 0.0
        %1591 = vmatprep.subr.mxu0 0.0
        %1592 = vmatpush1.msra.mxu0 0.0
        %1593 = vmatprep.subr.mxu0 0.0
        %1594 = vmatpush1.msra.mxu0 0.0
        %1595 = vmatprep.subr.mxu0 0.0
        %1596 = vmatpush1.msra.mxu0 0.0
        %1597 = vmatprep.subr.mxu0 0.0
        %1598 = vmatpush1.msra.mxu0 0.0
        %1599 = vmatprep.subr.mxu0 0.0
        %1600 = vmatpush1.msra.mxu0 0.0
        %1601 = vmatprep.subr.mxu0 0.0
        %1602 = vmatpush1.msra.mxu0 0.0
        %1603 = vmatprep.subr.mxu0 0.0
        %1604 = vmatpush1.msra.mxu0 0.0
        %1605 = vmatprep.subr.mxu0 0.0
        %1606 = vmatpush1.msra.mxu0 0.0
        %1607 = vmatprep.subr.mxu0 0.0
        %1608 = vmatpush1.msra.mxu0 0.0
        %1609 = vmatprep.subr.mxu0 0.0
        %1610 = vmatpush1.msra.mxu0 0.0
        %1611 = vmatprep.subr.mxu0 0.0
        %1612 = vmatpush1.msra.mxu0 0.0
        %1613 = vmatprep.mubr.f32.mxu0 0.0
        %1614 = vmatmul.mubr.f32.gmra.mrb[0].mxu0 %v1547
        %v1615 = vpop.f32.mrb[0].mxu0
        %v1616 = vadd.f32 0.0, %v1615
        %v1617 = vpop.f32.mrb[0].mxu0
        %1618 = vdwg.mxu0
        %1619 = vrot.lane.b32.xlu0 %v420, 56
        %v1620 = vpop.permute.xlu0 %1619
        %v1623 = vsel %vm452, %v1538, 0
        %1625 = vmatprep.subr.mxu0 0.0
        %1626 = vmatpush1.msra.mxu0 %v1620
        %1627 = vmatprep.subr.mxu0 0.0
        %1628 = vmatpush1.msra.mxu0 0.0
        %1629 = vmatprep.subr.mxu0 0.0
        %1630 = vmatpush1.msra.mxu0 0.0
        %1631 = vmatprep.subr.mxu0 0.0
        %1632 = vmatpush1.msra.mxu0 0.0
        %1633 = vmatprep.subr.mxu0 0.0
        %1634 = vmatpush1.msra.mxu0 0.0
        %1635 = vmatprep.subr.mxu0 0.0
        %1636 = vmatpush1.msra.mxu0 0.0
        %1637 = vmatprep.subr.mxu0 0.0
        %1638 = vmatpush1.msra.mxu0 0.0
        %1639 = vmatprep.subr.mxu0 0.0
        %1640 = vmatpush1.msra.mxu0 0.0
        %1641 = vmatprep.subr.mxu0 0.0
        %1642 = vmatpush1.msra.mxu0 0.0
        %1643 = vmatprep.subr.mxu0 0.0
        %1644 = vmatpush1.msra.mxu0 0.0
        %1645 = vmatprep.subr.mxu0 0.0
        %1646 = vmatpush1.msra.mxu0 0.0
        %1647 = vmatprep.subr.mxu0 0.0
        %1648 = vmatpush1.msra.mxu0 0.0
        %1649 = vmatprep.subr.mxu0 0.0
        %1650 = vmatpush1.msra.mxu0 0.0
        %1651 = vmatprep.subr.mxu0 0.0
        %1652 = vmatpush1.msra.mxu0 0.0
        %1653 = vmatprep.subr.mxu0 0.0
        %1654 = vmatpush1.msra.mxu0 0.0
        %1655 = vmatprep.subr.mxu0 0.0
        %1656 = vmatpush1.msra.mxu0 0.0
        %1657 = vmatprep.subr.mxu0 0.0
        %1658 = vmatpush1.msra.mxu0 0.0
        %1659 = vmatprep.subr.mxu0 0.0
        %1660 = vmatpush1.msra.mxu0 0.0
        %1661 = vmatprep.subr.mxu0 0.0
        %1662 = vmatpush1.msra.mxu0 0.0
        %1663 = vmatprep.subr.mxu0 0.0
        %1664 = vmatpush1.msra.mxu0 0.0
        %1665 = vmatprep.subr.mxu0 0.0
        %1666 = vmatpush1.msra.mxu0 0.0
        %1667 = vmatprep.subr.mxu0 0.0
        %1668 = vmatpush1.msra.mxu0 0.0
        %1669 = vmatprep.subr.mxu0 0.0
        %1670 = vmatpush1.msra.mxu0 0.0
        %1671 = vmatprep.subr.mxu0 0.0
        %1672 = vmatpush1.msra.mxu0 0.0
        %1673 = vmatprep.subr.mxu0 0.0
        %1674 = vmatpush1.msra.mxu0 0.0
        %1675 = vmatprep.subr.mxu0 0.0
        %1676 = vmatpush1.msra.mxu0 0.0
        %1677 = vmatprep.subr.mxu0 0.0
        %1678 = vmatpush1.msra.mxu0 0.0
        %1679 = vmatprep.subr.mxu0 0.0
        %1680 = vmatpush1.msra.mxu0 0.0
        %1681 = vmatprep.subr.mxu0 0.0
        %1682 = vmatpush1.msra.mxu0 0.0
        %1683 = vmatprep.subr.mxu0 0.0
        %1684 = vmatpush1.msra.mxu0 0.0
        %1685 = vmatprep.subr.mxu0 0.0
        %1686 = vmatpush1.msra.mxu0 0.0
        %1687 = vmatprep.subr.mxu0 0.0
        %1688 = vmatpush1.msra.mxu0 0.0
        %1689 = vmatprep.mubr.f32.mxu0 0.0
        %1690 = vmatmul.mubr.f32.gmra.mrb[0].mxu0 %v1623
        %v1691 = vpop.f32.mrb[0].mxu0
        %v1692 = vadd.f32 0.0, %v1691
        %v1693 = vpop.f32.mrb[0].mxu0
        %1694 = vdwg.mxu0
        %1695 = vrot.lane.b32.xlu0 %v425, 56
        %v1696 = vpop.permute.xlu0 %1695
        %v1699 = vsel %vm452, %v1540, 0
        %1701 = vmatprep.subr.mxu0 0.0
        %1702 = vmatpush1.msra.mxu0 %v1696
        %1703 = vmatprep.subr.mxu0 0.0
        %1704 = vmatpush1.msra.mxu0 0.0
        %1705 = vmatprep.subr.mxu0 0.0
        %1706 = vmatpush1.msra.mxu0 0.0
        %1707 = vmatprep.subr.mxu0 0.0
        %1708 = vmatpush1.msra.mxu0 0.0
        %1709 = vmatprep.subr.mxu0 0.0
        %1710 = vmatpush1.msra.mxu0 0.0
        %1711 = vmatprep.subr.mxu0 0.0
        %1712 = vmatpush1.msra.mxu0 0.0
        %1713 = vmatprep.subr.mxu0 0.0
        %1714 = vmatpush1.msra.mxu0 0.0
        %1715 = vmatprep.subr.mxu0 0.0
        %1716 = vmatpush1.msra.mxu0 0.0
        %1717 = vmatprep.subr.mxu0 0.0
        %1718 = vmatpush1.msra.mxu0 0.0
        %1719 = vmatprep.subr.mxu0 0.0
        %1720 = vmatpush1.msra.mxu0 0.0
        %1721 = vmatprep.subr.mxu0 0.0
        %1722 = vmatpush1.msra.mxu0 0.0
        %1723 = vmatprep.subr.mxu0 0.0
        %1724 = vmatpush1.msra.mxu0 0.0
        %1725 = vmatprep.subr.mxu0 0.0
        %1726 = vmatpush1.msra.mxu0 0.0
        %1727 = vmatprep.subr.mxu0 0.0
        %1728 = vmatpush1.msra.mxu0 0.0
        %1729 = vmatprep.subr.mxu0 0.0
        %1730 = vmatpush1.msra.mxu0 0.0
        %1731 = vmatprep.subr.mxu0 0.0
        %1732 = vmatpush1.msra.mxu0 0.0
        %1733 = vmatprep.subr.mxu0 0.0
        %1734 = vmatpush1.msra.mxu0 0.0
        %1735 = vmatprep.subr.mxu0 0.0
        %1736 = vmatpush1.msra.mxu0 0.0
        %1737 = vmatprep.subr.mxu0 0.0
        %1738 = vmatpush1.msra.mxu0 0.0
        %1739 = vmatprep.subr.mxu0 0.0
        %1740 = vmatpush1.msra.mxu0 0.0
        %1741 = vmatprep.subr.mxu0 0.0
        %1742 = vmatpush1.msra.mxu0 0.0
        %1743 = vmatprep.subr.mxu0 0.0
        %1744 = vmatpush1.msra.mxu0 0.0
        %1745 = vmatprep.subr.mxu0 0.0
        %1746 = vmatpush1.msra.mxu0 0.0
        %1747 = vmatprep.subr.mxu0 0.0
        %1748 = vmatpush1.msra.mxu0 0.0
        %1749 = vmatprep.subr.mxu0 0.0
        %1750 = vmatpush1.msra.mxu0 0.0
        %1751 = vmatprep.subr.mxu0 0.0
        %1752 = vmatpush1.msra.mxu0 0.0
        %1753 = vmatprep.subr.mxu0 0.0
        %1754 = vmatpush1.msra.mxu0 0.0
        %1755 = vmatprep.subr.mxu0 0.0
        %1756 = vmatpush1.msra.mxu0 0.0
        %1757 = vmatprep.subr.mxu0 0.0
        %1758 = vmatpush1.msra.mxu0 0.0
        %1759 = vmatprep.subr.mxu0 0.0
        %1760 = vmatpush1.msra.mxu0 0.0
        %1761 = vmatprep.subr.mxu0 0.0
        %1762 = vmatpush1.msra.mxu0 0.0
        %1763 = vmatprep.subr.mxu0 0.0
        %1764 = vmatpush1.msra.mxu0 0.0
        %1765 = vmatprep.mubr.f32.mxu0 0.0
        %1766 = vmatmul.mubr.f32.gmra.mrb[0].mxu0 %v1699
        %v1767 = vpop.f32.mrb[0].mxu0
        %v1768 = vadd.f32 0.0, %v1767
        %v1769 = vpop.f32.mrb[0].mxu0
        %1770 = vdwg.mxu0
        %1771 = vrot.lane.b32.xlu0 %v430, 56
        %v1772 = vpop.permute.xlu0 %1771
        %v1775 = vsel %vm452, %v1542, 0
        %1777 = vmatprep.subr.mxu0 0.0
        %1778 = vmatpush1.msra.mxu0 %v1772
        %1779 = vmatprep.subr.mxu0 0.0
        %1780 = vmatpush1.msra.mxu0 0.0
        %1781 = vmatprep.subr.mxu0 0.0
        %1782 = vmatpush1.msra.mxu0 0.0
        %1783 = vmatprep.subr.mxu0 0.0
        %1784 = vmatpush1.msra.mxu0 0.0
        %1785 = vmatprep.subr.mxu0 0.0
        %1786 = vmatpush1.msra.mxu0 0.0
        %1787 = vmatprep.subr.mxu0 0.0
        %1788 = vmatpush1.msra.mxu0 0.0
        %1789 = vmatprep.subr.mxu0 0.0
        %1790 = vmatpush1.msra.mxu0 0.0
        %1791 = vmatprep.subr.mxu0 0.0
        %1792 = vmatpush1.msra.mxu0 0.0
        %1793 = vmatprep.subr.mxu0 0.0
        %1794 = vmatpush1.msra.mxu0 0.0
        %1795 = vmatprep.subr.mxu0 0.0
        %1796 = vmatpush1.msra.mxu0 0.0
        %1797 = vmatprep.subr.mxu0 0.0
        %1798 = vmatpush1.msra.mxu0 0.0
        %1799 = vmatprep.subr.mxu0 0.0
        %1800 = vmatpush1.msra.mxu0 0.0
        %1801 = vmatprep.subr.mxu0 0.0
        %1802 = vmatpush1.msra.mxu0 0.0
        %1803 = vmatprep.subr.mxu0 0.0
        %1804 = vmatpush1.msra.mxu0 0.0
        %1805 = vmatprep.subr.mxu0 0.0
        %1806 = vmatpush1.msra.mxu0 0.0
        %1807 = vmatprep.subr.mxu0 0.0
        %1808 = vmatpush1.msra.mxu0 0.0
        %1809 = vmatprep.subr.mxu0 0.0
        %1810 = vmatpush1.msra.mxu0 0.0
        %1811 = vmatprep.subr.mxu0 0.0
        %1812 = vmatpush1.msra.mxu0 0.0
        %1813 = vmatprep.subr.mxu0 0.0
        %1814 = vmatpush1.msra.mxu0 0.0
        %1815 = vmatprep.subr.mxu0 0.0
        %1816 = vmatpush1.msra.mxu0 0.0
        %1817 = vmatprep.subr.mxu0 0.0
        %1818 = vmatpush1.msra.mxu0 0.0
        %1819 = vmatprep.subr.mxu0 0.0
        %1820 = vmatpush1.msra.mxu0 0.0
        %1821 = vmatprep.subr.mxu0 0.0
        %1822 = vmatpush1.msra.mxu0 0.0
        %1823 = vmatprep.subr.mxu0 0.0
        %1824 = vmatpush1.msra.mxu0 0.0
        %1825 = vmatprep.subr.mxu0 0.0
        %1826 = vmatpush1.msra.mxu0 0.0
        %1827 = vmatprep.subr.mxu0 0.0
        %1828 = vmatpush1.msra.mxu0 0.0
        %1829 = vmatprep.subr.mxu0 0.0
        %1830 = vmatpush1.msra.mxu0 0.0
        %1831 = vmatprep.subr.mxu0 0.0
        %1832 = vmatpush1.msra.mxu0 0.0
        %1833 = vmatprep.subr.mxu0 0.0
        %1834 = vmatpush1.msra.mxu0 0.0
        %1835 = vmatprep.subr.mxu0 0.0
        %1836 = vmatpush1.msra.mxu0 0.0
        %1837 = vmatprep.subr.mxu0 0.0
        %1838 = vmatpush1.msra.mxu0 0.0
        %1839 = vmatprep.subr.mxu0 0.0
        %1840 = vmatpush1.msra.mxu0 0.0
        %1841 = vmatprep.mubr.f32.mxu0 0.0
        %1842 = vmatmul.mubr.f32.gmra.mrb[0].mxu0 %v1775
        %v1843 = vpop.f32.mrb[0].mxu0
        %v1844 = vadd.f32 0.0, %v1843
        %v1845 = vpop.f32.mrb[0].mxu0
        %1846 = vdwg.mxu0
        %s1847 = scalar_lea.vmem [#allocation7], 8
        %v1848 = vld [vmem:[%s1847] sm:$0xff]
        %v1850 = vsel %vm452, %v1616, 0
        %v1853 = vsel %vm452, %v1692, 0
        %v1856 = vsel %vm452, %v1768, 0
        %v1859 = vsel %vm452, %v1844, 0
        %1861 = vmatprep.subr.mxu0 0.0
        %1862 = vmatpush1.msra.mxu0 %v1848
        %1863 = vmatprep.subr.mxu0 0.0
        %1864 = vmatpush1.msra.mxu0 0.0
        %1865 = vmatprep.subr.mxu0 0.0
        %1866 = vmatpush1.msra.mxu0 0.0
        %1867 = vmatprep.subr.mxu0 0.0
        %1868 = vmatpush1.msra.mxu0 0.0
        %1869 = vmatprep.subr.mxu0 0.0
        %1870 = vmatpush1.msra.mxu0 0.0
        %1871 = vmatprep.subr.mxu0 0.0
        %1872 = vmatpush1.msra.mxu0 0.0
        %1873 = vmatprep.subr.mxu0 0.0
        %1874 = vmatpush1.msra.mxu0 0.0
        %1875 = vmatprep.subr.mxu0 0.0
        %1876 = vmatpush1.msra.mxu0 0.0
        %1877 = vmatprep.subr.mxu0 0.0
        %1878 = vmatpush1.msra.mxu0 0.0
        %1879 = vmatprep.subr.mxu0 0.0
        %1880 = vmatpush1.msra.mxu0 0.0
        %1881 = vmatprep.subr.mxu0 0.0
        %1882 = vmatpush1.msra.mxu0 0.0
        %1883 = vmatprep.subr.mxu0 0.0
        %1884 = vmatpush1.msra.mxu0 0.0
        %1885 = vmatprep.subr.mxu0 0.0
        %1886 = vmatpush1.msra.mxu0 0.0
        %1887 = vmatprep.subr.mxu0 0.0
        %1888 = vmatpush1.msra.mxu0 0.0
        %1889 = vmatprep.subr.mxu0 0.0
        %1890 = vmatpush1.msra.mxu0 0.0
        %1891 = vmatprep.subr.mxu0 0.0
        %1892 = vmatpush1.msra.mxu0 0.0
        %1893 = vmatprep.subr.mxu0 0.0
        %1894 = vmatpush1.msra.mxu0 0.0
        %1895 = vmatprep.subr.mxu0 0.0
        %1896 = vmatpush1.msra.mxu0 0.0
        %1897 = vmatprep.subr.mxu0 0.0
        %1898 = vmatpush1.msra.mxu0 0.0
        %1899 = vmatprep.subr.mxu0 0.0
        %1900 = vmatpush1.msra.mxu0 0.0
        %1901 = vmatprep.subr.mxu0 0.0
        %1902 = vmatpush1.msra.mxu0 0.0
        %1903 = vmatprep.subr.mxu0 0.0
        %1904 = vmatpush1.msra.mxu0 0.0
        %1905 = vmatprep.subr.mxu0 0.0
        %1906 = vmatpush1.msra.mxu0 0.0
        %1907 = vmatprep.subr.mxu0 0.0
        %1908 = vmatpush1.msra.mxu0 0.0
        %1909 = vmatprep.subr.mxu0 0.0
        %1910 = vmatpush1.msra.mxu0 0.0
        %1911 = vmatprep.subr.mxu0 0.0
        %1912 = vmatpush1.msra.mxu0 0.0
        %1913 = vmatprep.subr.mxu0 0.0
        %1914 = vmatpush1.msra.mxu0 0.0
        %1915 = vmatprep.subr.mxu0 0.0
        %1916 = vmatpush1.msra.mxu0 0.0
        %1917 = vmatprep.subr.mxu0 0.0
        %1918 = vmatpush1.msra.mxu0 0.0
        %1919 = vmatprep.subr.mxu0 0.0
        %1920 = vmatpush1.msra.mxu0 0.0
        %1921 = vmatprep.subr.mxu0 0.0
        %1922 = vmatpush1.msra.mxu0 0.0
        %1923 = vmatprep.subr.mxu0 0.0
        %1924 = vmatpush1.msra.mxu0 0.0
        %1925 = vmatprep.mubr.f32.mxu0 0.0
        %1926 = vmatmul.mubr.f32.gmra.mrb[0].mxu0 %v1850
        %v1927 = vpop.f32.mrb[0].mxu0
        %v1928 = vadd.f32 0.0, %v1927
        %v1929 = vpop.f32.mrb[0].mxu0
        %1930 = vmatprep.mubr.f32.mxu0 0.0
        %1931 = vmatmul.mubr.f32.gmra.mrb[0].mxu0 %v1853
        %v1932 = vpop.f32.mrb[0].mxu0
        %v1933 = vadd.f32 0.0, %v1932
        %v1934 = vpop.f32.mrb[0].mxu0
        %1935 = vmatprep.mubr.f32.mxu0 0.0
        %1936 = vmatmul.mubr.f32.gmra.mrb[0].mxu0 %v1856
        %v1937 = vpop.f32.mrb[0].mxu0
        %v1938 = vadd.f32 0.0, %v1937
        %v1939 = vpop.f32.mrb[0].mxu0
        %1940 = vmatprep.mubr.f32.mxu0 0.0
        %1941 = vmatmul.mubr.f32.gmra.mrb[0].mxu0 %v1859
        %v1942 = vpop.f32.mrb[0].mxu0
        %v1943 = vadd.f32 0.0, %v1942
        %v1944 = vpop.f32.mrb[0].mxu0
        %1945 = vdwg.mxu0
        %v1947 = vsel %vm452, %v927, 0
        %v1950 = vsel %vm452, %v1003, 0
        %v1953 = vsel %vm452, %v1079, 0
        %v1956 = vsel %vm452, %v1155, 0
        %1958 = vmatprep.subr.mxu0 0.0
        %1959 = vmatpush1.msra.mxu0 %v1158
        %1960 = vmatprep.subr.mxu0 0.0
        %1961 = vmatpush1.msra.mxu0 0.0
        %1962 = vmatprep.subr.mxu0 0.0
        %1963 = vmatpush1.msra.mxu0 0.0
        %1964 = vmatprep.subr.mxu0 0.0
        %1965 = vmatpush1.msra.mxu0 0.0
        %1966 = vmatprep.subr.mxu0 0.0
        %1967 = vmatpush1.msra.mxu0 0.0
        %1968 = vmatprep.subr.mxu0 0.0
        %1969 = vmatpush1.msra.mxu0 0.0
        %1970 = vmatprep.subr.mxu0 0.0
        %1971 = vmatpush1.msra.mxu0 0.0
        %1972 = vmatprep.subr.mxu0 0.0
        %1973 = vmatpush1.msra.mxu0 0.0
        %1974 = vmatprep.subr.mxu0 0.0
        %1975 = vmatpush1.msra.mxu0 0.0
        %1976 = vmatprep.subr.mxu0 0.0
        %1977 = vmatpush1.msra.mxu0 0.0
        %1978 = vmatprep.subr.mxu0 0.0
        %1979 = vmatpush1.msra.mxu0 0.0
        %1980 = vmatprep.subr.mxu0 0.0
        %1981 = vmatpush1.msra.mxu0 0.0
        %1982 = vmatprep.subr.mxu0 0.0
        %1983 = vmatpush1.msra.mxu0 0.0
        %1984 = vmatprep.subr.mxu0 0.0
        %1985 = vmatpush1.msra.mxu0 0.0
        %1986 = vmatprep.subr.mxu0 0.0
        %1987 = vmatpush1.msra.mxu0 0.0
        %1988 = vmatprep.subr.mxu0 0.0
        %1989 = vmatpush1.msra.mxu0 0.0
        %1990 = vmatprep.subr.mxu0 0.0
        %1991 = vmatpush1.msra.mxu0 0.0
        %1992 = vmatprep.subr.mxu0 0.0
        %1993 = vmatpush1.msra.mxu0 0.0
        %1994 = vmatprep.subr.mxu0 0.0
        %1995 = vmatpush1.msra.mxu0 0.0
        %1996 = vmatprep.subr.mxu0 0.0
        %1997 = vmatpush1.msra.mxu0 0.0
        %1998 = vmatprep.subr.mxu0 0.0
        %1999 = vmatpush1.msra.mxu0 0.0
        %2000 = vmatprep.subr.mxu0 0.0
        %2001 = vmatpush1.msra.mxu0 0.0
        %2002 = vmatprep.subr.mxu0 0.0
        %2003 = vmatpush1.msra.mxu0 0.0
        %2004 = vmatprep.subr.mxu0 0.0
        %2005 = vmatpush1.msra.mxu0 0.0
        %2006 = vmatprep.subr.mxu0 0.0
        %2007 = vmatpush1.msra.mxu0 0.0
        %2008 = vmatprep.subr.mxu0 0.0
        %2009 = vmatpush1.msra.mxu0 0.0
        %2010 = vmatprep.subr.mxu0 0.0
        %2011 = vmatpush1.msra.mxu0 0.0
        %2012 = vmatprep.subr.mxu0 0.0
        %2013 = vmatpush1.msra.mxu0 0.0
        %2014 = vmatprep.subr.mxu0 0.0
        %2015 = vmatpush1.msra.mxu0 0.0
        %2016 = vmatprep.subr.mxu0 0.0
        %2017 = vmatpush1.msra.mxu0 0.0
        %2018 = vmatprep.subr.mxu0 0.0
        %2019 = vmatpush1.msra.mxu0 0.0
        %2020 = vmatprep.subr.mxu0 0.0
        %2021 = vmatpush1.msra.mxu0 0.0
        %2022 = vmatprep.mubr.f32.mxu0 0.0
        %2023 = vmatmul.mubr.f32.gmra.mrb[0].mxu0 %v1947
        %v2024 = vpop.f32.mrb[0].mxu0
        %v2025 = vadd.f32 %v1928, %v2024
        %v2026 = vpop.f32.mrb[0].mxu0
        %2027 = vmatprep.mubr.f32.mxu0 0.0
        %2028 = vmatmul.mubr.f32.gmra.mrb[0].mxu0 %v1950
        %v2029 = vpop.f32.mrb[0].mxu0
        %v2030 = vadd.f32 %v1933, %v2029
        %v2031 = vpop.f32.mrb[0].mxu0
        %2032 = vmatprep.mubr.f32.mxu0 0.0
        %2033 = vmatmul.mubr.f32.gmra.mrb[0].mxu0 %v1953
        %v2034 = vpop.f32.mrb[0].mxu0
        %v2035 = vadd.f32 %v1938, %v2034
        %v2036 = vpop.f32.mrb[0].mxu0
        %2037 = vmatprep.mubr.f32.mxu0 0.0
        %2038 = vmatmul.mubr.f32.gmra.mrb[0].mxu0 %v1956
        %v2039 = vpop.f32.mrb[0].mxu0
        %v2040 = vadd.f32 %v1943, %v2039
        %v2041 = vpop.f32.mrb[0].mxu0
        %2042 = vdwg.mxu0
        %2043 = vrot.lane.b32.xlu0 %v415, 112
        %v2044 = vpop.permute.xlu0 %2043
        %2045 = vrot.lane.b32.xlu0 %v415, 80
        %v2046 = vpop.permute.xlu0 %2045
        %v2047 = vsel %vm452, %v2044, 0
        %v2049 = vsel %vm452, %v2046, 0
        %2051 = vmatprep.subr.mxu0 0.0
        %2052 = vmatpush1.xpose.msra.mxu0 %v2049
        %2053 = vmatprep.subr.mxu0 0.0
        %2054 = vmatpush1.xpose.msra.mxu0 0.0
        %2055 = vmatprep.subr.mxu0 0.0
        %2056 = vmatpush1.xpose.msra.mxu0 0.0
        %2057 = vmatprep.subr.mxu0 0.0
        %2058 = vmatpush1.xpose.msra.mxu0 0.0
        %2059 = vmatprep.subr.mxu0 0.0
        %2060 = vmatpush1.xpose.msra.mxu0 0.0
        %2061 = vmatprep.subr.mxu0 0.0
        %2062 = vmatpush1.xpose.msra.mxu0 0.0
        %2063 = vmatprep.subr.mxu0 0.0
        %2064 = vmatpush1.xpose.msra.mxu0 0.0
        %2065 = vmatprep.subr.mxu0 0.0
        %2066 = vmatpush1.xpose.msra.mxu0 0.0
        %2067 = vmatprep.subr.mxu0 0.0
        %2068 = vmatpush1.xpose.msra.mxu0 0.0
        %2069 = vmatprep.subr.mxu0 0.0
        %2070 = vmatpush1.xpose.msra.mxu0 0.0
        %2071 = vmatprep.subr.mxu0 0.0
        %2072 = vmatpush1.xpose.msra.mxu0 0.0
        %2073 = vmatprep.subr.mxu0 0.0
        %2074 = vmatpush1.xpose.msra.mxu0 0.0
        %2075 = vmatprep.subr.mxu0 0.0
        %2076 = vmatpush1.xpose.msra.mxu0 0.0
        %2077 = vmatprep.subr.mxu0 0.0
        %2078 = vmatpush1.xpose.msra.mxu0 0.0
        %2079 = vmatprep.subr.mxu0 0.0
        %2080 = vmatpush1.xpose.msra.mxu0 0.0
        %2081 = vmatprep.subr.mxu0 0.0
        %2082 = vmatpush1.xpose.msra.mxu0 0.0
        %2083 = vmatprep.subr.mxu0 0.0
        %2084 = vmatpush1.xpose.msra.mxu0 0.0
        %2085 = vmatprep.subr.mxu0 0.0
        %2086 = vmatpush1.xpose.msra.mxu0 0.0
        %2087 = vmatprep.subr.mxu0 0.0
        %2088 = vmatpush1.xpose.msra.mxu0 0.0
        %2089 = vmatprep.subr.mxu0 0.0
        %2090 = vmatpush1.xpose.msra.mxu0 0.0
        %2091 = vmatprep.subr.mxu0 0.0
        %2092 = vmatpush1.xpose.msra.mxu0 0.0
        %2093 = vmatprep.subr.mxu0 0.0
        %2094 = vmatpush1.xpose.msra.mxu0 0.0
        %2095 = vmatprep.subr.mxu0 0.0
        %2096 = vmatpush1.xpose.msra.mxu0 0.0
        %2097 = vmatprep.subr.mxu0 0.0
        %2098 = vmatpush1.xpose.msra.mxu0 0.0
        %2099 = vmatprep.subr.mxu0 0.0
        %2100 = vmatpush1.xpose.msra.mxu0 0.0
        %2101 = vmatprep.subr.mxu0 0.0
        %2102 = vmatpush1.xpose.msra.mxu0 0.0
        %2103 = vmatprep.subr.mxu0 0.0
        %2104 = vmatpush1.xpose.msra.mxu0 0.0
        %2105 = vmatprep.subr.mxu0 0.0
        %2106 = vmatpush1.xpose.msra.mxu0 0.0
        %2107 = vmatprep.subr.mxu0 0.0
        %2108 = vmatpush1.xpose.msra.mxu0 0.0
        %2109 = vmatprep.subr.mxu0 0.0
        %2110 = vmatpush1.xpose.msra.mxu0 0.0
        %2111 = vmatprep.subr.mxu0 0.0
        %2112 = vmatpush1.xpose.msra.mxu0 0.0
        %2113 = vmatprep.subr.mxu0 0.0
        %2114 = vmatpush1.xpose.msra.mxu0 0.0
        %2115 = vmatprep.mubr.f32.mxu0 0.0
        %2116 = vmatmul.mubr.f32.gmra.mrb[0].mxu0 %v2047
        %v2117 = vpop.f32.mrb[0].mxu0
        %v2118 = vadd.f32 0.0, %v2117
        %v2119 = vpop.f32.mrb[0].mxu0
        %2120 = vdwg.mxu0
        %2121 = vrot.lane.b32.xlu0 %v420, 112
        %v2122 = vpop.permute.xlu0 %2121
        %2123 = vrot.lane.b32.xlu0 %v420, 80
        %v2124 = vpop.permute.xlu0 %2123
        %v2125 = vsel %vm452, %v2122, 0
        %v2127 = vsel %vm452, %v2124, 0
        %2129 = vmatprep.subr.mxu0 0.0
        %2130 = vmatpush1.xpose.msra.mxu0 %v2127
        %2131 = vmatprep.subr.mxu0 0.0
        %2132 = vmatpush1.xpose.msra.mxu0 0.0
        %2133 = vmatprep.subr.mxu0 0.0
        %2134 = vmatpush1.xpose.msra.mxu0 0.0
        %2135 = vmatprep.subr.mxu0 0.0
        %2136 = vmatpush1.xpose.msra.mxu0 0.0
        %2137 = vmatprep.subr.mxu0 0.0
        %2138 = vmatpush1.xpose.msra.mxu0 0.0
        %2139 = vmatprep.subr.mxu0 0.0
        %2140 = vmatpush1.xpose.msra.mxu0 0.0
        %2141 = vmatprep.subr.mxu0 0.0
        %2142 = vmatpush1.xpose.msra.mxu0 0.0
        %2143 = vmatprep.subr.mxu0 0.0
        %2144 = vmatpush1.xpose.msra.mxu0 0.0
        %2145 = vmatprep.subr.mxu0 0.0
        %2146 = vmatpush1.xpose.msra.mxu0 0.0
        %2147 = vmatprep.subr.mxu0 0.0
        %2148 = vmatpush1.xpose.msra.mxu0 0.0
        %2149 = vmatprep.subr.mxu0 0.0
        %2150 = vmatpush1.xpose.msra.mxu0 0.0
        %2151 = vmatprep.subr.mxu0 0.0
        %2152 = vmatpush1.xpose.msra.mxu0 0.0
        %2153 = vmatprep.subr.mxu0 0.0
        %2154 = vmatpush1.xpose.msra.mxu0 0.0
        %2155 = vmatprep.subr.mxu0 0.0
        %2156 = vmatpush1.xpose.msra.mxu0 0.0
        %2157 = vmatprep.subr.mxu0 0.0
        %2158 = vmatpush1.xpose.msra.mxu0 0.0
        %2159 = vmatprep.subr.mxu0 0.0
        %2160 = vmatpush1.xpose.msra.mxu0 0.0
        %2161 = vmatprep.subr.mxu0 0.0
        %2162 = vmatpush1.xpose.msra.mxu0 0.0
        %2163 = vmatprep.subr.mxu0 0.0
        %2164 = vmatpush1.xpose.msra.mxu0 0.0
        %2165 = vmatprep.subr.mxu0 0.0
        %2166 = vmatpush1.xpose.msra.mxu0 0.0
        %2167 = vmatprep.subr.mxu0 0.0
        %2168 = vmatpush1.xpose.msra.mxu0 0.0
        %2169 = vmatprep.subr.mxu0 0.0
        %2170 = vmatpush1.xpose.msra.mxu0 0.0
        %2171 = vmatprep.subr.mxu0 0.0
        %2172 = vmatpush1.xpose.msra.mxu0 0.0
        %2173 = vmatprep.subr.mxu0 0.0
        %2174 = vmatpush1.xpose.msra.mxu0 0.0
        %2175 = vmatprep.subr.mxu0 0.0
        %2176 = vmatpush1.xpose.msra.mxu0 0.0
        %2177 = vmatprep.subr.mxu0 0.0
        %2178 = vmatpush1.xpose.msra.mxu0 0.0
        %2179 = vmatprep.subr.mxu0 0.0
        %2180 = vmatpush1.xpose.msra.mxu0 0.0
        %2181 = vmatprep.subr.mxu0 0.0
        %2182 = vmatpush1.xpose.msra.mxu0 0.0
        %2183 = vmatprep.subr.mxu0 0.0
        %2184 = vmatpush1.xpose.msra.mxu0 0.0
        %2185 = vmatprep.subr.mxu0 0.0
        %2186 = vmatpush1.xpose.msra.mxu0 0.0
        %2187 = vmatprep.subr.mxu0 0.0
        %2188 = vmatpush1.xpose.msra.mxu0 0.0
        %2189 = vmatprep.subr.mxu0 0.0
        %2190 = vmatpush1.xpose.msra.mxu0 0.0
        %2191 = vmatprep.subr.mxu0 0.0
        %2192 = vmatpush1.xpose.msra.mxu0 0.0
        %2193 = vmatprep.mubr.f32.mxu0 0.0
        %2194 = vmatmul.mubr.f32.gmra.mrb[0].mxu0 %v2125
        %v2195 = vpop.f32.mrb[0].mxu0
        %v2196 = vadd.f32 0.0, %v2195
        %v2197 = vpop.f32.mrb[0].mxu0
        %2198 = vdwg.mxu0
        %2199 = vrot.lane.b32.xlu0 %v425, 112
        %v2200 = vpop.permute.xlu0 %2199
        %2201 = vrot.lane.b32.xlu0 %v425, 80
        %v2202 = vpop.permute.xlu0 %2201
        %v2203 = vsel %vm452, %v2200, 0
        %v2205 = vsel %vm452, %v2202, 0
        %2207 = vmatprep.subr.mxu0 0.0
        %2208 = vmatpush1.xpose.msra.mxu0 %v2205
        %2209 = vmatprep.subr.mxu0 0.0
        %2210 = vmatpush1.xpose.msra.mxu0 0.0
        %2211 = vmatprep.subr.mxu0 0.0
        %2212 = vmatpush1.xpose.msra.mxu0 0.0
        %2213 = vmatprep.subr.mxu0 0.0
        %2214 = vmatpush1.xpose.msra.mxu0 0.0
        %2215 = vmatprep.subr.mxu0 0.0
        %2216 = vmatpush1.xpose.msra.mxu0 0.0
        %2217 = vmatprep.subr.mxu0 0.0
        %2218 = vmatpush1.xpose.msra.mxu0 0.0
        %2219 = vmatprep.subr.mxu0 0.0
        %2220 = vmatpush1.xpose.msra.mxu0 0.0
        %2221 = vmatprep.subr.mxu0 0.0
        %2222 = vmatpush1.xpose.msra.mxu0 0.0
        %2223 = vmatprep.subr.mxu0 0.0
        %2224 = vmatpush1.xpose.msra.mxu0 0.0
        %2225 = vmatprep.subr.mxu0 0.0
        %2226 = vmatpush1.xpose.msra.mxu0 0.0
        %2227 = vmatprep.subr.mxu0 0.0
        %2228 = vmatpush1.xpose.msra.mxu0 0.0
        %2229 = vmatprep.subr.mxu0 0.0
        %2230 = vmatpush1.xpose.msra.mxu0 0.0
        %2231 = vmatprep.subr.mxu0 0.0
        %2232 = vmatpush1.xpose.msra.mxu0 0.0
        %2233 = vmatprep.subr.mxu0 0.0
        %2234 = vmatpush1.xpose.msra.mxu0 0.0
        %2235 = vmatprep.subr.mxu0 0.0
        %2236 = vmatpush1.xpose.msra.mxu0 0.0
        %2237 = vmatprep.subr.mxu0 0.0
        %2238 = vmatpush1.xpose.msra.mxu0 0.0
        %2239 = vmatprep.subr.mxu0 0.0
        %2240 = vmatpush1.xpose.msra.mxu0 0.0
        %2241 = vmatprep.subr.mxu0 0.0
        %2242 = vmatpush1.xpose.msra.mxu0 0.0
        %2243 = vmatprep.subr.mxu0 0.0
        %2244 = vmatpush1.xpose.msra.mxu0 0.0
        %2245 = vmatprep.subr.mxu0 0.0
        %2246 = vmatpush1.xpose.msra.mxu0 0.0
        %2247 = vmatprep.subr.mxu0 0.0
        %2248 = vmatpush1.xpose.msra.mxu0 0.0
        %2249 = vmatprep.subr.mxu0 0.0
        %2250 = vmatpush1.xpose.msra.mxu0 0.0
        %2251 = vmatprep.subr.mxu0 0.0
        %2252 = vmatpush1.xpose.msra.mxu0 0.0
        %2253 = vmatprep.subr.mxu0 0.0
        %2254 = vmatpush1.xpose.msra.mxu0 0.0
        %2255 = vmatprep.subr.mxu0 0.0
        %2256 = vmatpush1.xpose.msra.mxu0 0.0
        %2257 = vmatprep.subr.mxu0 0.0
        %2258 = vmatpush1.xpose.msra.mxu0 0.0
        %2259 = vmatprep.subr.mxu0 0.0
        %2260 = vmatpush1.xpose.msra.mxu0 0.0
        %2261 = vmatprep.subr.mxu0 0.0
        %2262 = vmatpush1.xpose.msra.mxu0 0.0
        %2263 = vmatprep.subr.mxu0 0.0
        %2264 = vmatpush1.xpose.msra.mxu0 0.0
        %2265 = vmatprep.subr.mxu0 0.0
        %2266 = vmatpush1.xpose.msra.mxu0 0.0
        %2267 = vmatprep.subr.mxu0 0.0
        %2268 = vmatpush1.xpose.msra.mxu0 0.0
        %2269 = vmatprep.subr.mxu0 0.0
        %2270 = vmatpush1.xpose.msra.mxu0 0.0
        %2271 = vmatprep.mubr.f32.mxu0 0.0
        %2272 = vmatmul.mubr.f32.gmra.mrb[0].mxu0 %v2203
        %v2273 = vpop.f32.mrb[0].mxu0
        %v2274 = vadd.f32 0.0, %v2273
        %v2275 = vpop.f32.mrb[0].mxu0
        %2276 = vdwg.mxu0
        %2277 = vrot.lane.b32.xlu0 %v430, 112
        %v2278 = vpop.permute.xlu0 %2277
        %2279 = vrot.lane.b32.xlu0 %v430, 80
        %v2280 = vpop.permute.xlu0 %2279
        %v2281 = vsel %vm452, %v2278, 0
        %v2283 = vsel %vm452, %v2280, 0
        %2285 = vmatprep.subr.mxu0 0.0
        %2286 = vmatpush1.xpose.msra.mxu0 %v2283
        %2287 = vmatprep.subr.mxu0 0.0
        %2288 = vmatpush1.xpose.msra.mxu0 0.0
        %2289 = vmatprep.subr.mxu0 0.0
        %2290 = vmatpush1.xpose.msra.mxu0 0.0
        %2291 = vmatprep.subr.mxu0 0.0
        %2292 = vmatpush1.xpose.msra.mxu0 0.0
        %2293 = vmatprep.subr.mxu0 0.0
        %2294 = vmatpush1.xpose.msra.mxu0 0.0
        %2295 = vmatprep.subr.mxu0 0.0
        %2296 = vmatpush1.xpose.msra.mxu0 0.0
        %2297 = vmatprep.subr.mxu0 0.0
        %2298 = vmatpush1.xpose.msra.mxu0 0.0
        %2299 = vmatprep.subr.mxu0 0.0
        %2300 = vmatpush1.xpose.msra.mxu0 0.0
        %2301 = vmatprep.subr.mxu0 0.0
        %2302 = vmatpush1.xpose.msra.mxu0 0.0
        %2303 = vmatprep.subr.mxu0 0.0
        %2304 = vmatpush1.xpose.msra.mxu0 0.0
        %2305 = vmatprep.subr.mxu0 0.0
        %2306 = vmatpush1.xpose.msra.mxu0 0.0
        %2307 = vmatprep.subr.mxu0 0.0
        %2308 = vmatpush1.xpose.msra.mxu0 0.0
        %2309 = vmatprep.subr.mxu0 0.0
        %2310 = vmatpush1.xpose.msra.mxu0 0.0
        %2311 = vmatprep.subr.mxu0 0.0
        %2312 = vmatpush1.xpose.msra.mxu0 0.0
        %2313 = vmatprep.subr.mxu0 0.0
        %2314 = vmatpush1.xpose.msra.mxu0 0.0
        %2315 = vmatprep.subr.mxu0 0.0
        %2316 = vmatpush1.xpose.msra.mxu0 0.0
        %2317 = vmatprep.subr.mxu0 0.0
        %2318 = vmatpush1.xpose.msra.mxu0 0.0
        %2319 = vmatprep.subr.mxu0 0.0
        %2320 = vmatpush1.xpose.msra.mxu0 0.0
        %2321 = vmatprep.subr.mxu0 0.0
        %2322 = vmatpush1.xpose.msra.mxu0 0.0
        %2323 = vmatprep.subr.mxu0 0.0
        %2324 = vmatpush1.xpose.msra.mxu0 0.0
        %2325 = vmatprep.subr.mxu0 0.0
        %2326 = vmatpush1.xpose.msra.mxu0 0.0
        %2327 = vmatprep.subr.mxu0 0.0
        %2328 = vmatpush1.xpose.msra.mxu0 0.0
        %2329 = vmatprep.subr.mxu0 0.0
        %2330 = vmatpush1.xpose.msra.mxu0 0.0
        %2331 = vmatprep.subr.mxu0 0.0
        %2332 = vmatpush1.xpose.msra.mxu0 0.0
        %2333 = vmatprep.subr.mxu0 0.0
        %2334 = vmatpush1.xpose.msra.mxu0 0.0
        %2335 = vmatprep.subr.mxu0 0.0
        %2336 = vmatpush1.xpose.msra.mxu0 0.0
        %2337 = vmatprep.subr.mxu0 0.0
        %2338 = vmatpush1.xpose.msra.mxu0 0.0
        %2339 = vmatprep.subr.mxu0 0.0
        %2340 = vmatpush1.xpose.msra.mxu0 0.0
        %2341 = vmatprep.subr.mxu0 0.0
        %2342 = vmatpush1.xpose.msra.mxu0 0.0
        %2343 = vmatprep.subr.mxu0 0.0
        %2344 = vmatpush1.xpose.msra.mxu0 0.0
        %2345 = vmatprep.subr.mxu0 0.0
        %2346 = vmatpush1.xpose.msra.mxu0 0.0
        %2347 = vmatprep.subr.mxu0 0.0
        %2348 = vmatpush1.xpose.msra.mxu0 0.0
        %2349 = vmatprep.mubr.f32.mxu0 0.0
        %2350 = vmatmul.mubr.f32.gmra.mrb[0].mxu0 %v2281
        %v2351 = vpop.f32.mrb[0].mxu0
        %v2352 = vadd.f32 0.0, %v2351
        %v2353 = vpop.f32.mrb[0].mxu0
        %2354 = vdwg.mxu0
        %v2355 = vsel %vm452, %v2118, -inf
        %2356 = vmax.xlane.f32.xlu0 %v2355
        %v2357 = vpop.xlane.xlu0 %2356
        %v2358 = vsel %vm452, %v2196, -inf
        %2359 = vmax.xlane.f32.xlu0 %v2358
        %v2360 = vpop.xlane.xlu0 %2359
        %v2361 = vsel %vm452, %v2274, -inf
        %2362 = vmax.xlane.f32.xlu0 %v2361
        %v2363 = vpop.xlane.xlu0 %2362
        %v2364 = vsel %vm452, %v2352, -inf
        %2365 = vmax.xlane.f32.xlu0 %v2364
        %v2366 = vpop.xlane.xlu0 %2365
        %v2367 = vsub.f32 %v2118, %v2357
        %v2368 = vsub.f32 %v2196, %v2360
        %v2369 = vsub.f32 %v2274, %v2363
        %v2370 = vsub.f32 %v2352, %v2366
        %v2371 = vmul.f32 %v2367, 1.442695
        %v2372 = vpow.pop %v2371
        %v2373 = vmul.f32 %v2368, 1.442695
        %v2374 = vpow.pop %v2373
        %v2375 = vmul.f32 %v2369, 1.442695
        %v2376 = vpow.pop %v2375
        %v2377 = vmul.f32 %v2370, 1.442695
        %v2378 = vpow.pop %v2377
        %v2379 = vsel %vm452, %v2372, 0.0
        %2380 = vadd.xlane.f32.xlu0 %v2379
        %v2381 = vpop.xlane.xlu0 %2380
        %v2382 = vsel %vm452, %v2374, 0.0
        %2383 = vadd.xlane.f32.xlu0 %v2382
        %v2384 = vpop.xlane.xlu0 %2383
        %v2385 = vsel %vm452, %v2376, 0.0
        %2386 = vadd.xlane.f32.xlu0 %v2385
        %v2387 = vpop.xlane.xlu0 %2386
        %v2388 = vsel %vm452, %v2378, 0.0
        %2389 = vadd.xlane.f32.xlu0 %v2388
        %v2390 = vpop.xlane.xlu0 %2389
        %v2391 = vrcp.pop %v2381
        %v2392 = vmul.f32 %v2372, %v2391
        %v2393 = vrcp.pop %v2384
        %v2394 = vmul.f32 %v2374, %v2393
        %v2395 = vrcp.pop %v2387
        %v2396 = vmul.f32 %v2376, %v2395
        %v2397 = vrcp.pop %v2390
        %v2398 = vmul.f32 %v2378, %v2397
        %v2399 = vmul.f32 %v2392, %v809
        %v2400 = vmul.f32 %v2394, %v813
        %v2401 = vmul.f32 %v2396, %v817
        %v2402 = vmul.f32 %v2398, %v821
        %v2403 = vsel %vm452, %v2399, 0.0
        %2404 = vadd.xlane.f32.xlu0 %v2403
        %v2405 = vpop.xlane.xlu0 %2404
        %v2406 = vsel %vm452, %v2400, 0.0
        %2407 = vadd.xlane.f32.xlu0 %v2406
        %v2408 = vpop.xlane.xlu0 %2407
        %v2409 = vsel %vm452, %v2401, 0.0
        %2410 = vadd.xlane.f32.xlu0 %v2409
        %v2411 = vpop.xlane.xlu0 %2410
        %v2412 = vsel %vm452, %v2402, 0.0
        %2413 = vadd.xlane.f32.xlu0 %v2412
        %v2414 = vpop.xlane.xlu0 %2413
        %v2415 = vadd.f32 %v2405, 1e-09
        %v2416 = vadd.f32 %v2408, 1e-09
        %v2417 = vadd.f32 %v2411, 1e-09
        %v2418 = vadd.f32 %v2414, 1e-09
        %v2419 = vrcp.pop %v2415
        %v2420 = vmul.f32 %v2399, %v2419
        %v2421 = vrcp.pop %v2416
        %v2422 = vmul.f32 %v2400, %v2421
        %v2423 = vrcp.pop %v2417
        %v2424 = vmul.f32 %v2401, %v2423
        %v2425 = vrcp.pop %v2418
        %v2426 = vmul.f32 %v2402, %v2425
        %2427 = vrot.lane.b32.xlu0 %v415, 48
        %v2428 = vpop.permute.xlu0 %2427
        %v2431 = vsel %vm452, %v2420, 0
        %2433 = vmatprep.subr.mxu0 0.0
        %2434 = vmatpush1.msra.mxu0 %v2428
        %2435 = vmatprep.subr.mxu0 0.0
        %2436 = vmatpush1.msra.mxu0 0.0
        %2437 = vmatprep.subr.mxu0 0.0
        %2438 = vmatpush1.msra.mxu0 0.0
        %2439 = vmatprep.subr.mxu0 0.0
        %2440 = vmatpush1.msra.mxu0 0.0
        %2441 = vmatprep.subr.mxu0 0.0
        %2442 = vmatpush1.msra.mxu0 0.0
        %2443 = vmatprep.subr.mxu0 0.0
        %2444 = vmatpush1.msra.mxu0 0.0
        %2445 = vmatprep.subr.mxu0 0.0
        %2446 = vmatpush1.msra.mxu0 0.0
        %2447 = vmatprep.subr.mxu0 0.0
        %2448 = vmatpush1.msra.mxu0 0.0
        %2449 = vmatprep.subr.mxu0 0.0
        %2450 = vmatpush1.msra.mxu0 0.0
        %2451 = vmatprep.subr.mxu0 0.0
        %2452 = vmatpush1.msra.mxu0 0.0
        %2453 = vmatprep.subr.mxu0 0.0
        %2454 = vmatpush1.msra.mxu0 0.0
        %2455 = vmatprep.subr.mxu0 0.0
        %2456 = vmatpush1.msra.mxu0 0.0
        %2457 = vmatprep.subr.mxu0 0.0
        %2458 = vmatpush1.msra.mxu0 0.0
        %2459 = vmatprep.subr.mxu0 0.0
        %2460 = vmatpush1.msra.mxu0 0.0
        %2461 = vmatprep.subr.mxu0 0.0
        %2462 = vmatpush1.msra.mxu0 0.0
        %2463 = vmatprep.subr.mxu0 0.0
        %2464 = vmatpush1.msra.mxu0 0.0
        %2465 = vmatprep.subr.mxu0 0.0
        %2466 = vmatpush1.msra.mxu0 0.0
        %2467 = vmatprep.subr.mxu0 0.0
        %2468 = vmatpush1.msra.mxu0 0.0
        %2469 = vmatprep.subr.mxu0 0.0
        %2470 = vmatpush1.msra.mxu0 0.0
        %2471 = vmatprep.subr.mxu0 0.0
        %2472 = vmatpush1.msra.mxu0 0.0
        %2473 = vmatprep.subr.mxu0 0.0
        %2474 = vmatpush1.msra.mxu0 0.0
        %2475 = vmatprep.subr.mxu0 0.0
        %2476 = vmatpush1.msra.mxu0 0.0
        %2477 = vmatprep.subr.mxu0 0.0
        %2478 = vmatpush1.msra.mxu0 0.0
        %2479 = vmatprep.subr.mxu0 0.0
        %2480 = vmatpush1.msra.mxu0 0.0
        %2481 = vmatprep.subr.mxu0 0.0
        %2482 = vmatpush1.msra.mxu0 0.0
        %2483 = vmatprep.subr.mxu0 0.0
        %2484 = vmatpush1.msra.mxu0 0.0
        %2485 = vmatprep.subr.mxu0 0.0
        %2486 = vmatpush1.msra.mxu0 0.0
        %2487 = vmatprep.subr.mxu0 0.0
        %2488 = vmatpush1.msra.mxu0 0.0
        %2489 = vmatprep.subr.mxu0 0.0
        %2490 = vmatpush1.msra.mxu0 0.0
        %2491 = vmatprep.subr.mxu0 0.0
        %2492 = vmatpush1.msra.mxu0 0.0
        %2493 = vmatprep.subr.mxu0 0.0
        %2494 = vmatpush1.msra.mxu0 0.0
        %2495 = vmatprep.subr.mxu0 0.0
        %2496 = vmatpush1.msra.mxu0 0.0
        %2497 = vmatprep.mubr.f32.mxu0 0.0
        %2498 = vmatmul.mubr.f32.gmra.mrb[0].mxu0 %v2431
        %v2499 = vpop.f32.mrb[0].mxu0
        %v2500 = vadd.f32 0.0, %v2499
        %v2501 = vpop.f32.mrb[0].mxu0
        %2502 = vdwg.mxu0
        %2503 = vrot.lane.b32.xlu0 %v420, 48
        %v2504 = vpop.permute.xlu0 %2503
        %v2507 = vsel %vm452, %v2422, 0
        %2509 = vmatprep.subr.mxu0 0.0
        %2510 = vmatpush1.msra.mxu0 %v2504
        %2511 = vmatprep.subr.mxu0 0.0
        %2512 = vmatpush1.msra.mxu0 0.0
        %2513 = vmatprep.subr.mxu0 0.0
        %2514 = vmatpush1.msra.mxu0 0.0
        %2515 = vmatprep.subr.mxu0 0.0
        %2516 = vmatpush1.msra.mxu0 0.0
        %2517 = vmatprep.subr.mxu0 0.0
        %2518 = vmatpush1.msra.mxu0 0.0
        %2519 = vmatprep.subr.mxu0 0.0
        %2520 = vmatpush1.msra.mxu0 0.0
        %2521 = vmatprep.subr.mxu0 0.0
        %2522 = vmatpush1.msra.mxu0 0.0
        %2523 = vmatprep.subr.mxu0 0.0
        %2524 = vmatpush1.msra.mxu0 0.0
        %2525 = vmatprep.subr.mxu0 0.0
        %2526 = vmatpush1.msra.mxu0 0.0
        %2527 = vmatprep.subr.mxu0 0.0
        %2528 = vmatpush1.msra.mxu0 0.0
        %2529 = vmatprep.subr.mxu0 0.0
        %2530 = vmatpush1.msra.mxu0 0.0
        %2531 = vmatprep.subr.mxu0 0.0
        %2532 = vmatpush1.msra.mxu0 0.0
        %2533 = vmatprep.subr.mxu0 0.0
        %2534 = vmatpush1.msra.mxu0 0.0
        %2535 = vmatprep.subr.mxu0 0.0
        %2536 = vmatpush1.msra.mxu0 0.0
        %2537 = vmatprep.subr.mxu0 0.0
        %2538 = vmatpush1.msra.mxu0 0.0
        %2539 = vmatprep.subr.mxu0 0.0
        %2540 = vmatpush1.msra.mxu0 0.0
        %2541 = vmatprep.subr.mxu0 0.0
        %2542 = vmatpush1.msra.mxu0 0.0
        %2543 = vmatprep.subr.mxu0 0.0
        %2544 = vmatpush1.msra.mxu0 0.0
        %2545 = vmatprep.subr.mxu0 0.0
        %2546 = vmatpush1.msra.mxu0 0.0
        %2547 = vmatprep.subr.mxu0 0.0
        %2548 = vmatpush1.msra.mxu0 0.0
        %2549 = vmatprep.subr.mxu0 0.0
        %2550 = vmatpush1.msra.mxu0 0.0
        %2551 = vmatprep.subr.mxu0 0.0
        %2552 = vmatpush1.msra.mxu0 0.0
        %2553 = vmatprep.subr.mxu0 0.0
        %2554 = vmatpush1.msra.mxu0 0.0
        %2555 = vmatprep.subr.mxu0 0.0
        %2556 = vmatpush1.msra.mxu0 0.0
        %2557 = vmatprep.subr.mxu0 0.0
        %2558 = vmatpush1.msra.mxu0 0.0
        %2559 = vmatprep.subr.mxu0 0.0
        %2560 = vmatpush1.msra.mxu0 0.0
        %2561 = vmatprep.subr.mxu0 0.0
        %2562 = vmatpush1.msra.mxu0 0.0
        %2563 = vmatprep.subr.mxu0 0.0
        %2564 = vmatpush1.msra.mxu0 0.0
        %2565 = vmatprep.subr.mxu0 0.0
        %2566 = vmatpush1.msra.mxu0 0.0
        %2567 = vmatprep.subr.mxu0 0.0
        %2568 = vmatpush1.msra.mxu0 0.0
        %2569 = vmatprep.subr.mxu0 0.0
        %2570 = vmatpush1.msra.mxu0 0.0
        %2571 = vmatprep.subr.mxu0 0.0
        %2572 = vmatpush1.msra.mxu0 0.0
        %2573 = vmatprep.mubr.f32.mxu0 0.0
        %2574 = vmatmul.mubr.f32.gmra.mrb[0].mxu0 %v2507
        %v2575 = vpop.f32.mrb[0].mxu0
        %v2576 = vadd.f32 0.0, %v2575
        %v2577 = vpop.f32.mrb[0].mxu0
        %2578 = vdwg.mxu0
        %2579 = vrot.lane.b32.xlu0 %v425, 48
        %v2580 = vpop.permute.xlu0 %2579
        %v2583 = vsel %vm452, %v2424, 0
        %2585 = vmatprep.subr.mxu0 0.0
        %2586 = vmatpush1.msra.mxu0 %v2580
        %2587 = vmatprep.subr.mxu0 0.0
        %2588 = vmatpush1.msra.mxu0 0.0
        %2589 = vmatprep.subr.mxu0 0.0
        %2590 = vmatpush1.msra.mxu0 0.0
        %2591 = vmatprep.subr.mxu0 0.0
        %2592 = vmatpush1.msra.mxu0 0.0
        %2593 = vmatprep.subr.mxu0 0.0
        %2594 = vmatpush1.msra.mxu0 0.0
        %2595 = vmatprep.subr.mxu0 0.0
        %2596 = vmatpush1.msra.mxu0 0.0
        %2597 = vmatprep.subr.mxu0 0.0
        %2598 = vmatpush1.msra.mxu0 0.0
        %2599 = vmatprep.subr.mxu0 0.0
        %2600 = vmatpush1.msra.mxu0 0.0
        %2601 = vmatprep.subr.mxu0 0.0
        %2602 = vmatpush1.msra.mxu0 0.0
        %2603 = vmatprep.subr.mxu0 0.0
        %2604 = vmatpush1.msra.mxu0 0.0
        %2605 = vmatprep.subr.mxu0 0.0
        %2606 = vmatpush1.msra.mxu0 0.0
        %2607 = vmatprep.subr.mxu0 0.0
        %2608 = vmatpush1.msra.mxu0 0.0
        %2609 = vmatprep.subr.mxu0 0.0
        %2610 = vmatpush1.msra.mxu0 0.0
        %2611 = vmatprep.subr.mxu0 0.0
        %2612 = vmatpush1.msra.mxu0 0.0
        %2613 = vmatprep.subr.mxu0 0.0
        %2614 = vmatpush1.msra.mxu0 0.0
        %2615 = vmatprep.subr.mxu0 0.0
        %2616 = vmatpush1.msra.mxu0 0.0
        %2617 = vmatprep.subr.mxu0 0.0
        %2618 = vmatpush1.msra.mxu0 0.0
        %2619 = vmatprep.subr.mxu0 0.0
        %2620 = vmatpush1.msra.mxu0 0.0
        %2621 = vmatprep.subr.mxu0 0.0
        %2622 = vmatpush1.msra.mxu0 0.0
        %2623 = vmatprep.subr.mxu0 0.0
        %2624 = vmatpush1.msra.mxu0 0.0
        %2625 = vmatprep.subr.mxu0 0.0
        %2626 = vmatpush1.msra.mxu0 0.0
        %2627 = vmatprep.subr.mxu0 0.0
        %2628 = vmatpush1.msra.mxu0 0.0
        %2629 = vmatprep.subr.mxu0 0.0
        %2630 = vmatpush1.msra.mxu0 0.0
        %2631 = vmatprep.subr.mxu0 0.0
        %2632 = vmatpush1.msra.mxu0 0.0
        %2633 = vmatprep.subr.mxu0 0.0
        %2634 = vmatpush1.msra.mxu0 0.0
        %2635 = vmatprep.subr.mxu0 0.0
        %2636 = vmatpush1.msra.mxu0 0.0
        %2637 = vmatprep.subr.mxu0 0.0
        %2638 = vmatpush1.msra.mxu0 0.0
        %2639 = vmatprep.subr.mxu0 0.0
        %2640 = vmatpush1.msra.mxu0 0.0
        %2641 = vmatprep.subr.mxu0 0.0
        %2642 = vmatpush1.msra.mxu0 0.0
        %2643 = vmatprep.subr.mxu0 0.0
        %2644 = vmatpush1.msra.mxu0 0.0
        %2645 = vmatprep.subr.mxu0 0.0
        %2646 = vmatpush1.msra.mxu0 0.0
        %2647 = vmatprep.subr.mxu0 0.0
        %2648 = vmatpush1.msra.mxu0 0.0
        %2649 = vmatprep.mubr.f32.mxu0 0.0
        %2650 = vmatmul.mubr.f32.gmra.mrb[0].mxu0 %v2583
        %v2651 = vpop.f32.mrb[0].mxu0
        %v2652 = vadd.f32 0.0, %v2651
        %v2653 = vpop.f32.mrb[0].mxu0
        %2654 = vdwg.mxu0
        %2655 = vrot.lane.b32.xlu0 %v430, 48
        %v2656 = vpop.permute.xlu0 %2655
        %v2659 = vsel %vm452, %v2426, 0
        %2661 = vmatprep.subr.mxu0 0.0
        %2662 = vmatpush1.msra.mxu0 %v2656
        %2663 = vmatprep.subr.mxu0 0.0
        %2664 = vmatpush1.msra.mxu0 0.0
        %2665 = vmatprep.subr.mxu0 0.0
        %2666 = vmatpush1.msra.mxu0 0.0
        %2667 = vmatprep.subr.mxu0 0.0
        %2668 = vmatpush1.msra.mxu0 0.0
        %2669 = vmatprep.subr.mxu0 0.0
        %2670 = vmatpush1.msra.mxu0 0.0
        %2671 = vmatprep.subr.mxu0 0.0
        %2672 = vmatpush1.msra.mxu0 0.0
        %2673 = vmatprep.subr.mxu0 0.0
        %2674 = vmatpush1.msra.mxu0 0.0
        %2675 = vmatprep.subr.mxu0 0.0
        %2676 = vmatpush1.msra.mxu0 0.0
        %2677 = vmatprep.subr.mxu0 0.0
        %2678 = vmatpush1.msra.mxu0 0.0
        %2679 = vmatprep.subr.mxu0 0.0
        %2680 = vmatpush1.msra.mxu0 0.0
        %2681 = vmatprep.subr.mxu0 0.0
        %2682 = vmatpush1.msra.mxu0 0.0
        %2683 = vmatprep.subr.mxu0 0.0
        %2684 = vmatpush1.msra.mxu0 0.0
        %2685 = vmatprep.subr.mxu0 0.0
        %2686 = vmatpush1.msra.mxu0 0.0
        %2687 = vmatprep.subr.mxu0 0.0
        %2688 = vmatpush1.msra.mxu0 0.0
        %2689 = vmatprep.subr.mxu0 0.0
        %2690 = vmatpush1.msra.mxu0 0.0
        %2691 = vmatprep.subr.mxu0 0.0
        %2692 = vmatpush1.msra.mxu0 0.0
        %2693 = vmatprep.subr.mxu0 0.0
        %2694 = vmatpush1.msra.mxu0 0.0
        %2695 = vmatprep.subr.mxu0 0.0
        %2696 = vmatpush1.msra.mxu0 0.0
        %2697 = vmatprep.subr.mxu0 0.0
        %2698 = vmatpush1.msra.mxu0 0.0
        %2699 = vmatprep.subr.mxu0 0.0
        %2700 = vmatpush1.msra.mxu0 0.0
        %2701 = vmatprep.subr.mxu0 0.0
        %2702 = vmatpush1.msra.mxu0 0.0
        %2703 = vmatprep.subr.mxu0 0.0
        %2704 = vmatpush1.msra.mxu0 0.0
        %2705 = vmatprep.subr.mxu0 0.0
        %2706 = vmatpush1.msra.mxu0 0.0
        %2707 = vmatprep.subr.mxu0 0.0
        %2708 = vmatpush1.msra.mxu0 0.0
        %2709 = vmatprep.subr.mxu0 0.0
        %2710 = vmatpush1.msra.mxu0 0.0
        %2711 = vmatprep.subr.mxu0 0.0
        %2712 = vmatpush1.msra.mxu0 0.0
        %2713 = vmatprep.subr.mxu0 0.0
        %2714 = vmatpush1.msra.mxu0 0.0
        %2715 = vmatprep.subr.mxu0 0.0
        %2716 = vmatpush1.msra.mxu0 0.0
        %2717 = vmatprep.subr.mxu0 0.0
        %2718 = vmatpush1.msra.mxu0 0.0
        %2719 = vmatprep.subr.mxu0 0.0
        %2720 = vmatpush1.msra.mxu0 0.0
        %2721 = vmatprep.subr.mxu0 0.0
        %2722 = vmatpush1.msra.mxu0 0.0
        %2723 = vmatprep.subr.mxu0 0.0
        %2724 = vmatpush1.msra.mxu0 0.0
        %2725 = vmatprep.mubr.f32.mxu0 0.0
        %2726 = vmatmul.mubr.f32.gmra.mrb[0].mxu0 %v2659
        %v2727 = vpop.f32.mrb[0].mxu0
        %v2728 = vadd.f32 0.0, %v2727
        %v2729 = vpop.f32.mrb[0].mxu0
        %2730 = vdwg.mxu0
        %s2731 = scalar_lea.vmem [#allocation7], 16
        %v2732 = vld [vmem:[%s2731] sm:$0xff]
        %v2734 = vsel %vm452, %v2500, 0
        %v2737 = vsel %vm452, %v2576, 0
        %v2740 = vsel %vm452, %v2652, 0
        %v2743 = vsel %vm452, %v2728, 0
        %2745 = vmatprep.subr.mxu0 0.0
        %2746 = vmatpush1.msra.mxu0 %v2732
        %2747 = vmatprep.subr.mxu0 0.0
        %2748 = vmatpush1.msra.mxu0 0.0
        %2749 = vmatprep.subr.mxu0 0.0
        %2750 = vmatpush1.msra.mxu0 0.0
        %2751 = vmatprep.subr.mxu0 0.0
        %2752 = vmatpush1.msra.mxu0 0.0
        %2753 = vmatprep.subr.mxu0 0.0
        %2754 = vmatpush1.msra.mxu0 0.0
        %2755 = vmatprep.subr.mxu0 0.0
        %2756 = vmatpush1.msra.mxu0 0.0
        %2757 = vmatprep.subr.mxu0 0.0
        %2758 = vmatpush1.msra.mxu0 0.0
        %2759 = vmatprep.subr.mxu0 0.0
        %2760 = vmatpush1.msra.mxu0 0.0
        %2761 = vmatprep.subr.mxu0 0.0
        %2762 = vmatpush1.msra.mxu0 0.0
        %2763 = vmatprep.subr.mxu0 0.0
        %2764 = vmatpush1.msra.mxu0 0.0
        %2765 = vmatprep.subr.mxu0 0.0
        %2766 = vmatpush1.msra.mxu0 0.0
        %2767 = vmatprep.subr.mxu0 0.0
        %2768 = vmatpush1.msra.mxu0 0.0
        %2769 = vmatprep.subr.mxu0 0.0
        %2770 = vmatpush1.msra.mxu0 0.0
        %2771 = vmatprep.subr.mxu0 0.0
        %2772 = vmatpush1.msra.mxu0 0.0
        %2773 = vmatprep.subr.mxu0 0.0
        %2774 = vmatpush1.msra.mxu0 0.0
        %2775 = vmatprep.subr.mxu0 0.0
        %2776 = vmatpush1.msra.mxu0 0.0
        %2777 = vmatprep.subr.mxu0 0.0
        %2778 = vmatpush1.msra.mxu0 0.0
        %2779 = vmatprep.subr.mxu0 0.0
        %2780 = vmatpush1.msra.mxu0 0.0
        %2781 = vmatprep.subr.mxu0 0.0
        %2782 = vmatpush1.msra.mxu0 0.0
        %2783 = vmatprep.subr.mxu0 0.0
        %2784 = vmatpush1.msra.mxu0 0.0
        %2785 = vmatprep.subr.mxu0 0.0
        %2786 = vmatpush1.msra.mxu0 0.0
        %2787 = vmatprep.subr.mxu0 0.0
        %2788 = vmatpush1.msra.mxu0 0.0
        %2789 = vmatprep.subr.mxu0 0.0
        %2790 = vmatpush1.msra.mxu0 0.0
        %2791 = vmatprep.subr.mxu0 0.0
        %2792 = vmatpush1.msra.mxu0 0.0
        %2793 = vmatprep.subr.mxu0 0.0
        %2794 = vmatpush1.msra.mxu0 0.0
        %2795 = vmatprep.subr.mxu0 0.0
        %2796 = vmatpush1.msra.mxu0 0.0
        %2797 = vmatprep.subr.mxu0 0.0
        %2798 = vmatpush1.msra.mxu0 0.0
        %2799 = vmatprep.subr.mxu0 0.0
        %2800 = vmatpush1.msra.mxu0 0.0
        %2801 = vmatprep.subr.mxu0 0.0
        %2802 = vmatpush1.msra.mxu0 0.0
        %2803 = vmatprep.subr.mxu0 0.0
        %2804 = vmatpush1.msra.mxu0 0.0
        %2805 = vmatprep.subr.mxu0 0.0
        %2806 = vmatpush1.msra.mxu0 0.0
        %2807 = vmatprep.subr.mxu0 0.0
        %2808 = vmatpush1.msra.mxu0 0.0
        %2809 = vmatprep.mubr.f32.mxu0 0.0
        %2810 = vmatmul.mubr.f32.gmra.mrb[0].mxu0 %v2734
        %v2811 = vpop.f32.mrb[0].mxu0
        %v2812 = vadd.f32 0.0, %v2811
        %v2813 = vpop.f32.mrb[0].mxu0
        %2814 = vmatprep.mubr.f32.mxu0 0.0
        %2815 = vmatmul.mubr.f32.gmra.mrb[0].mxu0 %v2737
        %v2816 = vpop.f32.mrb[0].mxu0
        %v2817 = vadd.f32 0.0, %v2816
        %v2818 = vpop.f32.mrb[0].mxu0
        %2819 = vmatprep.mubr.f32.mxu0 0.0
        %2820 = vmatmul.mubr.f32.gmra.mrb[0].mxu0 %v2740
        %v2821 = vpop.f32.mrb[0].mxu0
        %v2822 = vadd.f32 0.0, %v2821
        %v2823 = vpop.f32.mrb[0].mxu0
        %2824 = vmatprep.mubr.f32.mxu0 0.0
        %2825 = vmatmul.mubr.f32.gmra.mrb[0].mxu0 %v2743
        %v2826 = vpop.f32.mrb[0].mxu0
        %v2827 = vadd.f32 0.0, %v2826
        %v2828 = vpop.f32.mrb[0].mxu0
        %2829 = vdwg.mxu0
        %v2830 = vadd.f32 %v2025, %v2812
        %v2831 = vadd.f32 %v2030, %v2817
        %v2832 = vadd.f32 %v2035, %v2822
        %v2833 = vadd.f32 %v2040, %v2827
        %2834 = vrot.lane.b32.xlu0 %v415, 104
        %v2835 = vpop.permute.xlu0 %2834
        %2836 = vrot.lane.b32.xlu0 %v415, 72
        %v2837 = vpop.permute.xlu0 %2836
        %v2838 = vsel %vm452, %v2835, 0
        %v2840 = vsel %vm452, %v2837, 0
        %2842 = vmatprep.subr.mxu0 0.0
        %2843 = vmatpush1.xpose.msra.mxu0 %v2840
        %2844 = vmatprep.subr.mxu0 0.0
        %2845 = vmatpush1.xpose.msra.mxu0 0.0
        %2846 = vmatprep.subr.mxu0 0.0
        %2847 = vmatpush1.xpose.msra.mxu0 0.0
        %2848 = vmatprep.subr.mxu0 0.0
        %2849 = vmatpush1.xpose.msra.mxu0 0.0
        %2850 = vmatprep.subr.mxu0 0.0
        %2851 = vmatpush1.xpose.msra.mxu0 0.0
        %2852 = vmatprep.subr.mxu0 0.0
        %2853 = vmatpush1.xpose.msra.mxu0 0.0
        %2854 = vmatprep.subr.mxu0 0.0
        %2855 = vmatpush1.xpose.msra.mxu0 0.0
        %2856 = vmatprep.subr.mxu0 0.0
        %2857 = vmatpush1.xpose.msra.mxu0 0.0
        %2858 = vmatprep.subr.mxu0 0.0
        %2859 = vmatpush1.xpose.msra.mxu0 0.0
        %2860 = vmatprep.subr.mxu0 0.0
        %2861 = vmatpush1.xpose.msra.mxu0 0.0
        %2862 = vmatprep.subr.mxu0 0.0
        %2863 = vmatpush1.xpose.msra.mxu0 0.0
        %2864 = vmatprep.subr.mxu0 0.0
        %2865 = vmatpush1.xpose.msra.mxu0 0.0
        %2866 = vmatprep.subr.mxu0 0.0
        %2867 = vmatpush1.xpose.msra.mxu0 0.0
        %2868 = vmatprep.subr.mxu0 0.0
        %2869 = vmatpush1.xpose.msra.mxu0 0.0
        %2870 = vmatprep.subr.mxu0 0.0
        %2871 = vmatpush1.xpose.msra.mxu0 0.0
        %2872 = vmatprep.subr.mxu0 0.0
        %2873 = vmatpush1.xpose.msra.mxu0 0.0
        %2874 = vmatprep.subr.mxu0 0.0
        %2875 = vmatpush1.xpose.msra.mxu0 0.0
        %2876 = vmatprep.subr.mxu0 0.0
        %2877 = vmatpush1.xpose.msra.mxu0 0.0
        %2878 = vmatprep.subr.mxu0 0.0
        %2879 = vmatpush1.xpose.msra.mxu0 0.0
        %2880 = vmatprep.subr.mxu0 0.0
        %2881 = vmatpush1.xpose.msra.mxu0 0.0
        %2882 = vmatprep.subr.mxu0 0.0
        %2883 = vmatpush1.xpose.msra.mxu0 0.0
        %2884 = vmatprep.subr.mxu0 0.0
        %2885 = vmatpush1.xpose.msra.mxu0 0.0
        %2886 = vmatprep.subr.mxu0 0.0
        %2887 = vmatpush1.xpose.msra.mxu0 0.0
        %2888 = vmatprep.subr.mxu0 0.0
        %2889 = vmatpush1.xpose.msra.mxu0 0.0
        %2890 = vmatprep.subr.mxu0 0.0
        %2891 = vmatpush1.xpose.msra.mxu0 0.0
        %2892 = vmatprep.subr.mxu0 0.0
        %2893 = vmatpush1.xpose.msra.mxu0 0.0
        %2894 = vmatprep.subr.mxu0 0.0
        %2895 = vmatpush1.xpose.msra.mxu0 0.0
        %2896 = vmatprep.subr.mxu0 0.0
        %2897 = vmatpush1.xpose.msra.mxu0 0.0
        %2898 = vmatprep.subr.mxu0 0.0
        %2899 = vmatpush1.xpose.msra.mxu0 0.0
        %2900 = vmatprep.subr.mxu0 0.0
        %2901 = vmatpush1.xpose.msra.mxu0 0.0
        %2902 = vmatprep.subr.mxu0 0.0
        %2903 = vmatpush1.xpose.msra.mxu0 0.0
        %2904 = vmatprep.subr.mxu0 0.0
        %2905 = vmatpush1.xpose.msra.mxu0 0.0
        %2906 = vmatprep.mubr.f32.mxu0 0.0
        %2907 = vmatmul.mubr.f32.gmra.mrb[0].mxu0 %v2838
        %v2908 = vpop.f32.mrb[0].mxu0
        %v2909 = vadd.f32 0.0, %v2908
        %v2910 = vpop.f32.mrb[0].mxu0
        %2911 = vdwg.mxu0
        %2912 = vrot.lane.b32.xlu0 %v420, 104
        %v2913 = vpop.permute.xlu0 %2912
        %2914 = vrot.lane.b32.xlu0 %v420, 72
        %v2915 = vpop.permute.xlu0 %2914
        %v2916 = vsel %vm452, %v2913, 0
        %v2918 = vsel %vm452, %v2915, 0
        %2920 = vmatprep.subr.mxu0 0.0
        %2921 = vmatpush1.xpose.msra.mxu0 %v2918
        %2922 = vmatprep.subr.mxu0 0.0
        %2923 = vmatpush1.xpose.msra.mxu0 0.0
        %2924 = vmatprep.subr.mxu0 0.0
        %2925 = vmatpush1.xpose.msra.mxu0 0.0
        %2926 = vmatprep.subr.mxu0 0.0
        %2927 = vmatpush1.xpose.msra.mxu0 0.0
        %2928 = vmatprep.subr.mxu0 0.0
        %2929 = vmatpush1.xpose.msra.mxu0 0.0
        %2930 = vmatprep.subr.mxu0 0.0
        %2931 = vmatpush1.xpose.msra.mxu0 0.0
        %2932 = vmatprep.subr.mxu0 0.0
        %2933 = vmatpush1.xpose.msra.mxu0 0.0
        %2934 = vmatprep.subr.mxu0 0.0
        %2935 = vmatpush1.xpose.msra.mxu0 0.0
        %2936 = vmatprep.subr.mxu0 0.0
        %2937 = vmatpush1.xpose.msra.mxu0 0.0
        %2938 = vmatprep.subr.mxu0 0.0
        %2939 = vmatpush1.xpose.msra.mxu0 0.0
        %2940 = vmatprep.subr.mxu0 0.0
        %2941 = vmatpush1.xpose.msra.mxu0 0.0
        %2942 = vmatprep.subr.mxu0 0.0
        %2943 = vmatpush1.xpose.msra.mxu0 0.0
        %2944 = vmatprep.subr.mxu0 0.0
        %2945 = vmatpush1.xpose.msra.mxu0 0.0
        %2946 = vmatprep.subr.mxu0 0.0
        %2947 = vmatpush1.xpose.msra.mxu0 0.0
        %2948 = vmatprep.subr.mxu0 0.0
        %2949 = vmatpush1.xpose.msra.mxu0 0.0
        %2950 = vmatprep.subr.mxu0 0.0
        %2951 = vmatpush1.xpose.msra.mxu0 0.0
        %2952 = vmatprep.subr.mxu0 0.0
        %2953 = vmatpush1.xpose.msra.mxu0 0.0
        %2954 = vmatprep.subr.mxu0 0.0
        %2955 = vmatpush1.xpose.msra.mxu0 0.0
        %2956 = vmatprep.subr.mxu0 0.0
        %2957 = vmatpush1.xpose.msra.mxu0 0.0
        %2958 = vmatprep.subr.mxu0 0.0
        %2959 = vmatpush1.xpose.msra.mxu0 0.0
        %2960 = vmatprep.subr.mxu0 0.0
        %2961 = vmatpush1.xpose.msra.mxu0 0.0
        %2962 = vmatprep.subr.mxu0 0.0
        %2963 = vmatpush1.xpose.msra.mxu0 0.0
        %2964 = vmatprep.subr.mxu0 0.0
        %2965 = vmatpush1.xpose.msra.mxu0 0.0
        %2966 = vmatprep.subr.mxu0 0.0
        %2967 = vmatpush1.xpose.msra.mxu0 0.0
        %2968 = vmatprep.subr.mxu0 0.0
        %2969 = vmatpush1.xpose.msra.mxu0 0.0
        %2970 = vmatprep.subr.mxu0 0.0
        %2971 = vmatpush1.xpose.msra.mxu0 0.0
        %2972 = vmatprep.subr.mxu0 0.0
        %2973 = vmatpush1.xpose.msra.mxu0 0.0
        %2974 = vmatprep.subr.mxu0 0.0
        %2975 = vmatpush1.xpose.msra.mxu0 0.0
        %2976 = vmatprep.subr.mxu0 0.0
        %2977 = vmatpush1.xpose.msra.mxu0 0.0
        %2978 = vmatprep.subr.mxu0 0.0
        %2979 = vmatpush1.xpose.msra.mxu0 0.0
        %2980 = vmatprep.subr.mxu0 0.0
        %2981 = vmatpush1.xpose.msra.mxu0 0.0
        %2982 = vmatprep.subr.mxu0 0.0
        %2983 = vmatpush1.xpose.msra.mxu0 0.0
        %2984 = vmatprep.mubr.f32.mxu0 0.0
        %2985 = vmatmul.mubr.f32.gmra.mrb[0].mxu0 %v2916
        %v2986 = vpop.f32.mrb[0].mxu0
        %v2987 = vadd.f32 0.0, %v2986
        %v2988 = vpop.f32.mrb[0].mxu0
        %2989 = vdwg.mxu0
        %2990 = vrot.lane.b32.xlu0 %v425, 104
        %v2991 = vpop.permute.xlu0 %2990
        %2992 = vrot.lane.b32.xlu0 %v425, 72
        %v2993 = vpop.permute.xlu0 %2992
        %v2994 = vsel %vm452, %v2991, 0
        %v2996 = vsel %vm452, %v2993, 0
        %2998 = vmatprep.subr.mxu0 0.0
        %2999 = vmatpush1.xpose.msra.mxu0 %v2996
        %3000 = vmatprep.subr.mxu0 0.0
        %3001 = vmatpush1.xpose.msra.mxu0 0.0
        %3002 = vmatprep.subr.mxu0 0.0
        %3003 = vmatpush1.xpose.msra.mxu0 0.0
        %3004 = vmatprep.subr.mxu0 0.0
        %3005 = vmatpush1.xpose.msra.mxu0 0.0
        %3006 = vmatprep.subr.mxu0 0.0
        %3007 = vmatpush1.xpose.msra.mxu0 0.0
        %3008 = vmatprep.subr.mxu0 0.0
        %3009 = vmatpush1.xpose.msra.mxu0 0.0
        %3010 = vmatprep.subr.mxu0 0.0
        %3011 = vmatpush1.xpose.msra.mxu0 0.0
        %3012 = vmatprep.subr.mxu0 0.0
        %3013 = vmatpush1.xpose.msra.mxu0 0.0
        %3014 = vmatprep.subr.mxu0 0.0
        %3015 = vmatpush1.xpose.msra.mxu0 0.0
        %3016 = vmatprep.subr.mxu0 0.0
        %3017 = vmatpush1.xpose.msra.mxu0 0.0
        %3018 = vmatprep.subr.mxu0 0.0
        %3019 = vmatpush1.xpose.msra.mxu0 0.0
        %3020 = vmatprep.subr.mxu0 0.0
        %3021 = vmatpush1.xpose.msra.mxu0 0.0
        %3022 = vmatprep.subr.mxu0 0.0
        %3023 = vmatpush1.xpose.msra.mxu0 0.0
        %3024 = vmatprep.subr.mxu0 0.0
        %3025 = vmatpush1.xpose.msra.mxu0 0.0
        %3026 = vmatprep.subr.mxu0 0.0
        %3027 = vmatpush1.xpose.msra.mxu0 0.0
        %3028 = vmatprep.subr.mxu0 0.0
        %3029 = vmatpush1.xpose.msra.mxu0 0.0
        %3030 = vmatprep.subr.mxu0 0.0
        %3031 = vmatpush1.xpose.msra.mxu0 0.0
        %3032 = vmatprep.subr.mxu0 0.0
        %3033 = vmatpush1.xpose.msra.mxu0 0.0
        %3034 = vmatprep.subr.mxu0 0.0
        %3035 = vmatpush1.xpose.msra.mxu0 0.0
        %3036 = vmatprep.subr.mxu0 0.0
        %3037 = vmatpush1.xpose.msra.mxu0 0.0
        %3038 = vmatprep.subr.mxu0 0.0
        %3039 = vmatpush1.xpose.msra.mxu0 0.0
        %3040 = vmatprep.subr.mxu0 0.0
        %3041 = vmatpush1.xpose.msra.mxu0 0.0
        %3042 = vmatprep.subr.mxu0 0.0
        %3043 = vmatpush1.xpose.msra.mxu0 0.0
        %3044 = vmatprep.subr.mxu0 0.0
        %3045 = vmatpush1.xpose.msra.mxu0 0.0
        %3046 = vmatprep.subr.mxu0 0.0
        %3047 = vmatpush1.xpose.msra.mxu0 0.0
        %3048 = vmatprep.subr.mxu0 0.0
        %3049 = vmatpush1.xpose.msra.mxu0 0.0
        %3050 = vmatprep.subr.mxu0 0.0
        %3051 = vmatpush1.xpose.msra.mxu0 0.0
        %3052 = vmatprep.subr.mxu0 0.0
        %3053 = vmatpush1.xpose.msra.mxu0 0.0
        %3054 = vmatprep.subr.mxu0 0.0
        %3055 = vmatpush1.xpose.msra.mxu0 0.0
        %3056 = vmatprep.subr.mxu0 0.0
        %3057 = vmatpush1.xpose.msra.mxu0 0.0
        %3058 = vmatprep.subr.mxu0 0.0
        %3059 = vmatpush1.xpose.msra.mxu0 0.0
        %3060 = vmatprep.subr.mxu0 0.0
        %3061 = vmatpush1.xpose.msra.mxu0 0.0
        %3062 = vmatprep.mubr.f32.mxu0 0.0
        %3063 = vmatmul.mubr.f32.gmra.mrb[0].mxu0 %v2994
        %v3064 = vpop.f32.mrb[0].mxu0
        %v3065 = vadd.f32 0.0, %v3064
        %v3066 = vpop.f32.mrb[0].mxu0
        %3067 = vdwg.mxu0
        %3068 = vrot.lane.b32.xlu0 %v430, 104
        %v3069 = vpop.permute.xlu0 %3068
        %3070 = vrot.lane.b32.xlu0 %v430, 72
        %v3071 = vpop.permute.xlu0 %3070
        %v3072 = vsel %vm452, %v3069, 0
        %v3074 = vsel %vm452, %v3071, 0
        %3076 = vmatprep.subr.mxu0 0.0
        %3077 = vmatpush1.xpose.msra.mxu0 %v3074
        %3078 = vmatprep.subr.mxu0 0.0
        %3079 = vmatpush1.xpose.msra.mxu0 0.0
        %3080 = vmatprep.subr.mxu0 0.0
        %3081 = vmatpush1.xpose.msra.mxu0 0.0
        %3082 = vmatprep.subr.mxu0 0.0
        %3083 = vmatpush1.xpose.msra.mxu0 0.0
        %3084 = vmatprep.subr.mxu0 0.0
        %3085 = vmatpush1.xpose.msra.mxu0 0.0
        %3086 = vmatprep.subr.mxu0 0.0
        %3087 = vmatpush1.xpose.msra.mxu0 0.0
        %3088 = vmatprep.subr.mxu0 0.0
        %3089 = vmatpush1.xpose.msra.mxu0 0.0
        %3090 = vmatprep.subr.mxu0 0.0
        %3091 = vmatpush1.xpose.msra.mxu0 0.0
        %3092 = vmatprep.subr.mxu0 0.0
        %3093 = vmatpush1.xpose.msra.mxu0 0.0
        %3094 = vmatprep.subr.mxu0 0.0
        %3095 = vmatpush1.xpose.msra.mxu0 0.0
        %3096 = vmatprep.subr.mxu0 0.0
        %3097 = vmatpush1.xpose.msra.mxu0 0.0
        %3098 = vmatprep.subr.mxu0 0.0
        %3099 = vmatpush1.xpose.msra.mxu0 0.0
        %3100 = vmatprep.subr.mxu0 0.0
        %3101 = vmatpush1.xpose.msra.mxu0 0.0
        %3102 = vmatprep.subr.mxu0 0.0
        %3103 = vmatpush1.xpose.msra.mxu0 0.0
        %3104 = vmatprep.subr.mxu0 0.0
        %3105 = vmatpush1.xpose.msra.mxu0 0.0
        %3106 = vmatprep.subr.mxu0 0.0
        %3107 = vmatpush1.xpose.msra.mxu0 0.0
        %3108 = vmatprep.subr.mxu0 0.0
        %3109 = vmatpush1.xpose.msra.mxu0 0.0
        %3110 = vmatprep.subr.mxu0 0.0
        %3111 = vmatpush1.xpose.msra.mxu0 0.0
        %3112 = vmatprep.subr.mxu0 0.0
        %3113 = vmatpush1.xpose.msra.mxu0 0.0
        %3114 = vmatprep.subr.mxu0 0.0
        %3115 = vmatpush1.xpose.msra.mxu0 0.0
        %3116 = vmatprep.subr.mxu0 0.0
        %3117 = vmatpush1.xpose.msra.mxu0 0.0
        %3118 = vmatprep.subr.mxu0 0.0
        %3119 = vmatpush1.xpose.msra.mxu0 0.0
        %3120 = vmatprep.subr.mxu0 0.0
        %3121 = vmatpush1.xpose.msra.mxu0 0.0
        %3122 = vmatprep.subr.mxu0 0.0
        %3123 = vmatpush1.xpose.msra.mxu0 0.0
        %3124 = vmatprep.subr.mxu0 0.0
        %3125 = vmatpush1.xpose.msra.mxu0 0.0
        %3126 = vmatprep.subr.mxu0 0.0
        %3127 = vmatpush1.xpose.msra.mxu0 0.0
        %3128 = vmatprep.subr.mxu0 0.0
        %3129 = vmatpush1.xpose.msra.mxu0 0.0
        %3130 = vmatprep.subr.mxu0 0.0
        %3131 = vmatpush1.xpose.msra.mxu0 0.0
        %3132 = vmatprep.subr.mxu0 0.0
        %3133 = vmatpush1.xpose.msra.mxu0 0.0
        %3134 = vmatprep.subr.mxu0 0.0
        %3135 = vmatpush1.xpose.msra.mxu0 0.0
        %3136 = vmatprep.subr.mxu0 0.0
        %3137 = vmatpush1.xpose.msra.mxu0 0.0
        %3138 = vmatprep.subr.mxu0 0.0
        %3139 = vmatpush1.xpose.msra.mxu0 0.0
        %3140 = vmatprep.mubr.f32.mxu0 0.0
        %3141 = vmatmul.mubr.f32.gmra.mrb[0].mxu0 %v3072
        %v3142 = vpop.f32.mrb[0].mxu0
        %v3143 = vadd.f32 0.0, %v3142
        %v3144 = vpop.f32.mrb[0].mxu0
        %3145 = vdwg.mxu0
        %v3146 = vsel %vm452, %v2909, -inf
        %3147 = vmax.xlane.f32.xlu0 %v3146
        %v3148 = vpop.xlane.xlu0 %3147
        %v3149 = vsel %vm452, %v2987, -inf
        %3150 = vmax.xlane.f32.xlu0 %v3149
        %v3151 = vpop.xlane.xlu0 %3150
        %v3152 = vsel %vm452, %v3065, -inf
        %3153 = vmax.xlane.f32.xlu0 %v3152
        %v3154 = vpop.xlane.xlu0 %3153
        %v3155 = vsel %vm452, %v3143, -inf
        %3156 = vmax.xlane.f32.xlu0 %v3155
        %v3157 = vpop.xlane.xlu0 %3156
        %v3158 = vsub.f32 %v2909, %v3148
        %v3159 = vsub.f32 %v2987, %v3151
        %v3160 = vsub.f32 %v3065, %v3154
        %v3161 = vsub.f32 %v3143, %v3157
        %v3162 = vmul.f32 %v3158, 1.442695
        %v3163 = vpow.pop %v3162
        %v3164 = vmul.f32 %v3159, 1.442695
        %v3165 = vpow.pop %v3164
        %v3166 = vmul.f32 %v3160, 1.442695
        %v3167 = vpow.pop %v3166
        %v3168 = vmul.f32 %v3161, 1.442695
        %v3169 = vpow.pop %v3168
        %v3170 = vsel %vm452, %v3163, 0.0
        %3171 = vadd.xlane.f32.xlu0 %v3170
        %v3172 = vpop.xlane.xlu0 %3171
        %v3173 = vsel %vm452, %v3165, 0.0
        %3174 = vadd.xlane.f32.xlu0 %v3173
        %v3175 = vpop.xlane.xlu0 %3174
        %v3176 = vsel %vm452, %v3167, 0.0
        %3177 = vadd.xlane.f32.xlu0 %v3176
        %v3178 = vpop.xlane.xlu0 %3177
        %v3179 = vsel %vm452, %v3169, 0.0
        %3180 = vadd.xlane.f32.xlu0 %v3179
        %v3181 = vpop.xlane.xlu0 %3180
        %v3182 = vrcp.pop %v3172
        %v3183 = vmul.f32 %v3163, %v3182
        %v3184 = vrcp.pop %v3175
        %v3185 = vmul.f32 %v3165, %v3184
        %v3186 = vrcp.pop %v3178
        %v3187 = vmul.f32 %v3167, %v3186
        %v3188 = vrcp.pop %v3181
        %v3189 = vmul.f32 %v3169, %v3188
        %v3190 = vmul.f32 %v3183, %v809
        %v3191 = vmul.f32 %v3185, %v813
        %v3192 = vmul.f32 %v3187, %v817
        %v3193 = vmul.f32 %v3189, %v821
        %v3194 = vsel %vm452, %v3190, 0.0
        %3195 = vadd.xlane.f32.xlu0 %v3194
        %v3196 = vpop.xlane.xlu0 %3195
        %v3197 = vsel %vm452, %v3191, 0.0
        %3198 = vadd.xlane.f32.xlu0 %v3197
        %v3199 = vpop.xlane.xlu0 %3198
        %v3200 = vsel %vm452, %v3192, 0.0
        %3201 = vadd.xlane.f32.xlu0 %v3200
        %v3202 = vpop.xlane.xlu0 %3201
        %v3203 = vsel %vm452, %v3193, 0.0
        %3204 = vadd.xlane.f32.xlu0 %v3203
        %v3205 = vpop.xlane.xlu0 %3204
        %v3206 = vadd.f32 %v3196, 1e-09
        %v3207 = vadd.f32 %v3199, 1e-09
        %v3208 = vadd.f32 %v3202, 1e-09
        %v3209 = vadd.f32 %v3205, 1e-09
        %v3210 = vrcp.pop %v3206
        %v3211 = vmul.f32 %v3190, %v3210
        %v3212 = vrcp.pop %v3207
        %v3213 = vmul.f32 %v3191, %v3212
        %v3214 = vrcp.pop %v3208
        %v3215 = vmul.f32 %v3192, %v3214
        %v3216 = vrcp.pop %v3209
        %v3217 = vmul.f32 %v3193, %v3216
        %3218 = vrot.lane.b32.xlu0 %v415, 40
        %v3219 = vpop.permute.xlu0 %3218
        %v3222 = vsel %vm452, %v3211, 0
        %3224 = vmatprep.subr.mxu0 0.0
        %3225 = vmatpush1.msra.mxu0 %v3219
        %3226 = vmatprep.subr.mxu0 0.0
        %3227 = vmatpush1.msra.mxu0 0.0
        %3228 = vmatprep.subr.mxu0 0.0
        %3229 = vmatpush1.msra.mxu0 0.0
        %3230 = vmatprep.subr.mxu0 0.0
        %3231 = vmatpush1.msra.mxu0 0.0
        %3232 = vmatprep.subr.mxu0 0.0
        %3233 = vmatpush1.msra.mxu0 0.0
        %3234 = vmatprep.subr.mxu0 0.0
        %3235 = vmatpush1.msra.mxu0 0.0
        %3236 = vmatprep.subr.mxu0 0.0
        %3237 = vmatpush1.msra.mxu0 0.0
        %3238 = vmatprep.subr.mxu0 0.0
        %3239 = vmatpush1.msra.mxu0 0.0
        %3240 = vmatprep.subr.mxu0 0.0
        %3241 = vmatpush1.msra.mxu0 0.0
        %3242 = vmatprep.subr.mxu0 0.0
        %3243 = vmatpush1.msra.mxu0 0.0
        %3244 = vmatprep.subr.mxu0 0.0
        %3245 = vmatpush1.msra.mxu0 0.0
        %3246 = vmatprep.subr.mxu0 0.0
        %3247 = vmatpush1.msra.mxu0 0.0
        %3248 = vmatprep.subr.mxu0 0.0
        %3249 = vmatpush1.msra.mxu0 0.0
        %3250 = vmatprep.subr.mxu0 0.0
        %3251 = vmatpush1.msra.mxu0 0.0
        %3252 = vmatprep.subr.mxu0 0.0
        %3253 = vmatpush1.msra.mxu0 0.0
        %3254 = vmatprep.subr.mxu0 0.0
        %3255 = vmatpush1.msra.mxu0 0.0
        %3256 = vmatprep.subr.mxu0 0.0
        %3257 = vmatpush1.msra.mxu0 0.0
        %3258 = vmatprep.subr.mxu0 0.0
        %3259 = vmatpush1.msra.mxu0 0.0
        %3260 = vmatprep.subr.mxu0 0.0
        %3261 = vmatpush1.msra.mxu0 0.0
        %3262 = vmatprep.subr.mxu0 0.0
        %3263 = vmatpush1.msra.mxu0 0.0
        %3264 = vmatprep.subr.mxu0 0.0
        %3265 = vmatpush1.msra.mxu0 0.0
        %3266 = vmatprep.subr.mxu0 0.0
        %3267 = vmatpush1.msra.mxu0 0.0
        %3268 = vmatprep.subr.mxu0 0.0
        %3269 = vmatpush1.msra.mxu0 0.0
        %3270 = vmatprep.subr.mxu0 0.0
        %3271 = vmatpush1.msra.mxu0 0.0
        %3272 = vmatprep.subr.mxu0 0.0
        %3273 = vmatpush1.msra.mxu0 0.0
        %3274 = vmatprep.subr.mxu0 0.0
        %3275 = vmatpush1.msra.mxu0 0.0
        %3276 = vmatprep.subr.mxu0 0.0
        %3277 = vmatpush1.msra.mxu0 0.0
        %3278 = vmatprep.subr.mxu0 0.0
        %3279 = vmatpush1.msra.mxu0 0.0
        %3280 = vmatprep.subr.mxu0 0.0
        %3281 = vmatpush1.msra.mxu0 0.0
        %3282 = vmatprep.subr.mxu0 0.0
        %3283 = vmatpush1.msra.mxu0 0.0
        %3284 = vmatprep.subr.mxu0 0.0
        %3285 = vmatpush1.msra.mxu0 0.0
        %3286 = vmatprep.subr.mxu0 0.0
        %3287 = vmatpush1.msra.mxu0 0.0
        %3288 = vmatprep.mubr.f32.mxu0 0.0
        %3289 = vmatmul.mubr.f32.gmra.mrb[0].mxu0 %v3222
        %v3290 = vpop.f32.mrb[0].mxu0
        %v3291 = vadd.f32 0.0, %v3290
        %v3292 = vpop.f32.mrb[0].mxu0
        %3293 = vdwg.mxu0
        %3294 = vrot.lane.b32.xlu0 %v420, 40
        %v3295 = vpop.permute.xlu0 %3294
        %v3298 = vsel %vm452, %v3213, 0
        %3300 = vmatprep.subr.mxu0 0.0
        %3301 = vmatpush1.msra.mxu0 %v3295
        %3302 = vmatprep.subr.mxu0 0.0
        %3303 = vmatpush1.msra.mxu0 0.0
        %3304 = vmatprep.subr.mxu0 0.0
        %3305 = vmatpush1.msra.mxu0 0.0
        %3306 = vmatprep.subr.mxu0 0.0
        %3307 = vmatpush1.msra.mxu0 0.0
        %3308 = vmatprep.subr.mxu0 0.0
        %3309 = vmatpush1.msra.mxu0 0.0
        %3310 = vmatprep.subr.mxu0 0.0
        %3311 = vmatpush1.msra.mxu0 0.0
        %3312 = vmatprep.subr.mxu0 0.0
        %3313 = vmatpush1.msra.mxu0 0.0
        %3314 = vmatprep.subr.mxu0 0.0
        %3315 = vmatpush1.msra.mxu0 0.0
        %3316 = vmatprep.subr.mxu0 0.0
        %3317 = vmatpush1.msra.mxu0 0.0
        %3318 = vmatprep.subr.mxu0 0.0
        %3319 = vmatpush1.msra.mxu0 0.0
        %3320 = vmatprep.subr.mxu0 0.0
        %3321 = vmatpush1.msra.mxu0 0.0
        %3322 = vmatprep.subr.mxu0 0.0
        %3323 = vmatpush1.msra.mxu0 0.0
        %3324 = vmatprep.subr.mxu0 0.0
        %3325 = vmatpush1.msra.mxu0 0.0
        %3326 = vmatprep.subr.mxu0 0.0
        %3327 = vmatpush1.msra.mxu0 0.0
        %3328 = vmatprep.subr.mxu0 0.0
        %3329 = vmatpush1.msra.mxu0 0.0
        %3330 = vmatprep.subr.mxu0 0.0
        %3331 = vmatpush1.msra.mxu0 0.0
        %3332 = vmatprep.subr.mxu0 0.0
        %3333 = vmatpush1.msra.mxu0 0.0
        %3334 = vmatprep.subr.mxu0 0.0
        %3335 = vmatpush1.msra.mxu0 0.0
        %3336 = vmatprep.subr.mxu0 0.0
        %3337 = vmatpush1.msra.mxu0 0.0
        %3338 = vmatprep.subr.mxu0 0.0
        %3339 = vmatpush1.msra.mxu0 0.0
        %3340 = vmatprep.subr.mxu0 0.0
        %3341 = vmatpush1.msra.mxu0 0.0
        %3342 = vmatprep.subr.mxu0 0.0
        %3343 = vmatpush1.msra.mxu0 0.0
        %3344 = vmatprep.subr.mxu0 0.0
        %3345 = vmatpush1.msra.mxu0 0.0
        %3346 = vmatprep.subr.mxu0 0.0
        %3347 = vmatpush1.msra.mxu0 0.0
        %3348 = vmatprep.subr.mxu0 0.0
        %3349 = vmatpush1.msra.mxu0 0.0
        %3350 = vmatprep.subr.mxu0 0.0
        %3351 = vmatpush1.msra.mxu0 0.0
        %3352 = vmatprep.subr.mxu0 0.0
        %3353 = vmatpush1.msra.mxu0 0.0
        %3354 = vmatprep.subr.mxu0 0.0
        %3355 = vmatpush1.msra.mxu0 0.0
        %3356 = vmatprep.subr.mxu0 0.0
        %3357 = vmatpush1.msra.mxu0 0.0
        %3358 = vmatprep.subr.mxu0 0.0
        %3359 = vmatpush1.msra.mxu0 0.0
        %3360 = vmatprep.subr.mxu0 0.0
        %3361 = vmatpush1.msra.mxu0 0.0
        %3362 = vmatprep.subr.mxu0 0.0
        %3363 = vmatpush1.msra.mxu0 0.0
        %3364 = vmatprep.mubr.f32.mxu0 0.0
        %3365 = vmatmul.mubr.f32.gmra.mrb[0].mxu0 %v3298
        %v3366 = vpop.f32.mrb[0].mxu0
        %v3367 = vadd.f32 0.0, %v3366
        %v3368 = vpop.f32.mrb[0].mxu0
        %3369 = vdwg.mxu0
        %3370 = vrot.lane.b32.xlu0 %v425, 40
        %v3371 = vpop.permute.xlu0 %3370
        %v3374 = vsel %vm452, %v3215, 0
        %3376 = vmatprep.subr.mxu0 0.0
        %3377 = vmatpush1.msra.mxu0 %v3371
        %3378 = vmatprep.subr.mxu0 0.0
        %3379 = vmatpush1.msra.mxu0 0.0
        %3380 = vmatprep.subr.mxu0 0.0
        %3381 = vmatpush1.msra.mxu0 0.0
        %3382 = vmatprep.subr.mxu0 0.0
        %3383 = vmatpush1.msra.mxu0 0.0
        %3384 = vmatprep.subr.mxu0 0.0
        %3385 = vmatpush1.msra.mxu0 0.0
        %3386 = vmatprep.subr.mxu0 0.0
        %3387 = vmatpush1.msra.mxu0 0.0
        %3388 = vmatprep.subr.mxu0 0.0
        %3389 = vmatpush1.msra.mxu0 0.0
        %3390 = vmatprep.subr.mxu0 0.0
        %3391 = vmatpush1.msra.mxu0 0.0
        %3392 = vmatprep.subr.mxu0 0.0
        %3393 = vmatpush1.msra.mxu0 0.0
        %3394 = vmatprep.subr.mxu0 0.0
        %3395 = vmatpush1.msra.mxu0 0.0
        %3396 = vmatprep.subr.mxu0 0.0
        %3397 = vmatpush1.msra.mxu0 0.0
        %3398 = vmatprep.subr.mxu0 0.0
        %3399 = vmatpush1.msra.mxu0 0.0
        %3400 = vmatprep.subr.mxu0 0.0
        %3401 = vmatpush1.msra.mxu0 0.0
        %3402 = vmatprep.subr.mxu0 0.0
        %3403 = vmatpush1.msra.mxu0 0.0
        %3404 = vmatprep.subr.mxu0 0.0
        %3405 = vmatpush1.msra.mxu0 0.0
        %3406 = vmatprep.subr.mxu0 0.0
        %3407 = vmatpush1.msra.mxu0 0.0
        %3408 = vmatprep.subr.mxu0 0.0
        %3409 = vmatpush1.msra.mxu0 0.0
        %3410 = vmatprep.subr.mxu0 0.0
        %3411 = vmatpush1.msra.mxu0 0.0
        %3412 = vmatprep.subr.mxu0 0.0
        %3413 = vmatpush1.msra.mxu0 0.0
        %3414 = vmatprep.subr.mxu0 0.0
        %3415 = vmatpush1.msra.mxu0 0.0
        %3416 = vmatprep.subr.mxu0 0.0
        %3417 = vmatpush1.msra.mxu0 0.0
        %3418 = vmatprep.subr.mxu0 0.0
        %3419 = vmatpush1.msra.mxu0 0.0
        %3420 = vmatprep.subr.mxu0 0.0
        %3421 = vmatpush1.msra.mxu0 0.0
        %3422 = vmatprep.subr.mxu0 0.0
        %3423 = vmatpush1.msra.mxu0 0.0
        %3424 = vmatprep.subr.mxu0 0.0
        %3425 = vmatpush1.msra.mxu0 0.0
        %3426 = vmatprep.subr.mxu0 0.0
        %3427 = vmatpush1.msra.mxu0 0.0
        %3428 = vmatprep.subr.mxu0 0.0
        %3429 = vmatpush1.msra.mxu0 0.0
        %3430 = vmatprep.subr.mxu0 0.0
        %3431 = vmatpush1.msra.mxu0 0.0
        %3432 = vmatprep.subr.mxu0 0.0
        %3433 = vmatpush1.msra.mxu0 0.0
        %3434 = vmatprep.subr.mxu0 0.0
        %3435 = vmatpush1.msra.mxu0 0.0
        %3436 = vmatprep.subr.mxu0 0.0
        %3437 = vmatpush1.msra.mxu0 0.0
        %3438 = vmatprep.subr.mxu0 0.0
        %3439 = vmatpush1.msra.mxu0 0.0
        %3440 = vmatprep.mubr.f32.mxu0 0.0
        %3441 = vmatmul.mubr.f32.gmra.mrb[0].mxu0 %v3374
        %v3442 = vpop.f32.mrb[0].mxu0
        %v3443 = vadd.f32 0.0, %v3442
        %v3444 = vpop.f32.mrb[0].mxu0
        %3445 = vdwg.mxu0
        %3446 = vrot.lane.b32.xlu0 %v430, 40
        %v3447 = vpop.permute.xlu0 %3446
        %v3450 = vsel %vm452, %v3217, 0
        %3452 = vmatprep.subr.mxu0 0.0
        %3453 = vmatpush1.msra.mxu0 %v3447
        %3454 = vmatprep.subr.mxu0 0.0
        %3455 = vmatpush1.msra.mxu0 0.0
        %3456 = vmatprep.subr.mxu0 0.0
        %3457 = vmatpush1.msra.mxu0 0.0
        %3458 = vmatprep.subr.mxu0 0.0
        %3459 = vmatpush1.msra.mxu0 0.0
        %3460 = vmatprep.subr.mxu0 0.0
        %3461 = vmatpush1.msra.mxu0 0.0
        %3462 = vmatprep.subr.mxu0 0.0
        %3463 = vmatpush1.msra.mxu0 0.0
        %3464 = vmatprep.subr.mxu0 0.0
        %3465 = vmatpush1.msra.mxu0 0.0
        %3466 = vmatprep.subr.mxu0 0.0
        %3467 = vmatpush1.msra.mxu0 0.0
        %3468 = vmatprep.subr.mxu0 0.0
        %3469 = vmatpush1.msra.mxu0 0.0
        %3470 = vmatprep.subr.mxu0 0.0
        %3471 = vmatpush1.msra.mxu0 0.0
        %3472 = vmatprep.subr.mxu0 0.0
        %3473 = vmatpush1.msra.mxu0 0.0
        %3474 = vmatprep.subr.mxu0 0.0
        %3475 = vmatpush1.msra.mxu0 0.0
        %3476 = vmatprep.subr.mxu0 0.0
        %3477 = vmatpush1.msra.mxu0 0.0
        %3478 = vmatprep.subr.mxu0 0.0
        %3479 = vmatpush1.msra.mxu0 0.0
        %3480 = vmatprep.subr.mxu0 0.0
        %3481 = vmatpush1.msra.mxu0 0.0
        %3482 = vmatprep.subr.mxu0 0.0
        %3483 = vmatpush1.msra.mxu0 0.0
        %3484 = vmatprep.subr.mxu0 0.0
        %3485 = vmatpush1.msra.mxu0 0.0
        %3486 = vmatprep.subr.mxu0 0.0
        %3487 = vmatpush1.msra.mxu0 0.0
        %3488 = vmatprep.subr.mxu0 0.0
        %3489 = vmatpush1.msra.mxu0 0.0
        %3490 = vmatprep.subr.mxu0 0.0
        %3491 = vmatpush1.msra.mxu0 0.0
        %3492 = vmatprep.subr.mxu0 0.0
        %3493 = vmatpush1.msra.mxu0 0.0
        %3494 = vmatprep.subr.mxu0 0.0
        %3495 = vmatpush1.msra.mxu0 0.0
        %3496 = vmatprep.subr.mxu0 0.0
        %3497 = vmatpush1.msra.mxu0 0.0
        %3498 = vmatprep.subr.mxu0 0.0
        %3499 = vmatpush1.msra.mxu0 0.0
        %3500 = vmatprep.subr.mxu0 0.0
        %3501 = vmatpush1.msra.mxu0 0.0
        %3502 = vmatprep.subr.mxu0 0.0
        %3503 = vmatpush1.msra.mxu0 0.0
        %3504 = vmatprep.subr.mxu0 0.0
        %3505 = vmatpush1.msra.mxu0 0.0
        %3506 = vmatprep.subr.mxu0 0.0
        %3507 = vmatpush1.msra.mxu0 0.0
        %3508 = vmatprep.subr.mxu0 0.0
        %3509 = vmatpush1.msra.mxu0 0.0
        %3510 = vmatprep.subr.mxu0 0.0
        %3511 = vmatpush1.msra.mxu0 0.0
        %3512 = vmatprep.subr.mxu0 0.0
        %3513 = vmatpush1.msra.mxu0 0.0
        %3514 = vmatprep.subr.mxu0 0.0
        %3515 = vmatpush1.msra.mxu0 0.0
        %3516 = vmatprep.mubr.f32.mxu0 0.0
        %3517 = vmatmul.mubr.f32.gmra.mrb[0].mxu0 %v3450
        %v3518 = vpop.f32.mrb[0].mxu0
        %v3519 = vadd.f32 0.0, %v3518
        %v3520 = vpop.f32.mrb[0].mxu0
        %3521 = vdwg.mxu0
        %s3522 = scalar_lea.vmem [#allocation7], 24
        %v3523 = vld [vmem:[%s3522] sm:$0xff]
        %v3525 = vsel %vm452, %v3291, 0
        %v3528 = vsel %vm452, %v3367, 0
        %v3531 = vsel %vm452, %v3443, 0
        %v3534 = vsel %vm452, %v3519, 0
        %3536 = vmatprep.subr.mxu0 0.0
        %3537 = vmatpush1.msra.mxu0 %v3523
        %3538 = vmatprep.subr.mxu0 0.0
        %3539 = vmatpush1.msra.mxu0 0.0
        %3540 = vmatprep.subr.mxu0 0.0
        %3541 = vmatpush1.msra.mxu0 0.0
        %3542 = vmatprep.subr.mxu0 0.0
        %3543 = vmatpush1.msra.mxu0 0.0
        %3544 = vmatprep.subr.mxu0 0.0
        %3545 = vmatpush1.msra.mxu0 0.0
        %3546 = vmatprep.subr.mxu0 0.0
        %3547 = vmatpush1.msra.mxu0 0.0
        %3548 = vmatprep.subr.mxu0 0.0
        %3549 = vmatpush1.msra.mxu0 0.0
        %3550 = vmatprep.subr.mxu0 0.0
        %3551 = vmatpush1.msra.mxu0 0.0
        %3552 = vmatprep.subr.mxu0 0.0
        %3553 = vmatpush1.msra.mxu0 0.0
        %3554 = vmatprep.subr.mxu0 0.0
        %3555 = vmatpush1.msra.mxu0 0.0
        %3556 = vmatprep.subr.mxu0 0.0
        %3557 = vmatpush1.msra.mxu0 0.0
        %3558 = vmatprep.subr.mxu0 0.0
        %3559 = vmatpush1.msra.mxu0 0.0
        %3560 = vmatprep.subr.mxu0 0.0
        %3561 = vmatpush1.msra.mxu0 0.0
        %3562 = vmatprep.subr.mxu0 0.0
        %3563 = vmatpush1.msra.mxu0 0.0
        %3564 = vmatprep.subr.mxu0 0.0
        %3565 = vmatpush1.msra.mxu0 0.0
        %3566 = vmatprep.subr.mxu0 0.0
        %3567 = vmatpush1.msra.mxu0 0.0
        %3568 = vmatprep.subr.mxu0 0.0
        %3569 = vmatpush1.msra.mxu0 0.0
        %3570 = vmatprep.subr.mxu0 0.0
        %3571 = vmatpush1.msra.mxu0 0.0
        %3572 = vmatprep.subr.mxu0 0.0
        %3573 = vmatpush1.msra.mxu0 0.0
        %3574 = vmatprep.subr.mxu0 0.0
        %3575 = vmatpush1.msra.mxu0 0.0
        %3576 = vmatprep.subr.mxu0 0.0
        %3577 = vmatpush1.msra.mxu0 0.0
        %3578 = vmatprep.subr.mxu0 0.0
        %3579 = vmatpush1.msra.mxu0 0.0
        %3580 = vmatprep.subr.mxu0 0.0
        %3581 = vmatpush1.msra.mxu0 0.0
        %3582 = vmatprep.subr.mxu0 0.0
        %3583 = vmatpush1.msra.mxu0 0.0
        %3584 = vmatprep.subr.mxu0 0.0
        %3585 = vmatpush1.msra.mxu0 0.0
        %3586 = vmatprep.subr.mxu0 0.0
        %3587 = vmatpush1.msra.mxu0 0.0
        %3588 = vmatprep.subr.mxu0 0.0
        %3589 = vmatpush1.msra.mxu0 0.0
        %3590 = vmatprep.subr.mxu0 0.0
        %3591 = vmatpush1.msra.mxu0 0.0
        %3592 = vmatprep.subr.mxu0 0.0
        %3593 = vmatpush1.msra.mxu0 0.0
        %3594 = vmatprep.subr.mxu0 0.0
        %3595 = vmatpush1.msra.mxu0 0.0
        %3596 = vmatprep.subr.mxu0 0.0
        %3597 = vmatpush1.msra.mxu0 0.0
        %3598 = vmatprep.subr.mxu0 0.0
        %3599 = vmatpush1.msra.mxu0 0.0
        %3600 = vmatprep.mubr.f32.mxu0 0.0
        %3601 = vmatmul.mubr.f32.gmra.mrb[0].mxu0 %v3525
        %v3602 = vpop.f32.mrb[0].mxu0
        %v3603 = vadd.f32 0.0, %v3602
        %v3604 = vpop.f32.mrb[0].mxu0
        %3605 = vmatprep.mubr.f32.mxu0 0.0
        %3606 = vmatmul.mubr.f32.gmra.mrb[0].mxu0 %v3528
        %v3607 = vpop.f32.mrb[0].mxu0
        %v3608 = vadd.f32 0.0, %v3607
        %v3609 = vpop.f32.mrb[0].mxu0
        %3610 = vmatprep.mubr.f32.mxu0 0.0
        %3611 = vmatmul.mubr.f32.gmra.mrb[0].mxu0 %v3531
        %v3612 = vpop.f32.mrb[0].mxu0
        %v3613 = vadd.f32 0.0, %v3612
        %v3614 = vpop.f32.mrb[0].mxu0
        %3615 = vmatprep.mubr.f32.mxu0 0.0
        %3616 = vmatmul.mubr.f32.gmra.mrb[0].mxu0 %v3534
        %v3617 = vpop.f32.mrb[0].mxu0
        %v3618 = vadd.f32 0.0, %v3617
        %v3619 = vpop.f32.mrb[0].mxu0
        %3620 = vdwg.mxu0
        %v3621 = vadd.f32 %v2830, %v3603
        %v3622 = vadd.f32 %v2831, %v3608
        %v3623 = vadd.f32 %v2832, %v3613
        %v3624 = vadd.f32 %v2833, %v3618
        %v3625 = vld [vmem:[%s4] sm:$0x1]
        %v3627 = vlaneseq
        %v3628 = vshrl.u32 %v3627, 7
        %v3629 = vsub.s32 0, %v3628
        %v3630 = vrot.slane %v3625, %v3629
        %v3632 = vadd.f32 %v3621, %v3630
        %v3633 = vadd.f32 %v3622, %v3630
        %v3634 = vadd.f32 %v3623, %v3630
        %v3635 = vadd.f32 %v3624, %v3630
        %3636 = vst.msk [vmem:[%s312] sm:$0xff] %vm335, %v3632
        %3637 = vst.msk [vmem:[%s312 + $0x8] sm:$0xff] %vm335, %v3633
        %3638 = vst.msk [vmem:[%s312 + $0x10] sm:$0xff] %vm335, %v3634
        %3639 = vst.msk [vmem:[%s312 + $0x18] sm:$0xff] %vm335, %v3635
        %s3640 = sand.u32 %s168, 1
        %s3641 = scalar_lea.sflag [#allocation4], %s3640
        %s3642 = sand.u32 %s168, 1
        %s3643 = smul.addr %s3642, 32
        %s3644 = scalar_lea.vmem [#allocation8], %s3643
        // Predicated region
        $region57: #{tpu_custom_call.1} parent=43 // pred_check
          %p3645 = pneg %p178
        $region58: #{tpu_custom_call.1} parent=43 // pred_check_branch
          %3647 = sbr.rel (%p3645) target = $region60
        $region59: #{tpu_custom_call.1} parent=43 // pred_region
          %s3648 = smul.u32 4, %s24
          %s3650 = ssub.s32 512, 512
          %3651 = vsyncadd %s3641, %s3650
          %s3652 = smul.addr %s3648, 128
          %s3653 = scalar_lea.hbm %s6, %s3652
          %s3654 = sshll.u32 %s3644, 4
          %s3655 = int_to_ptr.vmem [resolvable:$true] %s3654
          %3660 = dma.vmem_to_hbm [thread:$0]  %s3655, 512, %s3653, %s3641, 128, 128, 8
        $region60: #{tpu_custom_call.1} parent=43 // pred_fallthru
          _
      $region44: #{tpu_custom_call.1} parent=5 // pred_fallthru
        _
      %p3661 = scmp.le.s32.totalorder 2, %s19
      // Predicated region
      $region61: #{tpu_custom_call.1} parent=5 // pred_check
        %p3662 = pneg %p3661
      $region62: #{tpu_custom_call.1} parent=5 // pred_check_branch
        %3664 = sbr.rel (%p3662) target = $region64
      $region63: #{tpu_custom_call.1} parent=5 // pred_region
        %s3665 = ssub.s32 %s19, 2
        // Predicated region
        $region65: #{tpu_custom_call.1} parent=63 // pred_check
          %p3666 = pneg %p184
        $region66: #{tpu_custom_call.1} parent=63 // pred_check_branch
          %3668 = sbr.rel (%p3666) target = $region68
        $region67: #{tpu_custom_call.1} parent=63 // pred_region
          %s3669 = sand.u32 %s169, 1
          %s3670 = scalar_lea.sflag [#allocation4], %s3669
          %s3671 = sand.u32 %s169, 1
          %s3672 = smul.addr %s3671, 32
          %s3673 = scalar_lea.vmem [#allocation8], %s3672
          %3674 = dma.done %s3670, 512
        $region68: #{tpu_custom_call.1} parent=63 // pred_fallthru
          _
      $region64: #{tpu_custom_call.1} parent=5 // pred_fallthru
        _
    $region6: #{tpu_custom_call.1} parent=1 // loop_footer
      %s23 = sadd.s32 1, %s19
    $region7: #{tpu_custom_call.1} parent=1 // loop_footer_branch
      %18 = sbr.rel target = $region3
    $region8: #{tpu_custom_call.1} parent=1 // loop_exit
      _
    %3675 = vsyncpa [#allocation3], 1
    %s3676 = scalar_lea.sflag [#allocation3], 1
    %3677 = vsyncpa %s3676, 1
    %3678 = vsyncpa [#allocation6], 1
    %3679 = vsyncpa [#allocation4], 1
    %s3680 = scalar_lea.sflag [#allocation4], 1
    %3681 = vsyncpa %s3680, 1

</llo_original>
